<compile_context>
chip_gen: v7x
topology: tpu7x:2x2x1
jax: 0.10.0
libtpu: 0.0.40
codegen_flags: <defaults>
</compile_context>

<pallas_src>
import functools

import jax
import jax.numpy as jnp
import numpy as np
from jax import lax
from jax.experimental import pallas as pl
from jax.experimental.pallas import tpu as pltpu

COMPUTE_DTYPE = jnp.bfloat16          # MXU input / inter-layer activation dtype
_VMEM_LIMIT = 32 * 1024 * 1024        # safe on v5e/v6e/v7x (raises v5e default)


def _round_up(x, m):
    return (x + m - 1) // m * m


# --------------------------------------------------------------------------
# Tile choosers (bytes-per-tile driven, per perf review)
# --------------------------------------------------------------------------
def _pick_batch_block(N, HW, C, cout):
    """Batch elements per conv grid step."""
    if N <= 8:
        return N                      # inference-sized batch: one block
    acc_budget = 512 * 1024           # f32 accumulator scratch
    in_budget = 2 * 1024 * 1024       # bf16 input rows per pipeline buffer
    bn = min(acc_budget // (HW * cout * 4), in_budget // (HW * C * 2))
    bn = max(8, (bn // 8) * 8)        # keep (bn*H*W, C) block sublane-aligned
    return N if bn >= N else bn


def _pick_head_rows(M, K):
    """Row tile for the fused head; targets ~3 MiB of bf16 LHS per buffer."""
    cap = max(256, min(2048, ((3 << 20) // (K * 2) // 8) * 8))
    return M if M <= cap else cap


# --------------------------------------------------------------------------
# Pallas kernel 1: stride-1 "valid" conv + bias + ReLU via shifted slabs.
# --------------------------------------------------------------------------
def _conv_kernel(bn, H, W, kh, kw, x_ref, w_ref, b_ref, o_ref, acc_ref):
    # x_ref  : (bn*H*W, C)   flattened NHWC rows, row pitch = W
    # w_ref  : (kh*kw*C, cout) im2col weights, row = (i*kw + j)*C + c
    # b_ref  : (1, cout) f32
    # o_ref  : (bn, oh, ow, cout)
    # acc_ref: (acc_rows, cout) f32 scratch
    C = x_ref.shape[1]
    oh = H - kh + 1
    ow = W - kw + 1
    acc_rows = acc_ref.shape[0]

    # For tap (i, j) every flat output row p (valid or not) consumes input row
    # p + i*W + j; rows whose spatial position is out of range (or that straddle
    # a batch boundary) compute garbage that is simply never stored below.
    first = True
    for i in range(kh):
        for j in range(kw):
            off = i * W + j
            lhs = x_ref[pl.ds(off, acc_rows), :]                  # (acc_rows, C)
            wt = w_ref[pl.ds((i * kw + j) * C, C), :]             # (C, cout)
            contrib = jnp.dot(lhs, wt, preferred_element_type=jnp.float32)
            if first:
                acc_ref[...] = contrib
                first = False
            else:
                acc_ref[...] += contrib

    bias = b_ref[...]                                             # (1, cout)
    for b in range(bn):
        for y in range(oh):
            base = b * H * W + y * W
            val = acc_ref[pl.ds(base, ow), :] + bias              # (ow, cout)
            o_ref[b, y, :, :] = jnp.maximum(val, 0.0).astype(o_ref.dtype)


def conv_pallas(x_flat, w, b2, *, H, W, kh, kw):
    """Valid stride-1 conv (NHWC) with fused bias+ReLU.

    x_flat: (N*H*W, C) bf16   w: (kh*kw*C, cout) bf16   b2: (1, cout) f32
    returns (N, oh, ow, cout) bf16.
    """
    rows, C = x_flat.shape
    assert rows % (H * W) == 0
    N = rows // (H * W)
    cout = w.shape[1]
    assert w.shape[0] == kh * kw * C
    oh, ow = H - kh + 1, W - kw + 1

    bn = _pick_batch_block(N, H * W, C, cout)
    acc_rows = (bn - 1) * H * W + (oh - 1) * W + ow
    grid = (pl.cdiv(N, bn),)

    kernel = functools.partial(_conv_kernel, bn, H, W, kh, kw)
    return pl.pallas_call(
        kernel,
        grid=grid,
        in_specs=[
            pl.BlockSpec((bn * H * W, C), lambda g: (g, 0)),       # raw rows
            pl.BlockSpec((kh * kw * C, cout), lambda g: (0, 0)),   # weights pinned
            pl.BlockSpec((1, cout), lambda g: (0, 0)),             # bias pinned
        ],
        out_specs=pl.BlockSpec((bn, oh, ow, cout), lambda g: (g, 0, 0, 0)),
        out_shape=jax.ShapeDtypeStruct((N, oh, ow, cout), COMPUTE_DTYPE),
        scratch_shapes=[pltpu.VMEM((acc_rows, cout), jnp.float32)],
        compiler_params=pltpu.CompilerParams(
            dimension_semantics=("parallel",),
            vmem_limit_bytes=_VMEM_LIMIT),
    )(x_flat, w, b2)


# --------------------------------------------------------------------------
# Pallas kernel 2: fused tail  q = (relu(flat @ wfc + bfc)) @ wq + bq
# `feat` never leaves VMEM; q is stored lane-dense (N padded to 128 at prep).
# --------------------------------------------------------------------------
def _head_kernel(flat_ref, wfc_ref, bfc_ref, wq_ref, bq_ref, q_ref):
    feat = jnp.dot(flat_ref[...], wfc_ref[...], preferred_element_type=jnp.float32)
    feat = jnp.maximum(feat + bfc_ref[...], 0.0)
    q = jnp.dot(feat.astype(wq_ref.dtype), wq_ref[...],
                preferred_element_type=jnp.float32)
    q_ref[...] = (q + bq_ref[...]).astype(q_ref.dtype)


def head_pallas(flat, wfc, bfc2, wq_p, bq_p):
    M, K = flat.shape
    Kh, Hd = wfc.shape
    assert K == Kh
    Ap = wq_p.shape[1]
    tm = _pick_head_rows(M, K)
    grid = (pl.cdiv(M, tm),)
    return pl.pallas_call(
        _head_kernel,
        grid=grid,
        in_specs=[
            pl.BlockSpec((tm, K), lambda i: (i, 0)),
            pl.BlockSpec((K, Hd), lambda i: (0, 0)),
            pl.BlockSpec((1, Hd), lambda i: (0, 0)),
            pl.BlockSpec((Hd, Ap), lambda i: (0, 0)),
            pl.BlockSpec((1, Ap), lambda i: (0, 0)),
        ],
        out_specs=pl.BlockSpec((tm, Ap), lambda i: (i, 0)),
        out_shape=jax.ShapeDtypeStruct((M, Ap), jnp.float32),
        compiler_params=pltpu.CompilerParams(
            dimension_semantics=("parallel",),
            vmem_limit_bytes=_VMEM_LIMIT),
    )(flat, wfc, bfc2, wq_p, bq_p)


# --------------------------------------------------------------------------
# Prep-time weight reshuffles (all done ONCE, outside the forward pass)
# --------------------------------------------------------------------------
def _s2d_weight_perm(kh, kw, cin, s):
    """Original-row index for each block-space im2col row after s2d(s).

    Block-space row = ((bi*(kw//s)+bj)*s*s + hr*s + wr)*cin + c
    Original   row = ((bi*s+hr)*kw + (bj*s+wr))*cin + c
    """
    assert kh % s == 0 and kw % s == 0
    kwb = kw // s
    n = np.arange(kh * kw * cin)
    c = n % cin
    q = n // cin
    tap, inner = q // (s * s), q % (s * s)
    bi, bj = tap // kwb, tap % kwb
    hr, wr = inner // s, inner % s
    i = bi * s + hr
    j = bj * s + wr
    return ((i * kw + j) * cin + c).astype(np.int32)


def _flatten_perm(P, C):
    """NHWC-flatten row p*C + c takes NCHW-flatten row c*P + p."""
    n = np.arange(P * C)
    c = n % C
    p = n // C
    return (c * P + p).astype(np.int32)


def init_params(key, input_channels, action_dim, hidden_size, flatten_size):
    """Orthogonal init matching rlcodebase's orthogonal_init; im2col layout."""
    ortho = jax.nn.initializers.orthogonal
    ks = jax.random.split(key, 10)
    gain = float(np.sqrt(2.0))  # calculate_gain('relu')
    bias = lambda k, n: 0.1 * jax.random.normal(k, (n,), jnp.float32)
    return {
        "w1": ortho(gain)(ks[0], (8 * 8 * input_channels, 32), jnp.float32),
        "b1": bias(ks[5], 32),
        "w2": ortho(gain)(ks[1], (4 * 4 * 32, 64), jnp.float32),
        "b2": bias(ks[6], 64),
        "w3": ortho(gain)(ks[2], (3 * 3 * 64, 64), jnp.float32),
        "b3": bias(ks[7], 64),
        "wfc": ortho(gain)(ks[3], (flatten_size, hidden_size), jnp.float32),
        "bfc": bias(ks[8], hidden_size),
        "wq": ortho(1.0)(ks[4], (hidden_size, action_dim), jnp.float32),
        "bq": bias(ks[9], action_dim),
    }


def prepare_kernel_params(p):
    """Fold /255 into w1, space-to-depth-permute conv weights, NHWC-permute
    wfc, pad wq/bq lane-dense, reshape biases — all once, off the hot path."""
    cin = p["w1"].shape[0] // 64            # 8*8*cin rows
    hidden = p["wfc"].shape[1]
    P = p["wfc"].shape[0] // 64             # conv3 spatial positions
    A = p["wq"].shape[1]
    Ap = max(128, _round_up(A, 128))

    # NOTE: /255 folded into bf16 w1 double-rounds the conv1 input path
    # (~0.5% rel error) — fine for RL inference.
    w1 = p["w1"] * (1.0 / 255.0)
    w1 = jnp.take(w1, jnp.asarray(_s2d_weight_perm(8, 8, cin, 4)), axis=0)
    w2 = jnp.take(p["w2"], jnp.asarray(_s2d_weight_perm(4, 4, 32, 2)), axis=0)
    wfc = jnp.take(p["wfc"], jnp.asarray(_flatten_perm(P, 64)), axis=0)
    wq = jnp.zeros((hidden, Ap), COMPUTE_DTYPE).at[:, :A].set(
        p["wq"].astype(COMPUTE_DTYPE))
    bq = jnp.zeros((1, Ap), jnp.float32).at[:, :A].set(
        p["bq"].astype(jnp.float32))
    f32row = lambda b: b.reshape(1, -1).astype(jnp.float32)
    return {
        "w1": w1.astype(COMPUTE_DTYPE), "b1": f32row(p["b1"]),
        "w2": w2.astype(COMPUTE_DTYPE), "b2": f32row(p["b2"]),
        "w3": p["w3"].astype(COMPUTE_DTYPE), "b3": f32row(p["b3"]),
        "wfc": wfc.astype(COMPUTE_DTYPE), "bfc": f32row(p["bfc"]),
        "wq": wq, "bq": bq,
    }


# --------------------------------------------------------------------------
# CatQConvNet.forward:  q = Linear(ConvBody(x / 255))
# --------------------------------------------------------------------------
def cat_q_conv_net_forward(x_nchw, kp, *, action_dim):
    N, Cin, H, W = x_nchw.shape
    assert H % 4 == 0 and W % 4 == 0, "conv1 space-to-depth needs H,W % 4 == 0"
    Hb, Wb = H // 4, W // 4

    # Raw frames: NCHW -> space-to-depth(4) NHWC (one transpose, same bytes as
    # the old NCHW->NHWC transpose).  The /255 scale lives inside kp["w1"].
    x = x_nchw.astype(COMPUTE_DTYPE)
    x = x.reshape(N, Cin, Hb, 4, Wb, 4)
    x = jnp.transpose(x, (0, 2, 4, 3, 5, 1))            # (N, Hb, Wb, 4, 4, Cin)
    x = x.reshape(N * Hb * Wb, 16 * Cin)

    # conv1: 8x8 stride 4  ==  2x2 stride 1 in block space
    h1 = conv_pallas(x, kp["w1"], kp["b1"], H=Hb, W=Wb, kh=2, kw=2)
    oh1, ow1 = h1.shape[1], h1.shape[2]

    # conv2: 4x4 stride 2  ==  2x2 stride 1 after space-to-depth(2) of h1
    assert oh1 % 2 == 0 and ow1 % 2 == 0
    h1b = h1.reshape(N, oh1 // 2, 2, ow1 // 2, 2, 32)
    h1b = jnp.transpose(h1b, (0, 1, 3, 2, 4, 5))
    h1b = h1b.reshape(N * (oh1 // 2) * (ow1 // 2), 4 * 32)
    h2 = conv_pallas(h1b, kp["w2"], kp["b2"],
                     H=oh1 // 2, W=ow1 // 2, kh=2, kw=2)
    oh2, ow2 = h2.shape[1], h2.shape[2]

    # conv3: 3x3 stride 1 (no transform; reshape is a free view)
    h3 = conv_pallas(h2.reshape(N * oh2 * ow2, 64), kp["w3"], kp["b3"],
                     H=oh2, W=ow2, kh=3, kw=3)

    # Flatten is free: wfc rows were pre-permuted to NHWC order at prep time.
    flat = h3.reshape(N, -1)
    q = head_pallas(flat, kp["wfc"], kp["bfc"], kp["wq"], kp["bq"])
    return q[:, :action_dim]


# Pure-JAX f32 reference for correctness checking
def reference_forward(x_nchw, p, input_channels):
    x = jnp.transpose(x_nchw.astype(jnp.float32), (0, 2, 3, 1)) / 255.0

    def conv(x, w_mat, b, kh, kw, cin, cout, stride):
        w = w_mat.reshape(kh, kw, cin, cout)
        y = lax.conv_general_dilated(
            x, w, (stride, stride), "VALID",
            dimension_numbers=("NHWC", "HWIO", "NHWC"))
        return jax.nn.relu(y + b)

    h1 = conv(x, p["w1"], p["b1"], 8, 8, input_channels, 32, 4)
    h2 = conv(h1, p["w2"], p["b2"], 4, 4, 32, 64, 2)
    h3 = conv(h2, p["w3"], p["b3"], 3, 3, 64, 64, 1)
    flat = jnp.transpose(h3, (0, 3, 1, 2)).reshape(h3.shape[0], -1)
    feat = jax.nn.relu(flat @ p["wfc"] + p["bfc"])
    return feat @ p["wq"] + p["bq"]


if __name__ == "__main__":
    batch, input_channels, spatial = 2, 4, 44       # 44 -> 10 -> 4 -> 2
    hidden_size, action_dim = 64, 6
    flatten_size = 64 * 2 * 2

    key = jax.random.PRNGKey(0)
    kx, kp_key = jax.random.split(key)
    x = jax.random.uniform(kx, (batch, input_channels, spatial, spatial),
                           dtype=jnp.float32, minval=0.0, maxval=255.0)
    params = init_params(kp_key, input_channels, action_dim, hidden_size,
                         flatten_size)
    kparams = prepare_kernel_params(params)

    fwd = jax.jit(functools.partial(cat_q_conv_net_forward,
                                    action_dim=action_dim))
    q = fwd(x, kparams)
    q = jax.block_until_ready(q)

    q_ref = reference_forward(x, params, input_channels)
    assert q.shape == (batch, action_dim)
    # bf16 MXU inputs (f32 accumulation) vs f32 reference -> loosened tolerance.
    np.testing.assert_allclose(np.asarray(q, dtype=np.float32),
                               np.asarray(q_ref), rtol=2e-2, atol=5e-2)
    print("KERNEL_OK")
</pallas_src>

<mosaic_0001>
module attributes {stable_mosaic.version = 11 : i64} {
  func.func @_conv_kernel(%arg0: i32, %arg1: memref<242x64xbf16, #tpu.memory_space<vmem>>, %arg2: memref<256x32xbf16, #tpu.memory_space<vmem>>, %arg3: memref<1x32xf32, #tpu.memory_space<vmem>>, %arg4: memref<2x10x10x32xbf16, #tpu.memory_space<vmem>>, %arg5: memref<230x32xf32, #tpu.memory_space<vmem>>) attributes {dimension_semantics = [#tpu.dimension_semantics<parallel>], iteration_bounds = array<i64: 1>, scalar_prefetch = 0 : i64, scratch_operands = 1 : i64, tpu.core_type = #tpu.core_type<tc>, window_params = [{transform_indices = @transform_0, window_bounds = array<i64: 242, 64>}, {pipeline_mode = #tpu.pipeline_mode<synchronous>, transform_indices = @transform_1, window_bounds = array<i64: 256, 32>}, {pipeline_mode = #tpu.pipeline_mode<synchronous>, transform_indices = @transform_2, window_bounds = array<i64: 1, 32>}, {transform_indices = @transform_3, window_bounds = array<i64: 2, 10, 10, 32>}]} {
    %c0 = arith.constant 0 : index
    %c0_0 = arith.constant 0 : index
    %0 = vector.load %arg1[%c0, %c0_0] : memref<242x64xbf16, #tpu.memory_space<vmem>>, vector<230x64xbf16>
    %c0_1 = arith.constant 0 : index
    %c0_2 = arith.constant 0 : index
    %1 = vector.load %arg2[%c0_1, %c0_2] : memref<256x32xbf16, #tpu.memory_space<vmem>>, vector<64x32xbf16>
    %cst = arith.constant dense<0.000000e+00> : vector<230x32xf32>
    %2 = tpu.matmul %0, %1, %cst {dimension_numbers = #tpu.dot_dimension_numbers<[1], [0], [0], [1], [0, 0, 1, 1], [], []>} : vector<230x64xbf16>, vector<64x32xbf16>, vector<230x32xf32> -> vector<230x32xf32>
    %c0_3 = arith.constant 0 : index
    %c0_4 = arith.constant 0 : index
    %3 = vector.load %arg5[%c0_3, %c0_4] : memref<230x32xf32, #tpu.memory_space<vmem>>, vector<230x32xf32>
    tpu.vector_store %arg5[%c0_3, %c0_4], %2 {strides = array<i32>} : memref<230x32xf32, #tpu.memory_space<vmem>>, vector<230x32xf32>,
    %c1 = arith.constant 1 : index
    %c0_5 = arith.constant 0 : index
    %4 = vector.load %arg1[%c1, %c0_5] : memref<242x64xbf16, #tpu.memory_space<vmem>>, vector<230x64xbf16>
    %c64 = arith.constant 64 : index
    %c0_6 = arith.constant 0 : index
    %5 = vector.load %arg2[%c64, %c0_6] : memref<256x32xbf16, #tpu.memory_space<vmem>>, vector<64x32xbf16>
    %cst_7 = arith.constant dense<0.000000e+00> : vector<230x32xf32>
    %6 = tpu.matmul %4, %5, %cst_7 {dimension_numbers = #tpu.dot_dimension_numbers<[1], [0], [0], [1], [0, 0, 1, 1], [], []>} : vector<230x64xbf16>, vector<64x32xbf16>, vector<230x32xf32> -> vector<230x32xf32>
    %c0_8 = arith.constant 0 : index
    %c0_9 = arith.constant 0 : index
    %7 = vector.load %arg5[%c0_8, %c0_9] : memref<230x32xf32, #tpu.memory_space<vmem>>, vector<230x32xf32>
    %8 = arith.addf %7, %6 : vector<230x32xf32>
    %c0_10 = arith.constant 0 : index
    %c0_11 = arith.constant 0 : index
    %9 = vector.load %arg5[%c0_10, %c0_11] : memref<230x32xf32, #tpu.memory_space<vmem>>, vector<230x32xf32>
    tpu.vector_store %arg5[%c0_10, %c0_11], %8 {strides = array<i32>} : memref<230x32xf32, #tpu.memory_space<vmem>>, vector<230x32xf32>,
    %c11 = arith.constant 11 : index
    %c0_12 = arith.constant 0 : index
    %10 = vector.load %arg1[%c11, %c0_12] : memref<242x64xbf16, #tpu.memory_space<vmem>>, vector<230x64xbf16>
    %c128 = arith.constant 128 : index
    %c0_13 = arith.constant 0 : index
    %11 = vector.load %arg2[%c128, %c0_13] : memref<256x32xbf16, #tpu.memory_space<vmem>>, vector<64x32xbf16>
    %cst_14 = arith.constant dense<0.000000e+00> : vector<230x32xf32>
    %12 = tpu.matmul %10, %11, %cst_14 {dimension_numbers = #tpu.dot_dimension_numbers<[1], [0], [0], [1], [0, 0, 1, 1], [], []>} : vector<230x64xbf16>, vector<64x32xbf16>, vector<230x32xf32> -> vector<230x32xf32>
    %c0_15 = arith.constant 0 : index
    %c0_16 = arith.constant 0 : index
    %13 = vector.load %arg5[%c0_15, %c0_16] : memref<230x32xf32, #tpu.memory_space<vmem>>, vector<230x32xf32>
    %14 = arith.addf %13, %12 : vector<230x32xf32>
    %c0_17 = arith.constant 0 : index
    %c0_18 = arith.constant 0 : index
    %15 = vector.load %arg5[%c0_17, %c0_18] : memref<230x32xf32, #tpu.memory_space<vmem>>, vector<230x32xf32>
    tpu.vector_store %arg5[%c0_17, %c0_18], %14 {strides = array<i32>} : memref<230x32xf32, #tpu.memory_space<vmem>>, vector<230x32xf32>,
    %c12 = arith.constant 12 : index
    %c0_19 = arith.constant 0 : index
    %16 = vector.load %arg1[%c12, %c0_19] : memref<242x64xbf16, #tpu.memory_space<vmem>>, vector<230x64xbf16>
    %c192 = arith.constant 192 : index
    %c0_20 = arith.constant 0 : index
    %17 = vector.load %arg2[%c192, %c0_20] : memref<256x32xbf16, #tpu.memory_space<vmem>>, vector<64x32xbf16>
    %cst_21 = arith.constant dense<0.000000e+00> : vector<230x32xf32>
    %18 = tpu.matmul %16, %17, %cst_21 {dimension_numbers = #tpu.dot_dimension_numbers<[1], [0], [0], [1], [0, 0, 1, 1], [], []>} : vector<230x64xbf16>, vector<64x32xbf16>, vector<230x32xf32> -> vector<230x32xf32>
    %c0_22 = arith.constant 0 : index
    %c0_23 = arith.constant 0 : index
    %19 = vector.load %arg5[%c0_22, %c0_23] : memref<230x32xf32, #tpu.memory_space<vmem>>, vector<230x32xf32>
    %20 = arith.addf %19, %18 : vector<230x32xf32>
    %c0_24 = arith.constant 0 : index
    %c0_25 = arith.constant 0 : index
    %21 = vector.load %arg5[%c0_24, %c0_25] : memref<230x32xf32, #tpu.memory_space<vmem>>, vector<230x32xf32>
    tpu.vector_store %arg5[%c0_24, %c0_25], %20 {strides = array<i32>} : memref<230x32xf32, #tpu.memory_space<vmem>>, vector<230x32xf32>,
    %c0_26 = arith.constant 0 : index
    %c0_27 = arith.constant 0 : index
    %22 = vector.load %arg3[%c0_26, %c0_27] : memref<1x32xf32, #tpu.memory_space<vmem>>, vector<1x32xf32>
    %c0_28 = arith.constant 0 : index
    %c0_29 = arith.constant 0 : index
    %23 = vector.load %arg5[%c0_28, %c0_29] : memref<230x32xf32, #tpu.memory_space<vmem>>, vector<10x32xf32>
    %24 = vector.broadcast %22 : vector<1x32xf32> to vector<10x32xf32>
    %25 = arith.addf %23, %24 : vector<10x32xf32>
    %cst_30 = arith.constant 0.000000e+00 : f32
    %26 = vector.broadcast %cst_30 : f32 to vector<10x32xf32>
    %27 = arith.maximumf %25, %26 : vector<10x32xf32>
    %28 = arith.truncf %27 : vector<10x32xf32> to vector<10x32xbf16>
    %c0_31 = arith.constant 0 : index
    %c0_32 = arith.constant 0 : index
    %c0_33 = arith.constant 0 : index
    %c0_34 = arith.constant 0 : index
    %29 = vector.load %arg4[%c0_31, %c0_32, %c0_33, %c0_34] : memref<2x10x10x32xbf16, #tpu.memory_space<vmem>>, vector<1x1x10x32xbf16>
    %30 = vector.shape_cast %29 : vector<1x1x10x32xbf16> to vector<10x32xbf16>
    %31 = vector.shape_cast %28 : vector<10x32xbf16> to vector<1x1x10x32xbf16>
    tpu.vector_store %arg4[%c0_31, %c0_32, %c0_33, %c0_34], %31 {strides = array<i32>} : memref<2x10x10x32xbf16, #tpu.memory_space<vmem>>, vector<1x1x10x32xbf16>,
    %c11_35 = arith.constant 11 : index
    %c0_36 = arith.constant 0 : index
    %32 = vector.load %arg5[%c11_35, %c0_36] : memref<230x32xf32, #tpu.memory_space<vmem>>, vector<10x32xf32>
    %33 = vector.broadcast %22 : vector<1x32xf32> to vector<10x32xf32>
    %34 = arith.addf %32, %33 : vector<10x32xf32>
    %cst_37 = arith.constant 0.000000e+00 : f32
    %35 = vector.broadcast %cst_37 : f32 to vector<10x32xf32>
    %36 = arith.maximumf %34, %35 : vector<10x32xf32>
    %37 = arith.truncf %36 : vector<10x32xf32> to vector<10x32xbf16>
    %c0_38 = arith.constant 0 : index
    %c1_39 = arith.constant 1 : index
    %c0_40 = arith.constant 0 : index
    %c0_41 = arith.constant 0 : index
    %38 = vector.load %arg4[%c0_38, %c1_39, %c0_40, %c0_41] : memref<2x10x10x32xbf16, #tpu.memory_space<vmem>>, vector<1x1x10x32xbf16>
    %39 = vector.shape_cast %38 : vector<1x1x10x32xbf16> to vector<10x32xbf16>
    %40 = vector.shape_cast %37 : vector<10x32xbf16> to vector<1x1x10x32xbf16>
    tpu.vector_store %arg4[%c0_38, %c1_39, %c0_40, %c0_41], %40 {strides = array<i32>} : memref<2x10x10x32xbf16, #tpu.memory_space<vmem>>, vector<1x1x10x32xbf16>,
    %c22 = arith.constant 22 : index
    %c0_42 = arith.constant 0 : index
    %41 = vector.load %arg5[%c22, %c0_42] : memref<230x32xf32, #tpu.memory_space<vmem>>, vector<10x32xf32>
    %42 = vector.broadcast %22 : vector<1x32xf32> to vector<10x32xf32>
    %43 = arith.addf %41, %42 : vector<10x32xf32>
    %cst_43 = arith.constant 0.000000e+00 : f32
    %44 = vector.broadcast %cst_43 : f32 to vector<10x32xf32>
    %45 = arith.maximumf %43, %44 : vector<10x32xf32>
    %46 = arith.truncf %45 : vector<10x32xf32> to vector<10x32xbf16>
    %c0_44 = arith.constant 0 : index
    %c2 = arith.constant 2 : index
    %c0_45 = arith.constant 0 : index
    %c0_46 = arith.constant 0 : index
    %47 = vector.load %arg4[%c0_44, %c2, %c0_45, %c0_46] : memref<2x10x10x32xbf16, #tpu.memory_space<vmem>>, vector<1x1x10x32xbf16>
    %48 = vector.shape_cast %47 : vector<1x1x10x32xbf16> to vector<10x32xbf16>
    %49 = vector.shape_cast %46 : vector<10x32xbf16> to vector<1x1x10x32xbf16>
    tpu.vector_store %arg4[%c0_44, %c2, %c0_45, %c0_46], %49 {strides = array<i32>} : memref<2x10x10x32xbf16, #tpu.memory_space<vmem>>, vector<1x1x10x32xbf16>,
    %c33 = arith.constant 33 : index
    %c0_47 = arith.constant 0 : index
    %50 = vector.load %arg5[%c33, %c0_47] : memref<230x32xf32, #tpu.memory_space<vmem>>, vector<10x32xf32>
    %51 = vector.broadcast %22 : vector<1x32xf32> to vector<10x32xf32>
    %52 = arith.addf %50, %51 : vector<10x32xf32>
    %cst_48 = arith.constant 0.000000e+00 : f32
    %53 = vector.broadcast %cst_48 : f32 to vector<10x32xf32>
    %54 = arith.maximumf %52, %53 : vector<10x32xf32>
    %55 = arith.truncf %54 : vector<10x32xf32> to vector<10x32xbf16>
    %c0_49 = arith.constant 0 : index
    %c3 = arith.constant 3 : index
    %c0_50 = arith.constant 0 : index
    %c0_51 = arith.constant 0 : index
    %56 = vector.load %arg4[%c0_49, %c3, %c0_50, %c0_51] : memref<2x10x10x32xbf16, #tpu.memory_space<vmem>>, vector<1x1x10x32xbf16>
    %57 = vector.shape_cast %56 : vector<1x1x10x32xbf16> to vector<10x32xbf16>
    %58 = vector.shape_cast %55 : vector<10x32xbf16> to vector<1x1x10x32xbf16>
    tpu.vector_store %arg4[%c0_49, %c3, %c0_50, %c0_51], %58 {strides = array<i32>} : memref<2x10x10x32xbf16, #tpu.memory_space<vmem>>, vector<1x1x10x32xbf16>,
    %c44 = arith.constant 44 : index
    %c0_52 = arith.constant 0 : index
    %59 = vector.load %arg5[%c44, %c0_52] : memref<230x32xf32, #tpu.memory_space<vmem>>, vector<10x32xf32>
    %60 = vector.broadcast %22 : vector<1x32xf32> to vector<10x32xf32>
    %61 = arith.addf %59, %60 : vector<10x32xf32>
    %cst_53 = arith.constant 0.000000e+00 : f32
    %62 = vector.broadcast %cst_53 : f32 to vector<10x32xf32>
    %63 = arith.maximumf %61, %62 : vector<10x32xf32>
    %64 = arith.truncf %63 : vector<10x32xf32> to vector<10x32xbf16>
    %c0_54 = arith.constant 0 : index
    %c4 = arith.constant 4 : index
    %c0_55 = arith.constant 0 : index
    %c0_56 = arith.constant 0 : index
    %65 = vector.load %arg4[%c0_54, %c4, %c0_55, %c0_56] : memref<2x10x10x32xbf16, #tpu.memory_space<vmem>>, vector<1x1x10x32xbf16>
    %66 = vector.shape_cast %65 : vector<1x1x10x32xbf16> to vector<10x32xbf16>
    %67 = vector.shape_cast %64 : vector<10x32xbf16> to vector<1x1x10x32xbf16>
    tpu.vector_store %arg4[%c0_54, %c4, %c0_55, %c0_56], %67 {strides = array<i32>} : memref<2x10x10x32xbf16, #tpu.memory_space<vmem>>, vector<1x1x10x32xbf16>,
    %c55 = arith.constant 55 : index
    %c0_57 = arith.constant 0 : index
    %68 = vector.load %arg5[%c55, %c0_57] : memref<230x32xf32, #tpu.memory_space<vmem>>, vector<10x32xf32>
    %69 = vector.broadcast %22 : vector<1x32xf32> to vector<10x32xf32>
    %70 = arith.addf %68, %69 : vector<10x32xf32>
    %cst_58 = arith.constant 0.000000e+00 : f32
    %71 = vector.broadcast %cst_58 : f32 to vector<10x32xf32>
    %72 = arith.maximumf %70, %71 : vector<10x32xf32>
    %73 = arith.truncf %72 : vector<10x32xf32> to vector<10x32xbf16>
    %c0_59 = arith.constant 0 : index
    %c5 = arith.constant 5 : index
    %c0_60 = arith.constant 0 : index
    %c0_61 = arith.constant 0 : index
    %74 = vector.load %arg4[%c0_59, %c5, %c0_60, %c0_61] : memref<2x10x10x32xbf16, #tpu.memory_space<vmem>>, vector<1x1x10x32xbf16>
    %75 = vector.shape_cast %74 : vector<1x1x10x32xbf16> to vector<10x32xbf16>
    %76 = vector.shape_cast %73 : vector<10x32xbf16> to vector<1x1x10x32xbf16>
    tpu.vector_store %arg4[%c0_59, %c5, %c0_60, %c0_61], %76 {strides = array<i32>} : memref<2x10x10x32xbf16, #tpu.memory_space<vmem>>, vector<1x1x10x32xbf16>,
    %c66 = arith.constant 66 : index
    %c0_62 = arith.constant 0 : index
    %77 = vector.load %arg5[%c66, %c0_62] : memref<230x32xf32, #tpu.memory_space<vmem>>, vector<10x32xf32>
    %78 = vector.broadcast %22 : vector<1x32xf32> to vector<10x32xf32>
    %79 = arith.addf %77, %78 : vector<10x32xf32>
    %cst_63 = arith.constant 0.000000e+00 : f32
    %80 = vector.broadcast %cst_63 : f32 to vector<10x32xf32>
    %81 = arith.maximumf %79, %80 : vector<10x32xf32>
    %82 = arith.truncf %81 : vector<10x32xf32> to vector<10x32xbf16>
    %c0_64 = arith.constant 0 : index
    %c6 = arith.constant 6 : index
    %c0_65 = arith.constant 0 : index
    %c0_66 = arith.constant 0 : index
    %83 = vector.load %arg4[%c0_64, %c6, %c0_65, %c0_66] : memref<2x10x10x32xbf16, #tpu.memory_space<vmem>>, vector<1x1x10x32xbf16>
    %84 = vector.shape_cast %83 : vector<1x1x10x32xbf16> to vector<10x32xbf16>
    %85 = vector.shape_cast %82 : vector<10x32xbf16> to vector<1x1x10x32xbf16>
    tpu.vector_store %arg4[%c0_64, %c6, %c0_65, %c0_66], %85 {strides = array<i32>} : memref<2x10x10x32xbf16, #tpu.memory_space<vmem>>, vector<1x1x10x32xbf16>,
    %c77 = arith.constant 77 : index
    %c0_67 = arith.constant 0 : index
    %86 = vector.load %arg5[%c77, %c0_67] : memref<230x32xf32, #tpu.memory_space<vmem>>, vector<10x32xf32>
    %87 = vector.broadcast %22 : vector<1x32xf32> to vector<10x32xf32>
    %88 = arith.addf %86, %87 : vector<10x32xf32>
    %cst_68 = arith.constant 0.000000e+00 : f32
    %89 = vector.broadcast %cst_68 : f32 to vector<10x32xf32>
    %90 = arith.maximumf %88, %89 : vector<10x32xf32>
    %91 = arith.truncf %90 : vector<10x32xf32> to vector<10x32xbf16>
    %c0_69 = arith.constant 0 : index
    %c7 = arith.constant 7 : index
    %c0_70 = arith.constant 0 : index
    %c0_71 = arith.constant 0 : index
    %92 = vector.load %arg4[%c0_69, %c7, %c0_70, %c0_71] : memref<2x10x10x32xbf16, #tpu.memory_space<vmem>>, vector<1x1x10x32xbf16>
    %93 = vector.shape_cast %92 : vector<1x1x10x32xbf16> to vector<10x32xbf16>
    %94 = vector.shape_cast %91 : vector<10x32xbf16> to vector<1x1x10x32xbf16>
    tpu.vector_store %arg4[%c0_69, %c7, %c0_70, %c0_71], %94 {strides = array<i32>} : memref<2x10x10x32xbf16, #tpu.memory_space<vmem>>, vector<1x1x10x32xbf16>,
    %c88 = arith.constant 88 : index
    %c0_72 = arith.constant 0 : index
    %95 = vector.load %arg5[%c88, %c0_72] : memref<230x32xf32, #tpu.memory_space<vmem>>, vector<10x32xf32>
    %96 = vector.broadcast %22 : vector<1x32xf32> to vector<10x32xf32>
    %97 = arith.addf %95, %96 : vector<10x32xf32>
    %cst_73 = arith.constant 0.000000e+00 : f32
    %98 = vector.broadcast %cst_73 : f32 to vector<10x32xf32>
    %99 = arith.maximumf %97, %98 : vector<10x32xf32>
    %100 = arith.truncf %99 : vector<10x32xf32> to vector<10x32xbf16>
    %c0_74 = arith.constant 0 : index
    %c8 = arith.constant 8 : index
    %c0_75 = arith.constant 0 : index
    %c0_76 = arith.constant 0 : index
    %101 = vector.load %arg4[%c0_74, %c8, %c0_75, %c0_76] : memref<2x10x10x32xbf16, #tpu.memory_space<vmem>>, vector<1x1x10x32xbf16>
    %102 = vector.shape_cast %101 : vector<1x1x10x32xbf16> to vector<10x32xbf16>
    %103 = vector.shape_cast %100 : vector<10x32xbf16> to vector<1x1x10x32xbf16>
    tpu.vector_store %arg4[%c0_74, %c8, %c0_75, %c0_76], %103 {strides = array<i32>} : memref<2x10x10x32xbf16, #tpu.memory_space<vmem>>, vector<1x1x10x32xbf16>,
    %c99 = arith.constant 99 : index
    %c0_77 = arith.constant 0 : index
    %104 = vector.load %arg5[%c99, %c0_77] : memref<230x32xf32, #tpu.memory_space<vmem>>, vector<10x32xf32>
    %105 = vector.broadcast %22 : vector<1x32xf32> to vector<10x32xf32>
    %106 = arith.addf %104, %105 : vector<10x32xf32>
    %cst_78 = arith.constant 0.000000e+00 : f32
    %107 = vector.broadcast %cst_78 : f32 to vector<10x32xf32>
    %108 = arith.maximumf %106, %107 : vector<10x32xf32>
    %109 = arith.truncf %108 : vector<10x32xf32> to vector<10x32xbf16>
    %c0_79 = arith.constant 0 : index
    %c9 = arith.constant 9 : index
    %c0_80 = arith.constant 0 : index
    %c0_81 = arith.constant 0 : index
    %110 = vector.load %arg4[%c0_79, %c9, %c0_80, %c0_81] : memref<2x10x10x32xbf16, #tpu.memory_space<vmem>>, vector<1x1x10x32xbf16>
    %111 = vector.shape_cast %110 : vector<1x1x10x32xbf16> to vector<10x32xbf16>
    %112 = vector.shape_cast %109 : vector<10x32xbf16> to vector<1x1x10x32xbf16>
    tpu.vector_store %arg4[%c0_79, %c9, %c0_80, %c0_81], %112 {strides = array<i32>} : memref<2x10x10x32xbf16, #tpu.memory_space<vmem>>, vector<1x1x10x32xbf16>,
    %c121 = arith.constant 121 : index
    %c0_82 = arith.constant 0 : index
    %113 = vector.load %arg5[%c121, %c0_82] : memref<230x32xf32, #tpu.memory_space<vmem>>, vector<10x32xf32>
    %114 = vector.broadcast %22 : vector<1x32xf32> to vector<10x32xf32>
    %115 = arith.addf %113, %114 : vector<10x32xf32>
    %cst_83 = arith.constant 0.000000e+00 : f32
    %116 = vector.broadcast %cst_83 : f32 to vector<10x32xf32>
    %117 = arith.maximumf %115, %116 : vector<10x32xf32>
    %118 = arith.truncf %117 : vector<10x32xf32> to vector<10x32xbf16>
    %c1_84 = arith.constant 1 : index
    %c0_85 = arith.constant 0 : index
    %c0_86 = arith.constant 0 : index
    %c0_87 = arith.constant 0 : index
    %119 = vector.load %arg4[%c1_84, %c0_85, %c0_86, %c0_87] : memref<2x10x10x32xbf16, #tpu.memory_space<vmem>>, vector<1x1x10x32xbf16>
    %120 = vector.shape_cast %119 : vector<1x1x10x32xbf16> to vector<10x32xbf16>
    %121 = vector.shape_cast %118 : vector<10x32xbf16> to vector<1x1x10x32xbf16>
    tpu.vector_store %arg4[%c1_84, %c0_85, %c0_86, %c0_87], %121 {strides = array<i32>} : memref<2x10x10x32xbf16, #tpu.memory_space<vmem>>, vector<1x1x10x32xbf16>,
    %c132 = arith.constant 132 : index
    %c0_88 = arith.constant 0 : index
    %122 = vector.load %arg5[%c132, %c0_88] : memref<230x32xf32, #tpu.memory_space<vmem>>, vector<10x32xf32>
    %123 = vector.broadcast %22 : vector<1x32xf32> to vector<10x32xf32>
    %124 = arith.addf %122, %123 : vector<10x32xf32>
    %cst_89 = arith.constant 0.000000e+00 : f32
    %125 = vector.broadcast %cst_89 : f32 to vector<10x32xf32>
    %126 = arith.maximumf %124, %125 : vector<10x32xf32>
    %127 = arith.truncf %126 : vector<10x32xf32> to vector<10x32xbf16>
    %c1_90 = arith.constant 1 : index
    %c1_91 = arith.constant 1 : index
    %c0_92 = arith.constant 0 : index
    %c0_93 = arith.constant 0 : index
    %128 = vector.load %arg4[%c1_90, %c1_91, %c0_92, %c0_93] : memref<2x10x10x32xbf16, #tpu.memory_space<vmem>>, vector<1x1x10x32xbf16>
    %129 = vector.shape_cast %128 : vector<1x1x10x32xbf16> to vector<10x32xbf16>
    %130 = vector.shape_cast %127 : vector<10x32xbf16> to vector<1x1x10x32xbf16>
    tpu.vector_store %arg4[%c1_90, %c1_91, %c0_92, %c0_93], %130 {strides = array<i32>} : memref<2x10x10x32xbf16, #tpu.memory_space<vmem>>, vector<1x1x10x32xbf16>,
    %c143 = arith.constant 143 : index
    %c0_94 = arith.constant 0 : index
    %131 = vector.load %arg5[%c143, %c0_94] : memref<230x32xf32, #tpu.memory_space<vmem>>, vector<10x32xf32>
    %132 = vector.broadcast %22 : vector<1x32xf32> to vector<10x32xf32>
    %133 = arith.addf %131, %132 : vector<10x32xf32>
    %cst_95 = arith.constant 0.000000e+00 : f32
    %134 = vector.broadcast %cst_95 : f32 to vector<10x32xf32>
    %135 = arith.maximumf %133, %134 : vector<10x32xf32>
    %136 = arith.truncf %135 : vector<10x32xf32> to vector<10x32xbf16>
    %c1_96 = arith.constant 1 : index
    %c2_97 = arith.constant 2 : index
    %c0_98 = arith.constant 0 : index
    %c0_99 = arith.constant 0 : index
    %137 = vector.load %arg4[%c1_96, %c2_97, %c0_98, %c0_99] : memref<2x10x10x32xbf16, #tpu.memory_space<vmem>>, vector<1x1x10x32xbf16>
    %138 = vector.shape_cast %137 : vector<1x1x10x32xbf16> to vector<10x32xbf16>
    %139 = vector.shape_cast %136 : vector<10x32xbf16> to vector<1x1x10x32xbf16>
    tpu.vector_store %arg4[%c1_96, %c2_97, %c0_98, %c0_99], %139 {strides = array<i32>} : memref<2x10x10x32xbf16, #tpu.memory_space<vmem>>, vector<1x1x10x32xbf16>,
    %c154 = arith.constant 154 : index
    %c0_100 = arith.constant 0 : index
    %140 = vector.load %arg5[%c154, %c0_100] : memref<230x32xf32, #tpu.memory_space<vmem>>, vector<10x32xf32>
    %141 = vector.broadcast %22 : vector<1x32xf32> to vector<10x32xf32>
    %142 = arith.addf %140, %141 : vector<10x32xf32>
    %cst_101 = arith.constant 0.000000e+00 : f32
    %143 = vector.broadcast %cst_101 : f32 to vector<10x32xf32>
    %144 = arith.maximumf %142, %143 : vector<10x32xf32>
    %145 = arith.truncf %144 : vector<10x32xf32> to vector<10x32xbf16>
    %c1_102 = arith.constant 1 : index
    %c3_103 = arith.constant 3 : index
    %c0_104 = arith.constant 0 : index
    %c0_105 = arith.constant 0 : index
    %146 = vector.load %arg4[%c1_102, %c3_103, %c0_104, %c0_105] : memref<2x10x10x32xbf16, #tpu.memory_space<vmem>>, vector<1x1x10x32xbf16>
    %147 = vector.shape_cast %146 : vector<1x1x10x32xbf16> to vector<10x32xbf16>
    %148 = vector.shape_cast %145 : vector<10x32xbf16> to vector<1x1x10x32xbf16>
    tpu.vector_store %arg4[%c1_102, %c3_103, %c0_104, %c0_105], %148 {strides = array<i32>} : memref<2x10x10x32xbf16, #tpu.memory_space<vmem>>, vector<1x1x10x32xbf16>,
    %c165 = arith.constant 165 : index
    %c0_106 = arith.constant 0 : index
    %149 = vector.load %arg5[%c165, %c0_106] : memref<230x32xf32, #tpu.memory_space<vmem>>, vector<10x32xf32>
    %150 = vector.broadcast %22 : vector<1x32xf32> to vector<10x32xf32>
    %151 = arith.addf %149, %150 : vector<10x32xf32>
    %cst_107 = arith.constant 0.000000e+00 : f32
    %152 = vector.broadcast %cst_107 : f32 to vector<10x32xf32>
    %153 = arith.maximumf %151, %152 : vector<10x32xf32>
    %154 = arith.truncf %153 : vector<10x32xf32> to vector<10x32xbf16>
    %c1_108 = arith.constant 1 : index
    %c4_109 = arith.constant 4 : index
    %c0_110 = arith.constant 0 : index
    %c0_111 = arith.constant 0 : index
    %155 = vector.load %arg4[%c1_108, %c4_109, %c0_110, %c0_111] : memref<2x10x10x32xbf16, #tpu.memory_space<vmem>>, vector<1x1x10x32xbf16>
    %156 = vector.shape_cast %155 : vector<1x1x10x32xbf16> to vector<10x32xbf16>
    %157 = vector.shape_cast %154 : vector<10x32xbf16> to vector<1x1x10x32xbf16>
    tpu.vector_store %arg4[%c1_108, %c4_109, %c0_110, %c0_111], %157 {strides = array<i32>} : memref<2x10x10x32xbf16, #tpu.memory_space<vmem>>, vector<1x1x10x32xbf16>,
    %c176 = arith.constant 176 : index
    %c0_112 = arith.constant 0 : index
    %158 = vector.load %arg5[%c176, %c0_112] : memref<230x32xf32, #tpu.memory_space<vmem>>, vector<10x32xf32>
    %159 = vector.broadcast %22 : vector<1x32xf32> to vector<10x32xf32>
    %160 = arith.addf %158, %159 : vector<10x32xf32>
    %cst_113 = arith.constant 0.000000e+00 : f32
    %161 = vector.broadcast %cst_113 : f32 to vector<10x32xf32>
    %162 = arith.maximumf %160, %161 : vector<10x32xf32>
    %163 = arith.truncf %162 : vector<10x32xf32> to vector<10x32xbf16>
    %c1_114 = arith.constant 1 : index
    %c5_115 = arith.constant 5 : index
    %c0_116 = arith.constant 0 : index
    %c0_117 = arith.constant 0 : index
    %164 = vector.load %arg4[%c1_114, %c5_115, %c0_116, %c0_117] : memref<2x10x10x32xbf16, #tpu.memory_space<vmem>>, vector<1x1x10x32xbf16>
    %165 = vector.shape_cast %164 : vector<1x1x10x32xbf16> to vector<10x32xbf16>
    %166 = vector.shape_cast %163 : vector<10x32xbf16> to vector<1x1x10x32xbf16>
    tpu.vector_store %arg4[%c1_114, %c5_115, %c0_116, %c0_117], %166 {strides = array<i32>} : memref<2x10x10x32xbf16, #tpu.memory_space<vmem>>, vector<1x1x10x32xbf16>,
    %c187 = arith.constant 187 : index
    %c0_118 = arith.constant 0 : index
    %167 = vector.load %arg5[%c187, %c0_118] : memref<230x32xf32, #tpu.memory_space<vmem>>, vector<10x32xf32>
    %168 = vector.broadcast %22 : vector<1x32xf32> to vector<10x32xf32>
    %169 = arith.addf %167, %168 : vector<10x32xf32>
    %cst_119 = arith.constant 0.000000e+00 : f32
    %170 = vector.broadcast %cst_119 : f32 to vector<10x32xf32>
    %171 = arith.maximumf %169, %170 : vector<10x32xf32>
    %172 = arith.truncf %171 : vector<10x32xf32> to vector<10x32xbf16>
    %c1_120 = arith.constant 1 : index
    %c6_121 = arith.constant 6 : index
    %c0_122 = arith.constant 0 : index
    %c0_123 = arith.constant 0 : index
    %173 = vector.load %arg4[%c1_120, %c6_121, %c0_122, %c0_123] : memref<2x10x10x32xbf16, #tpu.memory_space<vmem>>, vector<1x1x10x32xbf16>
    %174 = vector.shape_cast %173 : vector<1x1x10x32xbf16> to vector<10x32xbf16>
    %175 = vector.shape_cast %172 : vector<10x32xbf16> to vector<1x1x10x32xbf16>
    tpu.vector_store %arg4[%c1_120, %c6_121, %c0_122, %c0_123], %175 {strides = array<i32>} : memref<2x10x10x32xbf16, #tpu.memory_space<vmem>>, vector<1x1x10x32xbf16>,
    %c198 = arith.constant 198 : index
    %c0_124 = arith.constant 0 : index
    %176 = vector.load %arg5[%c198, %c0_124] : memref<230x32xf32, #tpu.memory_space<vmem>>, vector<10x32xf32>
    %177 = vector.broadcast %22 : vector<1x32xf32> to vector<10x32xf32>
    %178 = arith.addf %176, %177 : vector<10x32xf32>
    %cst_125 = arith.constant 0.000000e+00 : f32
    %179 = vector.broadcast %cst_125 : f32 to vector<10x32xf32>
    %180 = arith.maximumf %178, %179 : vector<10x32xf32>
    %181 = arith.truncf %180 : vector<10x32xf32> to vector<10x32xbf16>
    %c1_126 = arith.constant 1 : index
    %c7_127 = arith.constant 7 : index
    %c0_128 = arith.constant 0 : index
    %c0_129 = arith.constant 0 : index
    %182 = vector.load %arg4[%c1_126, %c7_127, %c0_128, %c0_129] : memref<2x10x10x32xbf16, #tpu.memory_space<vmem>>, vector<1x1x10x32xbf16>
    %183 = vector.shape_cast %182 : vector<1x1x10x32xbf16> to vector<10x32xbf16>
    %184 = vector.shape_cast %181 : vector<10x32xbf16> to vector<1x1x10x32xbf16>
    tpu.vector_store %arg4[%c1_126, %c7_127, %c0_128, %c0_129], %184 {strides = array<i32>} : memref<2x10x10x32xbf16, #tpu.memory_space<vmem>>, vector<1x1x10x32xbf16>,
    %c209 = arith.constant 209 : index
    %c0_130 = arith.constant 0 : index
    %185 = vector.load %arg5[%c209, %c0_130] : memref<230x32xf32, #tpu.memory_space<vmem>>, vector<10x32xf32>
    %186 = vector.broadcast %22 : vector<1x32xf32> to vector<10x32xf32>
    %187 = arith.addf %185, %186 : vector<10x32xf32>
    %cst_131 = arith.constant 0.000000e+00 : f32
    %188 = vector.broadcast %cst_131 : f32 to vector<10x32xf32>
    %189 = arith.maximumf %187, %188 : vector<10x32xf32>
    %190 = arith.truncf %189 : vector<10x32xf32> to vector<10x32xbf16>
    %c1_132 = arith.constant 1 : index
    %c8_133 = arith.constant 8 : index
    %c0_134 = arith.constant 0 : index
    %c0_135 = arith.constant 0 : index
    %191 = vector.load %arg4[%c1_132, %c8_133, %c0_134, %c0_135] : memref<2x10x10x32xbf16, #tpu.memory_space<vmem>>, vector<1x1x10x32xbf16>
    %192 = vector.shape_cast %191 : vector<1x1x10x32xbf16> to vector<10x32xbf16>
    %193 = vector.shape_cast %190 : vector<10x32xbf16> to vector<1x1x10x32xbf16>
    tpu.vector_store %arg4[%c1_132, %c8_133, %c0_134, %c0_135], %193 {strides = array<i32>} : memref<2x10x10x32xbf16, #tpu.memory_space<vmem>>, vector<1x1x10x32xbf16>,
    %c220 = arith.constant 220 : index
    %c0_136 = arith.constant 0 : index
    %194 = vector.load %arg5[%c220, %c0_136] : memref<230x32xf32, #tpu.memory_space<vmem>>, vector<10x32xf32>
    %195 = vector.broadcast %22 : vector<1x32xf32> to vector<10x32xf32>
    %196 = arith.addf %194, %195 : vector<10x32xf32>
    %cst_137 = arith.constant 0.000000e+00 : f32
    %197 = vector.broadcast %cst_137 : f32 to vector<10x32xf32>
    %198 = arith.maximumf %196, %197 : vector<10x32xf32>
    %199 = arith.truncf %198 : vector<10x32xf32> to vector<10x32xbf16>
    %c1_138 = arith.constant 1 : index
    %c9_139 = arith.constant 9 : index
    %c0_140 = arith.constant 0 : index
    %c0_141 = arith.constant 0 : index
    %200 = vector.load %arg4[%c1_138, %c9_139, %c0_140, %c0_141] : memref<2x10x10x32xbf16, #tpu.memory_space<vmem>>, vector<1x1x10x32xbf16>
    %201 = vector.shape_cast %200 : vector<1x1x10x32xbf16> to vector<10x32xbf16>
    %202 = vector.shape_cast %199 : vector<10x32xbf16> to vector<1x1x10x32xbf16>
    tpu.vector_store %arg4[%c1_138, %c9_139, %c0_140, %c0_141], %202 {strides = array<i32>} : memref<2x10x10x32xbf16, #tpu.memory_space<vmem>>, vector<1x1x10x32xbf16>,
    return
  }
  func.func @transform_0(%arg0: i32) -> (i32, i32) {
    %c0_i32 = arith.constant 0 : i32
    %c0_i32_0 = arith.constant 0 : i32
    return %arg0, %c0_i32 : i32, i32
  }
  func.func @transform_1(%arg0: i32) -> (i32, i32) {
    %c0_i32 = arith.constant 0 : i32
    %c0_i32_0 = arith.constant 0 : i32
    %c0_i32_1 = arith.constant 0 : i32
    return %c0_i32, %c0_i32_0 : i32, i32
  }
  func.func @transform_2(%arg0: i32) -> (i32, i32) {
    %c0_i32 = arith.constant 0 : i32
    %c0_i32_0 = arith.constant 0 : i32
    %c0_i32_1 = arith.constant 0 : i32
    return %c0_i32, %c0_i32_0 : i32, i32
  }
  func.func @transform_3(%arg0: i32) -> (i32, i32, i32, i32) {
    %c0_i32 = arith.constant 0 : i32
    %c0_i32_0 = arith.constant 0 : i32
    %c0_i32_1 = arith.constant 0 : i32
    %c0_i32_2 = arith.constant 0 : i32
    return %arg0, %c0_i32, %c0_i32_0, %c0_i32_1 : i32, i32, i32, i32
  }
}

module attributes {stable_mosaic.version = 11 : i64} {
  func.func @_conv_kernel(%arg0: i32, %arg1: memref<50x128xbf16, #tpu.memory_space<vmem>>, %arg2: memref<512x64xbf16, #tpu.memory_space<vmem>>, %arg3: memref<1x64xf32, #tpu.memory_space<vmem>>, %arg4: memref<2x4x4x64xbf16, #tpu.memory_space<vmem>>, %arg5: memref<44x64xf32, #tpu.memory_space<vmem>>) attributes {dimension_semantics = [#tpu.dimension_semantics<parallel>], iteration_bounds = array<i64: 1>, scalar_prefetch = 0 : i64, scratch_operands = 1 : i64, tpu.core_type = #tpu.core_type<tc>, window_params = [{transform_indices = @transform_0, window_bounds = array<i64: 50, 128>}, {pipeline_mode = #tpu.pipeline_mode<synchronous>, transform_indices = @transform_1, window_bounds = array<i64: 512, 64>}, {pipeline_mode = #tpu.pipeline_mode<synchronous>, transform_indices = @transform_2, window_bounds = array<i64: 1, 64>}, {transform_indices = @transform_3, window_bounds = array<i64: 2, 4, 4, 64>}]} {
    %c0 = arith.constant 0 : index
    %c0_0 = arith.constant 0 : index
    %0 = vector.load %arg1[%c0, %c0_0] : memref<50x128xbf16, #tpu.memory_space<vmem>>, vector<44x128xbf16>
    %c0_1 = arith.constant 0 : index
    %c0_2 = arith.constant 0 : index
    %1 = vector.load %arg2[%c0_1, %c0_2] : memref<512x64xbf16, #tpu.memory_space<vmem>>, vector<128x64xbf16>
    %cst = arith.constant dense<0.000000e+00> : vector<44x64xf32>
    %2 = tpu.matmul %0, %1, %cst {dimension_numbers = #tpu.dot_dimension_numbers<[1], [0], [0], [1], [0, 0, 1, 1], [], []>} : vector<44x128xbf16>, vector<128x64xbf16>, vector<44x64xf32> -> vector<44x64xf32>
    %c0_3 = arith.constant 0 : index
    %c0_4 = arith.constant 0 : index
    %3 = vector.load %arg5[%c0_3, %c0_4] : memref<44x64xf32, #tpu.memory_space<vmem>>, vector<44x64xf32>
    tpu.vector_store %arg5[%c0_3, %c0_4], %2 {strides = array<i32>} : memref<44x64xf32, #tpu.memory_space<vmem>>, vector<44x64xf32>,
    %c1 = arith.constant 1 : index
    %c0_5 = arith.constant 0 : index
    %4 = vector.load %arg1[%c1, %c0_5] : memref<50x128xbf16, #tpu.memory_space<vmem>>, vector<44x128xbf16>
    %c128 = arith.constant 128 : index
    %c0_6 = arith.constant 0 : index
    %5 = vector.load %arg2[%c128, %c0_6] : memref<512x64xbf16, #tpu.memory_space<vmem>>, vector<128x64xbf16>
    %cst_7 = arith.constant dense<0.000000e+00> : vector<44x64xf32>
    %6 = tpu.matmul %4, %5, %cst_7 {dimension_numbers = #tpu.dot_dimension_numbers<[1], [0], [0], [1], [0, 0, 1, 1], [], []>} : vector<44x128xbf16>, vector<128x64xbf16>, vector<44x64xf32> -> vector<44x64xf32>
    %c0_8 = arith.constant 0 : index
    %c0_9 = arith.constant 0 : index
    %7 = vector.load %arg5[%c0_8, %c0_9] : memref<44x64xf32, #tpu.memory_space<vmem>>, vector<44x64xf32>
    %8 = arith.addf %7, %6 : vector<44x64xf32>
    %c0_10 = arith.constant 0 : index
    %c0_11 = arith.constant 0 : index
    %9 = vector.load %arg5[%c0_10, %c0_11] : memref<44x64xf32, #tpu.memory_space<vmem>>, vector<44x64xf32>
    tpu.vector_store %arg5[%c0_10, %c0_11], %8 {strides = array<i32>} : memref<44x64xf32, #tpu.memory_space<vmem>>, vector<44x64xf32>,
    %c5 = arith.constant 5 : index
    %c0_12 = arith.constant 0 : index
    %10 = vector.load %arg1[%c5, %c0_12] : memref<50x128xbf16, #tpu.memory_space<vmem>>, vector<44x128xbf16>
    %c256 = arith.constant 256 : index
    %c0_13 = arith.constant 0 : index
    %11 = vector.load %arg2[%c256, %c0_13] : memref<512x64xbf16, #tpu.memory_space<vmem>>, vector<128x64xbf16>
    %cst_14 = arith.constant dense<0.000000e+00> : vector<44x64xf32>
    %12 = tpu.matmul %10, %11, %cst_14 {dimension_numbers = #tpu.dot_dimension_numbers<[1], [0], [0], [1], [0, 0, 1, 1], [], []>} : vector<44x128xbf16>, vector<128x64xbf16>, vector<44x64xf32> -> vector<44x64xf32>
    %c0_15 = arith.constant 0 : index
    %c0_16 = arith.constant 0 : index
    %13 = vector.load %arg5[%c0_15, %c0_16] : memref<44x64xf32, #tpu.memory_space<vmem>>, vector<44x64xf32>
    %14 = arith.addf %13, %12 : vector<44x64xf32>
    %c0_17 = arith.constant 0 : index
    %c0_18 = arith.constant 0 : index
    %15 = vector.load %arg5[%c0_17, %c0_18] : memref<44x64xf32, #tpu.memory_space<vmem>>, vector<44x64xf32>
    tpu.vector_store %arg5[%c0_17, %c0_18], %14 {strides = array<i32>} : memref<44x64xf32, #tpu.memory_space<vmem>>, vector<44x64xf32>,
    %c6 = arith.constant 6 : index
    %c0_19 = arith.constant 0 : index
    %16 = vector.load %arg1[%c6, %c0_19] : memref<50x128xbf16, #tpu.memory_space<vmem>>, vector<44x128xbf16>
    %c384 = arith.constant 384 : index
    %c0_20 = arith.constant 0 : index
    %17 = vector.load %arg2[%c384, %c0_20] : memref<512x64xbf16, #tpu.memory_space<vmem>>, vector<128x64xbf16>
    %cst_21 = arith.constant dense<0.000000e+00> : vector<44x64xf32>
    %18 = tpu.matmul %16, %17, %cst_21 {dimension_numbers = #tpu.dot_dimension_numbers<[1], [0], [0], [1], [0, 0, 1, 1], [], []>} : vector<44x128xbf16>, vector<128x64xbf16>, vector<44x64xf32> -> vector<44x64xf32>
    %c0_22 = arith.constant 0 : index
    %c0_23 = arith.constant 0 : index
    %19 = vector.load %arg5[%c0_22, %c0_23] : memref<44x64xf32, #tpu.memory_space<vmem>>, vector<44x64xf32>
    %20 = arith.addf %19, %18 : vector<44x64xf32>
    %c0_24 = arith.constant 0 : index
    %c0_25 = arith.constant 0 : index
    %21 = vector.load %arg5[%c0_24, %c0_25] : memref<44x64xf32, #tpu.memory_space<vmem>>, vector<44x64xf32>
    tpu.vector_store %arg5[%c0_24, %c0_25], %20 {strides = array<i32>} : memref<44x64xf32, #tpu.memory_space<vmem>>, vector<44x64xf32>,
    %c0_26 = arith.constant 0 : index
    %c0_27 = arith.constant 0 : index
    %22 = vector.load %arg3[%c0_26, %c0_27] : memref<1x64xf32, #tpu.memory_space<vmem>>, vector<1x64xf32>
    %c0_28 = arith.constant 0 : index
    %c0_29 = arith.constant 0 : index
    %23 = vector.load %arg5[%c0_28, %c0_29] : memref<44x64xf32, #tpu.memory_space<vmem>>, vector<4x64xf32>
    %24 = vector.broadcast %22 : vector<1x64xf32> to vector<4x64xf32>
    %25 = arith.addf %23, %24 : vector<4x64xf32>
    %cst_30 = arith.constant 0.000000e+00 : f32
    %26 = vector.broadcast %cst_30 : f32 to vector<4x64xf32>
    %27 = arith.maximumf %25, %26 : vector<4x64xf32>
    %28 = arith.truncf %27 : vector<4x64xf32> to vector<4x64xbf16>
    %c0_31 = arith.constant 0 : index
    %c0_32 = arith.constant 0 : index
    %c0_33 = arith.constant 0 : index
    %c0_34 = arith.constant 0 : index
    %29 = vector.load %arg4[%c0_31, %c0_32, %c0_33, %c0_34] : memref<2x4x4x64xbf16, #tpu.memory_space<vmem>>, vector<1x1x4x64xbf16>
    %30 = vector.shape_cast %29 : vector<1x1x4x64xbf16> to vector<4x64xbf16>
    %31 = vector.shape_cast %28 : vector<4x64xbf16> to vector<1x1x4x64xbf16>
    tpu.vector_store %arg4[%c0_31, %c0_32, %c0_33, %c0_34], %31 {strides = array<i32>} : memref<2x4x4x64xbf16, #tpu.memory_space<vmem>>, vector<1x1x4x64xbf16>,
    %c5_35 = arith.constant 5 : index
    %c0_36 = arith.constant 0 : index
    %32 = vector.load %arg5[%c5_35, %c0_36] : memref<44x64xf32, #tpu.memory_space<vmem>>, vector<4x64xf32>
    %33 = vector.broadcast %22 : vector<1x64xf32> to vector<4x64xf32>
    %34 = arith.addf %32, %33 : vector<4x64xf32>
    %cst_37 = arith.constant 0.000000e+00 : f32
    %35 = vector.broadcast %cst_37 : f32 to vector<4x64xf32>
    %36 = arith.maximumf %34, %35 : vector<4x64xf32>
    %37 = arith.truncf %36 : vector<4x64xf32> to vector<4x64xbf16>
    %c0_38 = arith.constant 0 : index
    %c1_39 = arith.constant 1 : index
    %c0_40 = arith.constant 0 : index
    %c0_41 = arith.constant 0 : index
    %38 = vector.load %arg4[%c0_38, %c1_39, %c0_40, %c0_41] : memref<2x4x4x64xbf16, #tpu.memory_space<vmem>>, vector<1x1x4x64xbf16>
    %39 = vector.shape_cast %38 : vector<1x1x4x64xbf16> to vector<4x64xbf16>
    %40 = vector.shape_cast %37 : vector<4x64xbf16> to vector<1x1x4x64xbf16>
    tpu.vector_store %arg4[%c0_38, %c1_39, %c0_40, %c0_41], %40 {strides = array<i32>} : memref<2x4x4x64xbf16, #tpu.memory_space<vmem>>, vector<1x1x4x64xbf16>,
    %c10 = arith.constant 10 : index
    %c0_42 = arith.constant 0 : index
    %41 = vector.load %arg5[%c10, %c0_42] : memref<44x64xf32, #tpu.memory_space<vmem>>, vector<4x64xf32>
    %42 = vector.broadcast %22 : vector<1x64xf32> to vector<4x64xf32>
    %43 = arith.addf %41, %42 : vector<4x64xf32>
    %cst_43 = arith.constant 0.000000e+00 : f32
    %44 = vector.broadcast %cst_43 : f32 to vector<4x64xf32>
    %45 = arith.maximumf %43, %44 : vector<4x64xf32>
    %46 = arith.truncf %45 : vector<4x64xf32> to vector<4x64xbf16>
    %c0_44 = arith.constant 0 : index
    %c2 = arith.constant 2 : index
    %c0_45 = arith.constant 0 : index
    %c0_46 = arith.constant 0 : index
    %47 = vector.load %arg4[%c0_44, %c2, %c0_45, %c0_46] : memref<2x4x4x64xbf16, #tpu.memory_space<vmem>>, vector<1x1x4x64xbf16>
    %48 = vector.shape_cast %47 : vector<1x1x4x64xbf16> to vector<4x64xbf16>
    %49 = vector.shape_cast %46 : vector<4x64xbf16> to vector<1x1x4x64xbf16>
    tpu.vector_store %arg4[%c0_44, %c2, %c0_45, %c0_46], %49 {strides = array<i32>} : memref<2x4x4x64xbf16, #tpu.memory_space<vmem>>, vector<1x1x4x64xbf16>,
    %c15 = arith.constant 15 : index
    %c0_47 = arith.constant 0 : index
    %50 = vector.load %arg5[%c15, %c0_47] : memref<44x64xf32, #tpu.memory_space<vmem>>, vector<4x64xf32>
    %51 = vector.broadcast %22 : vector<1x64xf32> to vector<4x64xf32>
    %52 = arith.addf %50, %51 : vector<4x64xf32>
    %cst_48 = arith.constant 0.000000e+00 : f32
    %53 = vector.broadcast %cst_48 : f32 to vector<4x64xf32>
    %54 = arith.maximumf %52, %53 : vector<4x64xf32>
    %55 = arith.truncf %54 : vector<4x64xf32> to vector<4x64xbf16>
    %c0_49 = arith.constant 0 : index
    %c3 = arith.constant 3 : index
    %c0_50 = arith.constant 0 : index
    %c0_51 = arith.constant 0 : index
    %56 = vector.load %arg4[%c0_49, %c3, %c0_50, %c0_51] : memref<2x4x4x64xbf16, #tpu.memory_space<vmem>>, vector<1x1x4x64xbf16>
    %57 = vector.shape_cast %56 : vector<1x1x4x64xbf16> to vector<4x64xbf16>
    %58 = vector.shape_cast %55 : vector<4x64xbf16> to vector<1x1x4x64xbf16>
    tpu.vector_store %arg4[%c0_49, %c3, %c0_50, %c0_51], %58 {strides = array<i32>} : memref<2x4x4x64xbf16, #tpu.memory_space<vmem>>, vector<1x1x4x64xbf16>,
    %c25 = arith.constant 25 : index
    %c0_52 = arith.constant 0 : index
    %59 = vector.load %arg5[%c25, %c0_52] : memref<44x64xf32, #tpu.memory_space<vmem>>, vector<4x64xf32>
    %60 = vector.broadcast %22 : vector<1x64xf32> to vector<4x64xf32>
    %61 = arith.addf %59, %60 : vector<4x64xf32>
    %cst_53 = arith.constant 0.000000e+00 : f32
    %62 = vector.broadcast %cst_53 : f32 to vector<4x64xf32>
    %63 = arith.maximumf %61, %62 : vector<4x64xf32>
    %64 = arith.truncf %63 : vector<4x64xf32> to vector<4x64xbf16>
    %c1_54 = arith.constant 1 : index
    %c0_55 = arith.constant 0 : index
    %c0_56 = arith.constant 0 : index
    %c0_57 = arith.constant 0 : index
    %65 = vector.load %arg4[%c1_54, %c0_55, %c0_56, %c0_57] : memref<2x4x4x64xbf16, #tpu.memory_space<vmem>>, vector<1x1x4x64xbf16>
    %66 = vector.shape_cast %65 : vector<1x1x4x64xbf16> to vector<4x64xbf16>
    %67 = vector.shape_cast %64 : vector<4x64xbf16> to vector<1x1x4x64xbf16>
    tpu.vector_store %arg4[%c1_54, %c0_55, %c0_56, %c0_57], %67 {strides = array<i32>} : memref<2x4x4x64xbf16, #tpu.memory_space<vmem>>, vector<1x1x4x64xbf16>,
    %c30 = arith.constant 30 : index
    %c0_58 = arith.constant 0 : index
    %68 = vector.load %arg5[%c30, %c0_58] : memref<44x64xf32, #tpu.memory_space<vmem>>, vector<4x64xf32>
    %69 = vector.broadcast %22 : vector<1x64xf32> to vector<4x64xf32>
    %70 = arith.addf %68, %69 : vector<4x64xf32>
    %cst_59 = arith.constant 0.000000e+00 : f32
    %71 = vector.broadcast %cst_59 : f32 to vector<4x64xf32>
    %72 = arith.maximumf %70, %71 : vector<4x64xf32>
    %73 = arith.truncf %72 : vector<4x64xf32> to vector<4x64xbf16>
    %c1_60 = arith.constant 1 : index
    %c1_61 = arith.constant 1 : index
    %c0_62 = arith.constant 0 : index
    %c0_63 = arith.constant 0 : index
    %74 = vector.load %arg4[%c1_60, %c1_61, %c0_62, %c0_63] : memref<2x4x4x64xbf16, #tpu.memory_space<vmem>>, vector<1x1x4x64xbf16>
    %75 = vector.shape_cast %74 : vector<1x1x4x64xbf16> to vector<4x64xbf16>
    %76 = vector.shape_cast %73 : vector<4x64xbf16> to vector<1x1x4x64xbf16>
    tpu.vector_store %arg4[%c1_60, %c1_61, %c0_62, %c0_63], %76 {strides = array<i32>} : memref<2x4x4x64xbf16, #tpu.memory_space<vmem>>, vector<1x1x4x64xbf16>,
    %c35 = arith.constant 35 : index
    %c0_64 = arith.constant 0 : index
    %77 = vector.load %arg5[%c35, %c0_64] : memref<44x64xf32, #tpu.memory_space<vmem>>, vector<4x64xf32>
    %78 = vector.broadcast %22 : vector<1x64xf32> to vector<4x64xf32>
    %79 = arith.addf %77, %78 : vector<4x64xf32>
    %cst_65 = arith.constant 0.000000e+00 : f32
    %80 = vector.broadcast %cst_65 : f32 to vector<4x64xf32>
    %81 = arith.maximumf %79, %80 : vector<4x64xf32>
    %82 = arith.truncf %81 : vector<4x64xf32> to vector<4x64xbf16>
    %c1_66 = arith.constant 1 : index
    %c2_67 = arith.constant 2 : index
    %c0_68 = arith.constant 0 : index
    %c0_69 = arith.constant 0 : index
    %83 = vector.load %arg4[%c1_66, %c2_67, %c0_68, %c0_69] : memref<2x4x4x64xbf16, #tpu.memory_space<vmem>>, vector<1x1x4x64xbf16>
    %84 = vector.shape_cast %83 : vector<1x1x4x64xbf16> to vector<4x64xbf16>
    %85 = vector.shape_cast %82 : vector<4x64xbf16> to vector<1x1x4x64xbf16>
    tpu.vector_store %arg4[%c1_66, %c2_67, %c0_68, %c0_69], %85 {strides = array<i32>} : memref<2x4x4x64xbf16, #tpu.memory_space<vmem>>, vector<1x1x4x64xbf16>,
    %c40 = arith.constant 40 : index
    %c0_70 = arith.constant 0 : index
    %86 = vector.load %arg5[%c40, %c0_70] : memref<44x64xf32, #tpu.memory_space<vmem>>, vector<4x64xf32>
    %87 = vector.broadcast %22 : vector<1x64xf32> to vector<4x64xf32>
    %88 = arith.addf %86, %87 : vector<4x64xf32>
    %cst_71 = arith.constant 0.000000e+00 : f32
    %89 = vector.broadcast %cst_71 : f32 to vector<4x64xf32>
    %90 = arith.maximumf %88, %89 : vector<4x64xf32>
    %91 = arith.truncf %90 : vector<4x64xf32> to vector<4x64xbf16>
    %c1_72 = arith.constant 1 : index
    %c3_73 = arith.constant 3 : index
    %c0_74 = arith.constant 0 : index
    %c0_75 = arith.constant 0 : index
    %92 = vector.load %arg4[%c1_72, %c3_73, %c0_74, %c0_75] : memref<2x4x4x64xbf16, #tpu.memory_space<vmem>>, vector<1x1x4x64xbf16>
    %93 = vector.shape_cast %92 : vector<1x1x4x64xbf16> to vector<4x64xbf16>
    %94 = vector.shape_cast %91 : vector<4x64xbf16> to vector<1x1x4x64xbf16>
    tpu.vector_store %arg4[%c1_72, %c3_73, %c0_74, %c0_75], %94 {strides = array<i32>} : memref<2x4x4x64xbf16, #tpu.memory_space<vmem>>, vector<1x1x4x64xbf16>,
    return
  }
  func.func @transform_0(%arg0: i32) -> (i32, i32) {
    %c0_i32 = arith.constant 0 : i32
    %c0_i32_0 = arith.constant 0 : i32
    return %arg0, %c0_i32 : i32, i32
  }
  func.func @transform_1(%arg0: i32) -> (i32, i32) {
    %c0_i32 = arith.constant 0 : i32
    %c0_i32_0 = arith.constant 0 : i32
    %c0_i32_1 = arith.constant 0 : i32
    return %c0_i32, %c0_i32_0 : i32, i32
  }
  func.func @transform_2(%arg0: i32) -> (i32, i32) {
    %c0_i32 = arith.constant 0 : i32
    %c0_i32_0 = arith.constant 0 : i32
    %c0_i32_1 = arith.constant 0 : i32
    return %c0_i32, %c0_i32_0 : i32, i32
  }
  func.func @transform_3(%arg0: i32) -> (i32, i32, i32, i32) {
    %c0_i32 = arith.constant 0 : i32
    %c0_i32_0 = arith.constant 0 : i32
    %c0_i32_1 = arith.constant 0 : i32
    %c0_i32_2 = arith.constant 0 : i32
    return %arg0, %c0_i32, %c0_i32_0, %c0_i32_1 : i32, i32, i32, i32
  }
}

module attributes {stable_mosaic.version = 11 : i64} {
  func.func @_conv_kernel(%arg0: i32, %arg1: memref<32x64xbf16, #tpu.memory_space<vmem>>, %arg2: memref<576x64xbf16, #tpu.memory_space<vmem>>, %arg3: memref<1x64xf32, #tpu.memory_space<vmem>>, %arg4: memref<2x2x2x64xbf16, #tpu.memory_space<vmem>>, %arg5: memref<22x64xf32, #tpu.memory_space<vmem>>) attributes {dimension_semantics = [#tpu.dimension_semantics<parallel>], iteration_bounds = array<i64: 1>, scalar_prefetch = 0 : i64, scratch_operands = 1 : i64, tpu.core_type = #tpu.core_type<tc>, window_params = [{transform_indices = @transform_0, window_bounds = array<i64: 32, 64>}, {pipeline_mode = #tpu.pipeline_mode<synchronous>, transform_indices = @transform_1, window_bounds = array<i64: 576, 64>}, {pipeline_mode = #tpu.pipeline_mode<synchronous>, transform_indices = @transform_2, window_bounds = array<i64: 1, 64>}, {transform_indices = @transform_3, window_bounds = array<i64: 2, 2, 2, 64>}]} {
    %c0 = arith.constant 0 : index
    %c0_0 = arith.constant 0 : index
    %0 = vector.load %arg1[%c0, %c0_0] : memref<32x64xbf16, #tpu.memory_space<vmem>>, vector<22x64xbf16>
    %c0_1 = arith.constant 0 : index
    %c0_2 = arith.constant 0 : index
    %1 = vector.load %arg2[%c0_1, %c0_2] : memref<576x64xbf16, #tpu.memory_space<vmem>>, vector<64x64xbf16>
    %cst = arith.constant dense<0.000000e+00> : vector<22x64xf32>
    %2 = tpu.matmul %0, %1, %cst {dimension_numbers = #tpu.dot_dimension_numbers<[1], [0], [0], [1], [0, 0, 1, 1], [], []>} : vector<22x64xbf16>, vector<64x64xbf16>, vector<22x64xf32> -> vector<22x64xf32>
    %c0_3 = arith.constant 0 : index
    %c0_4 = arith.constant 0 : index
    %3 = vector.load %arg5[%c0_3, %c0_4] : memref<22x64xf32, #tpu.memory_space<vmem>>, vector<22x64xf32>
    tpu.vector_store %arg5[%c0_3, %c0_4], %2 {strides = array<i32>} : memref<22x64xf32, #tpu.memory_space<vmem>>, vector<22x64xf32>,
    %c1 = arith.constant 1 : index
    %c0_5 = arith.constant 0 : index
    %4 = vector.load %arg1[%c1, %c0_5] : memref<32x64xbf16, #tpu.memory_space<vmem>>, vector<22x64xbf16>
    %c64 = arith.constant 64 : index
    %c0_6 = arith.constant 0 : index
    %5 = vector.load %arg2[%c64, %c0_6] : memref<576x64xbf16, #tpu.memory_space<vmem>>, vector<64x64xbf16>
    %cst_7 = arith.constant dense<0.000000e+00> : vector<22x64xf32>
    %6 = tpu.matmul %4, %5, %cst_7 {dimension_numbers = #tpu.dot_dimension_numbers<[1], [0], [0], [1], [0, 0, 1, 1], [], []>} : vector<22x64xbf16>, vector<64x64xbf16>, vector<22x64xf32> -> vector<22x64xf32>
    %c0_8 = arith.constant 0 : index
    %c0_9 = arith.constant 0 : index
    %7 = vector.load %arg5[%c0_8, %c0_9] : memref<22x64xf32, #tpu.memory_space<vmem>>, vector<22x64xf32>
    %8 = arith.addf %7, %6 : vector<22x64xf32>
    %c0_10 = arith.constant 0 : index
    %c0_11 = arith.constant 0 : index
    %9 = vector.load %arg5[%c0_10, %c0_11] : memref<22x64xf32, #tpu.memory_space<vmem>>, vector<22x64xf32>
    tpu.vector_store %arg5[%c0_10, %c0_11], %8 {strides = array<i32>} : memref<22x64xf32, #tpu.memory_space<vmem>>, vector<22x64xf32>,
    %c2 = arith.constant 2 : index
    %c0_12 = arith.constant 0 : index
    %10 = vector.load %arg1[%c2, %c0_12] : memref<32x64xbf16, #tpu.memory_space<vmem>>, vector<22x64xbf16>
    %c128 = arith.constant 128 : index
    %c0_13 = arith.constant 0 : index
    %11 = vector.load %arg2[%c128, %c0_13] : memref<576x64xbf16, #tpu.memory_space<vmem>>, vector<64x64xbf16>
    %cst_14 = arith.constant dense<0.000000e+00> : vector<22x64xf32>
    %12 = tpu.matmul %10, %11, %cst_14 {dimension_numbers = #tpu.dot_dimension_numbers<[1], [0], [0], [1], [0, 0, 1, 1], [], []>} : vector<22x64xbf16>, vector<64x64xbf16>, vector<22x64xf32> -> vector<22x64xf32>
    %c0_15 = arith.constant 0 : index
    %c0_16 = arith.constant 0 : index
    %13 = vector.load %arg5[%c0_15, %c0_16] : memref<22x64xf32, #tpu.memory_space<vmem>>, vector<22x64xf32>
    %14 = arith.addf %13, %12 : vector<22x64xf32>
    %c0_17 = arith.constant 0 : index
    %c0_18 = arith.constant 0 : index
    %15 = vector.load %arg5[%c0_17, %c0_18] : memref<22x64xf32, #tpu.memory_space<vmem>>, vector<22x64xf32>
    tpu.vector_store %arg5[%c0_17, %c0_18], %14 {strides = array<i32>} : memref<22x64xf32, #tpu.memory_space<vmem>>, vector<22x64xf32>,
    %c4 = arith.constant 4 : index
    %c0_19 = arith.constant 0 : index
    %16 = vector.load %arg1[%c4, %c0_19] : memref<32x64xbf16, #tpu.memory_space<vmem>>, vector<22x64xbf16>
    %c192 = arith.constant 192 : index
    %c0_20 = arith.constant 0 : index
    %17 = vector.load %arg2[%c192, %c0_20] : memref<576x64xbf16, #tpu.memory_space<vmem>>, vector<64x64xbf16>
    %cst_21 = arith.constant dense<0.000000e+00> : vector<22x64xf32>
    %18 = tpu.matmul %16, %17, %cst_21 {dimension_numbers = #tpu.dot_dimension_numbers<[1], [0], [0], [1], [0, 0, 1, 1], [], []>} : vector<22x64xbf16>, vector<64x64xbf16>, vector<22x64xf32> -> vector<22x64xf32>
    %c0_22 = arith.constant 0 : index
    %c0_23 = arith.constant 0 : index
    %19 = vector.load %arg5[%c0_22, %c0_23] : memref<22x64xf32, #tpu.memory_space<vmem>>, vector<22x64xf32>
    %20 = arith.addf %19, %18 : vector<22x64xf32>
    %c0_24 = arith.constant 0 : index
    %c0_25 = arith.constant 0 : index
    %21 = vector.load %arg5[%c0_24, %c0_25] : memref<22x64xf32, #tpu.memory_space<vmem>>, vector<22x64xf32>
    tpu.vector_store %arg5[%c0_24, %c0_25], %20 {strides = array<i32>} : memref<22x64xf32, #tpu.memory_space<vmem>>, vector<22x64xf32>,
    %c5 = arith.constant 5 : index
    %c0_26 = arith.constant 0 : index
    %22 = vector.load %arg1[%c5, %c0_26] : memref<32x64xbf16, #tpu.memory_space<vmem>>, vector<22x64xbf16>
    %c256 = arith.constant 256 : index
    %c0_27 = arith.constant 0 : index
    %23 = vector.load %arg2[%c256, %c0_27] : memref<576x64xbf16, #tpu.memory_space<vmem>>, vector<64x64xbf16>
    %cst_28 = arith.constant dense<0.000000e+00> : vector<22x64xf32>
    %24 = tpu.matmul %22, %23, %cst_28 {dimension_numbers = #tpu.dot_dimension_numbers<[1], [0], [0], [1], [0, 0, 1, 1], [], []>} : vector<22x64xbf16>, vector<64x64xbf16>, vector<22x64xf32> -> vector<22x64xf32>
    %c0_29 = arith.constant 0 : index
    %c0_30 = arith.constant 0 : index
    %25 = vector.load %arg5[%c0_29, %c0_30] : memref<22x64xf32, #tpu.memory_space<vmem>>, vector<22x64xf32>
    %26 = arith.addf %25, %24 : vector<22x64xf32>
    %c0_31 = arith.constant 0 : index
    %c0_32 = arith.constant 0 : index
    %27 = vector.load %arg5[%c0_31, %c0_32] : memref<22x64xf32, #tpu.memory_space<vmem>>, vector<22x64xf32>
    tpu.vector_store %arg5[%c0_31, %c0_32], %26 {strides = array<i32>} : memref<22x64xf32, #tpu.memory_space<vmem>>, vector<22x64xf32>,
    %c6 = arith.constant 6 : index
    %c0_33 = arith.constant 0 : index
    %28 = vector.load %arg1[%c6, %c0_33] : memref<32x64xbf16, #tpu.memory_space<vmem>>, vector<22x64xbf16>
    %c320 = arith.constant 320 : index
    %c0_34 = arith.constant 0 : index
    %29 = vector.load %arg2[%c320, %c0_34] : memref<576x64xbf16, #tpu.memory_space<vmem>>, vector<64x64xbf16>
    %cst_35 = arith.constant dense<0.000000e+00> : vector<22x64xf32>
    %30 = tpu.matmul %28, %29, %cst_35 {dimension_numbers = #tpu.dot_dimension_numbers<[1], [0], [0], [1], [0, 0, 1, 1], [], []>} : vector<22x64xbf16>, vector<64x64xbf16>, vector<22x64xf32> -> vector<22x64xf32>
    %c0_36 = arith.constant 0 : index
    %c0_37 = arith.constant 0 : index
    %31 = vector.load %arg5[%c0_36, %c0_37] : memref<22x64xf32, #tpu.memory_space<vmem>>, vector<22x64xf32>
    %32 = arith.addf %31, %30 : vector<22x64xf32>
    %c0_38 = arith.constant 0 : index
    %c0_39 = arith.constant 0 : index
    %33 = vector.load %arg5[%c0_38, %c0_39] : memref<22x64xf32, #tpu.memory_space<vmem>>, vector<22x64xf32>
    tpu.vector_store %arg5[%c0_38, %c0_39], %32 {strides = array<i32>} : memref<22x64xf32, #tpu.memory_space<vmem>>, vector<22x64xf32>,
    %c8 = arith.constant 8 : index
    %c0_40 = arith.constant 0 : index
    %34 = vector.load %arg1[%c8, %c0_40] : memref<32x64xbf16, #tpu.memory_space<vmem>>, vector<22x64xbf16>
    %c384 = arith.constant 384 : index
    %c0_41 = arith.constant 0 : index
    %35 = vector.load %arg2[%c384, %c0_41] : memref<576x64xbf16, #tpu.memory_space<vmem>>, vector<64x64xbf16>
    %cst_42 = arith.constant dense<0.000000e+00> : vector<22x64xf32>
    %36 = tpu.matmul %34, %35, %cst_42 {dimension_numbers = #tpu.dot_dimension_numbers<[1], [0], [0], [1], [0, 0, 1, 1], [], []>} : vector<22x64xbf16>, vector<64x64xbf16>, vector<22x64xf32> -> vector<22x64xf32>
    %c0_43 = arith.constant 0 : index
    %c0_44 = arith.constant 0 : index
    %37 = vector.load %arg5[%c0_43, %c0_44] : memref<22x64xf32, #tpu.memory_space<vmem>>, vector<22x64xf32>
    %38 = arith.addf %37, %36 : vector<22x64xf32>
    %c0_45 = arith.constant 0 : index
    %c0_46 = arith.constant 0 : index
    %39 = vector.load %arg5[%c0_45, %c0_46] : memref<22x64xf32, #tpu.memory_space<vmem>>, vector<22x64xf32>
    tpu.vector_store %arg5[%c0_45, %c0_46], %38 {strides = array<i32>} : memref<22x64xf32, #tpu.memory_space<vmem>>, vector<22x64xf32>,
    %c9 = arith.constant 9 : index
    %c0_47 = arith.constant 0 : index
    %40 = vector.load %arg1[%c9, %c0_47] : memref<32x64xbf16, #tpu.memory_space<vmem>>, vector<22x64xbf16>
    %c448 = arith.constant 448 : index
    %c0_48 = arith.constant 0 : index
    %41 = vector.load %arg2[%c448, %c0_48] : memref<576x64xbf16, #tpu.memory_space<vmem>>, vector<64x64xbf16>
    %cst_49 = arith.constant dense<0.000000e+00> : vector<22x64xf32>
    %42 = tpu.matmul %40, %41, %cst_49 {dimension_numbers = #tpu.dot_dimension_numbers<[1], [0], [0], [1], [0, 0, 1, 1], [], []>} : vector<22x64xbf16>, vector<64x64xbf16>, vector<22x64xf32> -> vector<22x64xf32>
    %c0_50 = arith.constant 0 : index
    %c0_51 = arith.constant 0 : index
    %43 = vector.load %arg5[%c0_50, %c0_51] : memref<22x64xf32, #tpu.memory_space<vmem>>, vector<22x64xf32>
    %44 = arith.addf %43, %42 : vector<22x64xf32>
    %c0_52 = arith.constant 0 : index
    %c0_53 = arith.constant 0 : index
    %45 = vector.load %arg5[%c0_52, %c0_53] : memref<22x64xf32, #tpu.memory_space<vmem>>, vector<22x64xf32>
    tpu.vector_store %arg5[%c0_52, %c0_53], %44 {strides = array<i32>} : memref<22x64xf32, #tpu.memory_space<vmem>>, vector<22x64xf32>,
    %c10 = arith.constant 10 : index
    %c0_54 = arith.constant 0 : index
    %46 = vector.load %arg1[%c10, %c0_54] : memref<32x64xbf16, #tpu.memory_space<vmem>>, vector<22x64xbf16>
    %c512 = arith.constant 512 : index
    %c0_55 = arith.constant 0 : index
    %47 = vector.load %arg2[%c512, %c0_55] : memref<576x64xbf16, #tpu.memory_space<vmem>>, vector<64x64xbf16>
    %cst_56 = arith.constant dense<0.000000e+00> : vector<22x64xf32>
    %48 = tpu.matmul %46, %47, %cst_56 {dimension_numbers = #tpu.dot_dimension_numbers<[1], [0], [0], [1], [0, 0, 1, 1], [], []>} : vector<22x64xbf16>, vector<64x64xbf16>, vector<22x64xf32> -> vector<22x64xf32>
    %c0_57 = arith.constant 0 : index
    %c0_58 = arith.constant 0 : index
    %49 = vector.load %arg5[%c0_57, %c0_58] : memref<22x64xf32, #tpu.memory_space<vmem>>, vector<22x64xf32>
    %50 = arith.addf %49, %48 : vector<22x64xf32>
    %c0_59 = arith.constant 0 : index
    %c0_60 = arith.constant 0 : index
    %51 = vector.load %arg5[%c0_59, %c0_60] : memref<22x64xf32, #tpu.memory_space<vmem>>, vector<22x64xf32>
    tpu.vector_store %arg5[%c0_59, %c0_60], %50 {strides = array<i32>} : memref<22x64xf32, #tpu.memory_space<vmem>>, vector<22x64xf32>,
    %c0_61 = arith.constant 0 : index
    %c0_62 = arith.constant 0 : index
    %52 = vector.load %arg3[%c0_61, %c0_62] : memref<1x64xf32, #tpu.memory_space<vmem>>, vector<1x64xf32>
    %c0_63 = arith.constant 0 : index
    %c0_64 = arith.constant 0 : index
    %53 = vector.load %arg5[%c0_63, %c0_64] : memref<22x64xf32, #tpu.memory_space<vmem>>, vector<2x64xf32>
    %54 = vector.broadcast %52 : vector<1x64xf32> to vector<2x64xf32>
    %55 = arith.addf %53, %54 : vector<2x64xf32>
    %cst_65 = arith.constant 0.000000e+00 : f32
    %56 = vector.broadcast %cst_65 : f32 to vector<2x64xf32>
    %57 = arith.maximumf %55, %56 : vector<2x64xf32>
    %58 = arith.truncf %57 : vector<2x64xf32> to vector<2x64xbf16>
    %c0_66 = arith.constant 0 : index
    %c0_67 = arith.constant 0 : index
    %c0_68 = arith.constant 0 : index
    %c0_69 = arith.constant 0 : index
    %59 = vector.load %arg4[%c0_66, %c0_67, %c0_68, %c0_69] : memref<2x2x2x64xbf16, #tpu.memory_space<vmem>>, vector<1x1x2x64xbf16>
    %60 = vector.shape_cast %59 : vector<1x1x2x64xbf16> to vector<2x64xbf16>
    %61 = vector.shape_cast %58 : vector<2x64xbf16> to vector<1x1x2x64xbf16>
    tpu.vector_store %arg4[%c0_66, %c0_67, %c0_68, %c0_69], %61 {strides = array<i32>} : memref<2x2x2x64xbf16, #tpu.memory_space<vmem>>, vector<1x1x2x64xbf16>,
    %c4_70 = arith.constant 4 : index
    %c0_71 = arith.constant 0 : index
    %62 = vector.load %arg5[%c4_70, %c0_71] : memref<22x64xf32, #tpu.memory_space<vmem>>, vector<2x64xf32>
    %63 = vector.broadcast %52 : vector<1x64xf32> to vector<2x64xf32>
    %64 = arith.addf %62, %63 : vector<2x64xf32>
    %cst_72 = arith.constant 0.000000e+00 : f32
    %65 = vector.broadcast %cst_72 : f32 to vector<2x64xf32>
    %66 = arith.maximumf %64, %65 : vector<2x64xf32>
    %67 = arith.truncf %66 : vector<2x64xf32> to vector<2x64xbf16>
    %c0_73 = arith.constant 0 : index
    %c1_74 = arith.constant 1 : index
    %c0_75 = arith.constant 0 : index
    %c0_76 = arith.constant 0 : index
    %68 = vector.load %arg4[%c0_73, %c1_74, %c0_75, %c0_76] : memref<2x2x2x64xbf16, #tpu.memory_space<vmem>>, vector<1x1x2x64xbf16>
    %69 = vector.shape_cast %68 : vector<1x1x2x64xbf16> to vector<2x64xbf16>
    %70 = vector.shape_cast %67 : vector<2x64xbf16> to vector<1x1x2x64xbf16>
    tpu.vector_store %arg4[%c0_73, %c1_74, %c0_75, %c0_76], %70 {strides = array<i32>} : memref<2x2x2x64xbf16, #tpu.memory_space<vmem>>, vector<1x1x2x64xbf16>,
    %c16 = arith.constant 16 : index
    %c0_77 = arith.constant 0 : index
    %71 = vector.load %arg5[%c16, %c0_77] : memref<22x64xf32, #tpu.memory_space<vmem>>, vector<2x64xf32>
    %72 = vector.broadcast %52 : vector<1x64xf32> to vector<2x64xf32>
    %73 = arith.addf %71, %72 : vector<2x64xf32>
    %cst_78 = arith.constant 0.000000e+00 : f32
    %74 = vector.broadcast %cst_78 : f32 to vector<2x64xf32>
    %75 = arith.maximumf %73, %74 : vector<2x64xf32>
    %76 = arith.truncf %75 : vector<2x64xf32> to vector<2x64xbf16>
    %c1_79 = arith.constant 1 : index
    %c0_80 = arith.constant 0 : index
    %c0_81 = arith.constant 0 : index
    %c0_82 = arith.constant 0 : index
    %77 = vector.load %arg4[%c1_79, %c0_80, %c0_81, %c0_82] : memref<2x2x2x64xbf16, #tpu.memory_space<vmem>>, vector<1x1x2x64xbf16>
    %78 = vector.shape_cast %77 : vector<1x1x2x64xbf16> to vector<2x64xbf16>
    %79 = vector.shape_cast %76 : vector<2x64xbf16> to vector<1x1x2x64xbf16>
    tpu.vector_store %arg4[%c1_79, %c0_80, %c0_81, %c0_82], %79 {strides = array<i32>} : memref<2x2x2x64xbf16, #tpu.memory_space<vmem>>, vector<1x1x2x64xbf16>,
    %c20 = arith.constant 20 : index
    %c0_83 = arith.constant 0 : index
    %80 = vector.load %arg5[%c20, %c0_83] : memref<22x64xf32, #tpu.memory_space<vmem>>, vector<2x64xf32>
    %81 = vector.broadcast %52 : vector<1x64xf32> to vector<2x64xf32>
    %82 = arith.addf %80, %81 : vector<2x64xf32>
    %cst_84 = arith.constant 0.000000e+00 : f32
    %83 = vector.broadcast %cst_84 : f32 to vector<2x64xf32>
    %84 = arith.maximumf %82, %83 : vector<2x64xf32>
    %85 = arith.truncf %84 : vector<2x64xf32> to vector<2x64xbf16>
    %c1_85 = arith.constant 1 : index
    %c1_86 = arith.constant 1 : index
    %c0_87 = arith.constant 0 : index
    %c0_88 = arith.constant 0 : index
    %86 = vector.load %arg4[%c1_85, %c1_86, %c0_87, %c0_88] : memref<2x2x2x64xbf16, #tpu.memory_space<vmem>>, vector<1x1x2x64xbf16>
    %87 = vector.shape_cast %86 : vector<1x1x2x64xbf16> to vector<2x64xbf16>
    %88 = vector.shape_cast %85 : vector<2x64xbf16> to vector<1x1x2x64xbf16>
    tpu.vector_store %arg4[%c1_85, %c1_86, %c0_87, %c0_88], %88 {strides = array<i32>} : memref<2x2x2x64xbf16, #tpu.memory_space<vmem>>, vector<1x1x2x64xbf16>,
    return
  }
  func.func @transform_0(%arg0: i32) -> (i32, i32) {
    %c0_i32 = arith.constant 0 : i32
    %c0_i32_0 = arith.constant 0 : i32
    return %arg0, %c0_i32 : i32, i32
  }
  func.func @transform_1(%arg0: i32) -> (i32, i32) {
    %c0_i32 = arith.constant 0 : i32
    %c0_i32_0 = arith.constant 0 : i32
    %c0_i32_1 = arith.constant 0 : i32
    return %c0_i32, %c0_i32_0 : i32, i32
  }
  func.func @transform_2(%arg0: i32) -> (i32, i32) {
    %c0_i32 = arith.constant 0 : i32
    %c0_i32_0 = arith.constant 0 : i32
    %c0_i32_1 = arith.constant 0 : i32
    return %c0_i32, %c0_i32_0 : i32, i32
  }
  func.func @transform_3(%arg0: i32) -> (i32, i32, i32, i32) {
    %c0_i32 = arith.constant 0 : i32
    %c0_i32_0 = arith.constant 0 : i32
    %c0_i32_1 = arith.constant 0 : i32
    %c0_i32_2 = arith.constant 0 : i32
    return %arg0, %c0_i32, %c0_i32_0, %c0_i32_1 : i32, i32, i32, i32
  }
}

module attributes {stable_mosaic.version = 11 : i64} {
  func.func @_head_kernel(%arg0: i32, %arg1: memref<2x256xbf16, #tpu.memory_space<vmem>>, %arg2: memref<256x64xbf16, #tpu.memory_space<vmem>>, %arg3: memref<1x64xf32, #tpu.memory_space<vmem>>, %arg4: memref<64x128xbf16, #tpu.memory_space<vmem>>, %arg5: memref<1x128xf32, #tpu.memory_space<vmem>>, %arg6: memref<2x128xf32, #tpu.memory_space<vmem>>) attributes {dimension_semantics = [#tpu.dimension_semantics<parallel>], iteration_bounds = array<i64: 1>, scalar_prefetch = 0 : i64, scratch_operands = 0 : i64, tpu.core_type = #tpu.core_type<tc>, window_params = [{transform_indices = @transform_0, window_bounds = array<i64: 2, 256>}, {pipeline_mode = #tpu.pipeline_mode<synchronous>, transform_indices = @transform_1, window_bounds = array<i64: 256, 64>}, {pipeline_mode = #tpu.pipeline_mode<synchronous>, transform_indices = @transform_2, window_bounds = array<i64: 1, 64>}, {pipeline_mode = #tpu.pipeline_mode<synchronous>, transform_indices = @transform_3, window_bounds = array<i64: 64, 128>}, {pipeline_mode = #tpu.pipeline_mode<synchronous>, transform_indices = @transform_4, window_bounds = array<i64: 1, 128>}, {transform_indices = @transform_5, window_bounds = array<i64: 2, 128>}]} {
    %c0 = arith.constant 0 : index
    %c0_0 = arith.constant 0 : index
    %0 = vector.load %arg1[%c0, %c0_0] : memref<2x256xbf16, #tpu.memory_space<vmem>>, vector<2x256xbf16>
    %c0_1 = arith.constant 0 : index
    %c0_2 = arith.constant 0 : index
    %1 = vector.load %arg2[%c0_1, %c0_2] : memref<256x64xbf16, #tpu.memory_space<vmem>>, vector<256x64xbf16>
    %cst = arith.constant dense<0.000000e+00> : vector<2x64xf32>
    %2 = tpu.matmul %0, %1, %cst {dimension_numbers = #tpu.dot_dimension_numbers<[1], [0], [0], [1], [0, 0, 1, 1], [], []>} : vector<2x256xbf16>, vector<256x64xbf16>, vector<2x64xf32> -> vector<2x64xf32>
    %c0_3 = arith.constant 0 : index
    %c0_4 = arith.constant 0 : index
    %3 = vector.load %arg3[%c0_3, %c0_4] : memref<1x64xf32, #tpu.memory_space<vmem>>, vector<1x64xf32>
    %4 = vector.broadcast %3 : vector<1x64xf32> to vector<2x64xf32>
    %5 = arith.addf %2, %4 : vector<2x64xf32>
    %cst_5 = arith.constant 0.000000e+00 : f32
    %6 = vector.broadcast %cst_5 : f32 to vector<2x64xf32>
    %7 = arith.maximumf %5, %6 : vector<2x64xf32>
    %8 = arith.truncf %7 : vector<2x64xf32> to vector<2x64xbf16>
    %c0_6 = arith.constant 0 : index
    %c0_7 = arith.constant 0 : index
    %9 = vector.load %arg4[%c0_6, %c0_7] : memref<64x128xbf16, #tpu.memory_space<vmem>>, vector<64x128xbf16>
    %cst_8 = arith.constant dense<0.000000e+00> : vector<2x128xf32>
    %10 = tpu.matmul %8, %9, %cst_8 {dimension_numbers = #tpu.dot_dimension_numbers<[1], [0], [0], [1], [0, 0, 1, 1], [], []>} : vector<2x64xbf16>, vector<64x128xbf16>, vector<2x128xf32> -> vector<2x128xf32>
    %c0_9 = arith.constant 0 : index
    %c0_10 = arith.constant 0 : index
    %11 = vector.load %arg5[%c0_9, %c0_10] : memref<1x128xf32, #tpu.memory_space<vmem>>, vector<1x128xf32>
    %12 = vector.broadcast %11 : vector<1x128xf32> to vector<2x128xf32>
    %13 = arith.addf %10, %12 : vector<2x128xf32>
    %c0_11 = arith.constant 0 : index
    %c0_12 = arith.constant 0 : index
    %14 = vector.load %arg6[%c0_11, %c0_12] : memref<2x128xf32, #tpu.memory_space<vmem>>, vector<2x128xf32>
    tpu.vector_store %arg6[%c0_11, %c0_12], %13 {strides = array<i32>} : memref<2x128xf32, #tpu.memory_space<vmem>>, vector<2x128xf32>,
    return
  }
  func.func @transform_0(%arg0: i32) -> (i32, i32) {
    %c0_i32 = arith.constant 0 : i32
    %c0_i32_0 = arith.constant 0 : i32
    return %arg0, %c0_i32 : i32, i32
  }
  func.func @transform_1(%arg0: i32) -> (i32, i32) {
    %c0_i32 = arith.constant 0 : i32
    %c0_i32_0 = arith.constant 0 : i32
    %c0_i32_1 = arith.constant 0 : i32
    return %c0_i32, %c0_i32_0 : i32, i32
  }
  func.func @transform_2(%arg0: i32) -> (i32, i32) {
    %c0_i32 = arith.constant 0 : i32
    %c0_i32_0 = arith.constant 0 : i32
    %c0_i32_1 = arith.constant 0 : i32
    return %c0_i32, %c0_i32_0 : i32, i32
  }
  func.func @transform_3(%arg0: i32) -> (i32, i32) {
    %c0_i32 = arith.constant 0 : i32
    %c0_i32_0 = arith.constant 0 : i32
    %c0_i32_1 = arith.constant 0 : i32
    return %c0_i32, %c0_i32_0 : i32, i32
  }
  func.func @transform_4(%arg0: i32) -> (i32, i32) {
    %c0_i32 = arith.constant 0 : i32
    %c0_i32_0 = arith.constant 0 : i32
    %c0_i32_1 = arith.constant 0 : i32
    return %c0_i32, %c0_i32_0 : i32, i32
  }
  func.func @transform_5(%arg0: i32) -> (i32, i32) {
    %c0_i32 = arith.constant 0 : i32
    %c0_i32_0 = arith.constant 0 : i32
    return %arg0, %c0_i32 : i32, i32
  }
}

</mosaic_0001>

<llo_original>
// kernel: cat_q_conv_net_forward.4
$region0: #{cat_q_conv_net_forward.4}
  #allocation0 [shape = 'u32[]', space=smem, size = 0x4, offset = 0x4, fixed_abs, tag = 'smem constant byte address 0x4 - core index']
  #allocation1 [shape = 'u32[144,128]{1,0:T(1,128)}', space=vmem, size = 0x12000, scoped, tag = 'internal scratch']
  #allocation2 [shape = 'f32[230,32]{1,0:T(8,128)}', space=vmem, size = 0x1d000, scoped, tag = 'scratch operand']
  %s0 = inlined_call_operand.vmem [shape: bf16[242,64], index: 0, kind: input, shape index: {}]
  %s1 = inlined_call_operand.vmem [shape: bf16[256,32], index: 1, kind: input, shape index: {}]
  %s2 = inlined_call_operand.vmem [shape: f32[1,32], index: 2, kind: input, shape index: {}]
  %s3 = inlined_call_operand.vmem [shape: bf16[2,10,10,32], index: 3, kind: output, shape index: {}]
  %s4 = sld [smem:[#allocation0]]
  $region22: #{cat_q_conv_net_forward.4} parent=0
    _
  %s6 = ssub.s32 1, %s4
  %s7 = scalar_select 0, %s6, %s4
  // Predicated region
  $region2: #{cat_q_conv_net_forward.4} parent=0 // pred_check
    _
  $region3: #{cat_q_conv_net_forward.4} parent=0 // pred_check_branch
    %9 = sbr.rel (0) target = $region5
  $region4: #{cat_q_conv_net_forward.4} parent=0 // pred_region
    _
  $region5: #{cat_q_conv_net_forward.4} parent=0 // pred_fallthru
    _
  // Predicated region
  $region6: #{cat_q_conv_net_forward.4} parent=0 // pred_check
    _
  $region7: #{cat_q_conv_net_forward.4} parent=0 // pred_check_branch
    %11 = sbr.rel (0) target = $region9
  $region8: #{cat_q_conv_net_forward.4} parent=0 // pred_region
    _
  $region9: #{cat_q_conv_net_forward.4} parent=0 // pred_fallthru
    _
  // Predicated region
  $region10: #{cat_q_conv_net_forward.4} parent=0 // pred_check
    _
  $region11: #{cat_q_conv_net_forward.4} parent=0 // pred_check_branch
    %13 = sbr.rel (0) target = $region13
  $region12: #{cat_q_conv_net_forward.4} parent=0 // pred_region
    _
  $region13: #{cat_q_conv_net_forward.4} parent=0 // pred_fallthru
    _
  %v15 = vld [vmem:[%s0] sm:$0xf]
  %v16 = vld [vmem:[%s0 + $0x4] sm:$0xf]
  %v17 = vld [vmem:[%s0 + $0x8] sm:$0xf]
  %v18 = vld [vmem:[%s0 + $0xc] sm:$0xf]
  %v19 = vld [vmem:[%s0 + $0x10] sm:$0xf]
  %v20 = vld [vmem:[%s0 + $0x14] sm:$0xf]
  %v21 = vld [vmem:[%s0 + $0x18] sm:$0xf]
  %v22 = vld [vmem:[%s0 + $0x1c] sm:$0xf]
  %v23 = vld [vmem:[%s0 + $0x20] sm:$0xf]
  %v24 = vld [vmem:[%s0 + $0x24] sm:$0xf]
  %v25 = vld [vmem:[%s0 + $0x28] sm:$0xf]
  %v26 = vld [vmem:[%s0 + $0x2c] sm:$0xf]
  %v27 = vld [vmem:[%s0 + $0x30] sm:$0xf]
  %v28 = vld [vmem:[%s0 + $0x34] sm:$0xf]
  %v29 = vld [vmem:[%s0 + $0x38] sm:$0xf]
  %v30 = vld [vmem:[%s0 + $0x3c] sm:$0xf]
  %v31 = vld [vmem:[%s0 + $0x40] sm:$0xf]
  %v32 = vld [vmem:[%s0 + $0x44] sm:$0xf]
  %v33 = vld [vmem:[%s0 + $0x48] sm:$0xf]
  %v34 = vld [vmem:[%s0 + $0x4c] sm:$0xf]
  %v35 = vld [vmem:[%s0 + $0x50] sm:$0xf]
  %v36 = vld [vmem:[%s0 + $0x54] sm:$0xf]
  %v37 = vld [vmem:[%s0 + $0x58] sm:$0xf]
  %v38 = vld [vmem:[%s0 + $0x5c] sm:$0xf]
  %v39 = vld [vmem:[%s0 + $0x60] sm:$0xf]
  %v40 = vld [vmem:[%s0 + $0x64] sm:$0xf]
  %v41 = vld [vmem:[%s0 + $0x68] sm:$0xf]
  %v42 = vld [vmem:[%s0 + $0x6c] sm:$0xf]
  %v43 = vld [vmem:[%s0 + $0x70] sm:$0x7]
  %v44 = vld [vmem:[%s1] sm:$0xf]
  %v45 = vld [vmem:[%s1 + $0x4] sm:$0xf]
  %v46 = vld [vmem:[%s1 + $0x8] sm:$0xf]
  %v47 = vld [vmem:[%s1 + $0xc] sm:$0xf]
  %v48 = vld [vmem:[%s1 + $0x10] sm:$0xf]
  %v49 = vld [vmem:[%s1 + $0x14] sm:$0xf]
  %v50 = vld [vmem:[%s1 + $0x18] sm:$0xf]
  %v51 = vld [vmem:[%s1 + $0x1c] sm:$0xf]
  %v81 = vunpack.c.l.b16 %v15
  %v82 = vunpack.c.l.b16 %v16
  %v83 = vunpack.c.l.b16 %v17
  %v84 = vunpack.c.l.b16 %v18
  %v85 = vunpack.c.l.b16 %v19
  %v86 = vunpack.c.l.b16 %v20
  %v87 = vunpack.c.l.b16 %v21
  %v88 = vunpack.c.l.b16 %v22
  %v89 = vunpack.c.l.b16 %v23
  %v90 = vunpack.c.l.b16 %v24
  %v91 = vunpack.c.l.b16 %v25
  %v92 = vunpack.c.l.b16 %v26
  %v93 = vunpack.c.l.b16 %v27
  %v94 = vunpack.c.l.b16 %v28
  %v95 = vunpack.c.l.b16 %v29
  %v96 = vunpack.c.l.b16 %v30
  %v97 = vunpack.c.l.b16 %v31
  %v98 = vunpack.c.l.b16 %v32
  %v99 = vunpack.c.l.b16 %v33
  %v100 = vunpack.c.l.b16 %v34
  %v101 = vunpack.c.l.b16 %v35
  %v102 = vunpack.c.l.b16 %v36
  %v103 = vunpack.c.l.b16 %v37
  %v104 = vunpack.c.l.b16 %v38
  %v105 = vunpack.c.l.b16 %v39
  %v106 = vunpack.c.l.b16 %v40
  %v107 = vunpack.c.l.b16 %v41
  %v108 = vunpack.c.l.b16 %v42
  %v109 = vunpack.c.l.b16 %v43
  %v110 = vpack.c.b16 %v82, %v81
  %v111 = vpack.c.b16 %v84, %v83
  %v112 = vpack.c.b16 %v86, %v85
  %v113 = vpack.c.b16 %v88, %v87
  %v114 = vpack.c.b16 %v90, %v89
  %v115 = vpack.c.b16 %v92, %v91
  %v116 = vpack.c.b16 %v94, %v93
  %v117 = vpack.c.b16 %v96, %v95
  %v118 = vpack.c.b16 %v98, %v97
  %v119 = vpack.c.b16 %v100, %v99
  %v120 = vpack.c.b16 %v102, %v101
  %v121 = vpack.c.b16 %v104, %v103
  %v122 = vpack.c.b16 %v106, %v105
  %v123 = vpack.c.b16 %v108, %v107
  %v124 = vpack.c.b16 %v109, %v109
  %v133 = vunpack.c.l.b16 %v44
  %v134 = vunpack.c.l.b16 %v45
  %v135 = vunpack.c.l.b16 %v46
  %v136 = vunpack.c.l.b16 %v47
  %v137 = vunpack.c.l.b16 %v48
  %v138 = vunpack.c.l.b16 %v49
  %v139 = vunpack.c.l.b16 %v50
  %v140 = vunpack.c.l.b16 %v51
  %v141 = vpack.c.b16 %v134, %v133
  %v142 = vpack.c.b16 %v136, %v135
  %v143 = vpack.c.b16 %v138, %v137
  %v144 = vpack.c.b16 %v140, %v139
  %vm149 = vcmask 523264
  %v151 = vsel %vm149, %v110, 0
  %v154 = vsel %vm149, %v111, 0
  %v157 = vsel %vm149, %v112, 0
  %v160 = vsel %vm149, %v113, 0
  %v163 = vsel %vm149, %v114, 0
  %v166 = vsel %vm149, %v115, 0
  %v169 = vsel %vm149, %v116, 0
  %v172 = vsel %vm149, %v117, 0
  %v175 = vsel %vm149, %v118, 0
  %v178 = vsel %vm149, %v119, 0
  %v181 = vsel %vm149, %v120, 0
  %v184 = vsel %vm149, %v121, 0
  %v187 = vsel %vm149, %v122, 0
  %v190 = vsel %vm149, %v123, 0
  %v193 = vsel %vm149, %v124, 0
  %195 = vmatprep.subr.bf16.mxu0 0
  %196 = vmatpush1.bf16.msra.mxu0 %v141
  %197 = vmatprep.subr.bf16.mxu0 0
  %198 = vmatpush1.bf16.msra.mxu0 %v142
  %199 = vmatprep.subr.bf16.mxu0 0
  %200 = vmatpush1.bf16.msra.mxu0 %v143
  %201 = vmatprep.subr.bf16.mxu0 0
  %202 = vmatpush1.bf16.msra.mxu0 %v144
  %203 = vmatprep.subr.bf16.mxu0 0
  %204 = vmatpush1.bf16.msra.mxu0 0
  %205 = vmatprep.subr.bf16.mxu0 0
  %206 = vmatpush1.bf16.msra.mxu0 0
  %207 = vmatprep.subr.bf16.mxu0 0
  %208 = vmatpush1.bf16.msra.mxu0 0
  %209 = vmatprep.subr.bf16.mxu0 0
  %210 = vmatpush1.bf16.msra.mxu0 0
  %211 = vmatprep.subr.bf16.mxu0 0
  %212 = vmatpush1.bf16.msra.mxu0 0
  %213 = vmatprep.subr.bf16.mxu0 0
  %214 = vmatpush1.bf16.msra.mxu0 0
  %215 = vmatprep.subr.bf16.mxu0 0
  %216 = vmatpush1.bf16.msra.mxu0 0
  %217 = vmatprep.subr.bf16.mxu0 0
  %218 = vmatpush1.bf16.msra.mxu0 0
  %219 = vmatprep.subr.bf16.mxu0 0
  %220 = vmatpush1.bf16.msra.mxu0 0
  %221 = vmatprep.subr.bf16.mxu0 0
  %222 = vmatpush1.bf16.msra.mxu0 0
  %223 = vmatprep.subr.bf16.mxu0 0
  %224 = vmatpush1.bf16.msra.mxu0 0
  %225 = vmatprep.subr.bf16.mxu0 0
  %226 = vmatpush1.bf16.msra.mxu0 0
  %227 = vmatprep.mubr.bf16.mxu0 0
  %228 = vmatmul.mubr.bf16.gmra.mrb[0].mxu0 %v151
  %v229 = vpop.f32.mrb[0].mxu0
  %v230 = vadd.f32 0.0, %v229
  %v231 = vpop.f32.mrb[0].mxu0
  %v232 = vpop.f32.mrb[0].mxu0
  %v233 = vadd.f32 0.0, %v232
  %v234 = vpop.f32.mrb[0].mxu0
  %235 = vmatprep.mubr.bf16.mxu0 0
  %236 = vmatmul.mubr.bf16.gmra.mrb[0].mxu0 %v154
  %v237 = vpop.f32.mrb[0].mxu0
  %v238 = vadd.f32 0.0, %v237
  %v239 = vpop.f32.mrb[0].mxu0
  %v240 = vpop.f32.mrb[0].mxu0
  %v241 = vadd.f32 0.0, %v240
  %v242 = vpop.f32.mrb[0].mxu0
  %243 = vmatprep.mubr.bf16.mxu0 0
  %244 = vmatmul.mubr.bf16.gmra.mrb[0].mxu0 %v157
  %v245 = vpop.f32.mrb[0].mxu0
  %v246 = vadd.f32 0.0, %v245
  %v247 = vpop.f32.mrb[0].mxu0
  %v248 = vpop.f32.mrb[0].mxu0
  %v249 = vadd.f32 0.0, %v248
  %v250 = vpop.f32.mrb[0].mxu0
  %251 = vmatprep.mubr.bf16.mxu0 0
  %252 = vmatmul.mubr.bf16.gmra.mrb[0].mxu0 %v160
  %v253 = vpop.f32.mrb[0].mxu0
  %v254 = vadd.f32 0.0, %v253
  %v255 = vpop.f32.mrb[0].mxu0
  %v256 = vpop.f32.mrb[0].mxu0
  %v257 = vadd.f32 0.0, %v256
  %v258 = vpop.f32.mrb[0].mxu0
  %259 = vmatprep.mubr.bf16.mxu0 0
  %260 = vmatmul.mubr.bf16.gmra.mrb[0].mxu0 %v163
  %v261 = vpop.f32.mrb[0].mxu0
  %v262 = vadd.f32 0.0, %v261
  %v263 = vpop.f32.mrb[0].mxu0
  %v264 = vpop.f32.mrb[0].mxu0
  %v265 = vadd.f32 0.0, %v264
  %v266 = vpop.f32.mrb[0].mxu0
  %267 = vmatprep.mubr.bf16.mxu0 0
  %268 = vmatmul.mubr.bf16.gmra.mrb[0].mxu0 %v166
  %v269 = vpop.f32.mrb[0].mxu0
  %v270 = vadd.f32 0.0, %v269
  %v271 = vpop.f32.mrb[0].mxu0
  %v272 = vpop.f32.mrb[0].mxu0
  %v273 = vadd.f32 0.0, %v272
  %v274 = vpop.f32.mrb[0].mxu0
  %275 = vmatprep.mubr.bf16.mxu0 0
  %276 = vmatmul.mubr.bf16.gmra.mrb[0].mxu0 %v169
  %v277 = vpop.f32.mrb[0].mxu0
  %v278 = vadd.f32 0.0, %v277
  %v279 = vpop.f32.mrb[0].mxu0
  %v280 = vpop.f32.mrb[0].mxu0
  %v281 = vadd.f32 0.0, %v280
  %v282 = vpop.f32.mrb[0].mxu0
  %283 = vmatprep.mubr.bf16.mxu0 0
  %284 = vmatmul.mubr.bf16.gmra.mrb[0].mxu0 %v172
  %v285 = vpop.f32.mrb[0].mxu0
  %v286 = vadd.f32 0.0, %v285
  %v287 = vpop.f32.mrb[0].mxu0
  %v288 = vpop.f32.mrb[0].mxu0
  %v289 = vadd.f32 0.0, %v288
  %v290 = vpop.f32.mrb[0].mxu0
  %291 = vmatprep.mubr.bf16.mxu0 0
  %292 = vmatmul.mubr.bf16.gmra.mrb[0].mxu0 %v175
  %v293 = vpop.f32.mrb[0].mxu0
  %v294 = vadd.f32 0.0, %v293
  %v295 = vpop.f32.mrb[0].mxu0
  %v296 = vpop.f32.mrb[0].mxu0
  %v297 = vadd.f32 0.0, %v296
  %v298 = vpop.f32.mrb[0].mxu0
  %299 = vmatprep.mubr.bf16.mxu0 0
  %300 = vmatmul.mubr.bf16.gmra.mrb[0].mxu0 %v178
  %v301 = vpop.f32.mrb[0].mxu0
  %v302 = vadd.f32 0.0, %v301
  %v303 = vpop.f32.mrb[0].mxu0
  %v304 = vpop.f32.mrb[0].mxu0
  %v305 = vadd.f32 0.0, %v304
  %v306 = vpop.f32.mrb[0].mxu0
  %307 = vmatprep.mubr.bf16.mxu0 0
  %308 = vmatmul.mubr.bf16.gmra.mrb[0].mxu0 %v181
  %v309 = vpop.f32.mrb[0].mxu0
  %v310 = vadd.f32 0.0, %v309
  %v311 = vpop.f32.mrb[0].mxu0
  %v312 = vpop.f32.mrb[0].mxu0
  %v313 = vadd.f32 0.0, %v312
  %v314 = vpop.f32.mrb[0].mxu0
  %315 = vmatprep.mubr.bf16.mxu0 0
  %316 = vmatmul.mubr.bf16.gmra.mrb[0].mxu0 %v184
  %v317 = vpop.f32.mrb[0].mxu0
  %v318 = vadd.f32 0.0, %v317
  %v319 = vpop.f32.mrb[0].mxu0
  %v320 = vpop.f32.mrb[0].mxu0
  %v321 = vadd.f32 0.0, %v320
  %v322 = vpop.f32.mrb[0].mxu0
  %323 = vmatprep.mubr.bf16.mxu0 0
  %324 = vmatmul.mubr.bf16.gmra.mrb[0].mxu0 %v187
  %v325 = vpop.f32.mrb[0].mxu0
  %v326 = vadd.f32 0.0, %v325
  %v327 = vpop.f32.mrb[0].mxu0
  %v328 = vpop.f32.mrb[0].mxu0
  %v329 = vadd.f32 0.0, %v328
  %v330 = vpop.f32.mrb[0].mxu0
  %331 = vmatprep.mubr.bf16.mxu0 0
  %332 = vmatmul.mubr.bf16.gmra.mrb[0].mxu0 %v190
  %v333 = vpop.f32.mrb[0].mxu0
  %v334 = vadd.f32 0.0, %v333
  %v335 = vpop.f32.mrb[0].mxu0
  %v336 = vpop.f32.mrb[0].mxu0
  %v337 = vadd.f32 0.0, %v336
  %v338 = vpop.f32.mrb[0].mxu0
  %339 = vmatprep.mubr.bf16.mxu0 0
  %340 = vmatmul.mubr.bf16.gmra.mrb[0].mxu0 %v193
  %v341 = vpop.f32.mrb[0].mxu0
  %v342 = vadd.f32 0.0, %v341
  %v343 = vpop.f32.mrb[0].mxu0
  %v344 = vpop.f32.mrb[0].mxu0
  %v345 = vpop.f32.mrb[0].mxu0
  %346 = vdwg.mxu0
  %vm347 = vcmask 261120
  %348 = vst.msk [vmem:[#allocation2] sm:$0xff] %vm347, %v230
  %349 = vst.msk [vmem:[#allocation2 + $0x8] sm:$0xff] %vm347, %v233
  %350 = vst.msk [vmem:[#allocation2 + $0x10] sm:$0xff] %vm347, %v238
  %351 = vst.msk [vmem:[#allocation2 + $0x18] sm:$0xff] %vm347, %v241
  %352 = vst.msk [vmem:[#allocation2 + $0x20] sm:$0xff] %vm347, %v246
  %353 = vst.msk [vmem:[#allocation2 + $0x28] sm:$0xff] %vm347, %v249
  %354 = vst.msk [vmem:[#allocation2 + $0x30] sm:$0xff] %vm347, %v254
  %355 = vst.msk [vmem:[#allocation2 + $0x38] sm:$0xff] %vm347, %v257
  %356 = vst.msk [vmem:[#allocation2 + $0x40] sm:$0xff] %vm347, %v262
  %357 = vst.msk [vmem:[#allocation2 + $0x48] sm:$0xff] %vm347, %v265
  %358 = vst.msk [vmem:[#allocation2 + $0x50] sm:$0xff] %vm347, %v270
  %359 = vst.msk [vmem:[#allocation2 + $0x58] sm:$0xff] %vm347, %v273
  %360 = vst.msk [vmem:[#allocation2 + $0x60] sm:$0xff] %vm347, %v278
  %361 = vst.msk [vmem:[#allocation2 + $0x68] sm:$0xff] %vm347, %v281
  %362 = vst.msk [vmem:[#allocation2 + $0x70] sm:$0xff] %vm347, %v286
  %363 = vst.msk [vmem:[#allocation2 + $0x78] sm:$0xff] %vm347, %v289
  %364 = vst.msk [vmem:[#allocation2 + $0x80] sm:$0xff] %vm347, %v294
  %365 = vst.msk [vmem:[#allocation2 + $0x88] sm:$0xff] %vm347, %v297
  %366 = vst.msk [vmem:[#allocation2 + $0x90] sm:$0xff] %vm347, %v302
  %367 = vst.msk [vmem:[#allocation2 + $0x98] sm:$0xff] %vm347, %v305
  %368 = vst.msk [vmem:[#allocation2 + $0xa0] sm:$0xff] %vm347, %v310
  %369 = vst.msk [vmem:[#allocation2 + $0xa8] sm:$0xff] %vm347, %v313
  %370 = vst.msk [vmem:[#allocation2 + $0xb0] sm:$0xff] %vm347, %v318
  %371 = vst.msk [vmem:[#allocation2 + $0xb8] sm:$0xff] %vm347, %v321
  %372 = vst.msk [vmem:[#allocation2 + $0xc0] sm:$0xff] %vm347, %v326
  %373 = vst.msk [vmem:[#allocation2 + $0xc8] sm:$0xff] %vm347, %v329
  %374 = vst.msk [vmem:[#allocation2 + $0xd0] sm:$0xff] %vm347, %v334
  %375 = vst.msk [vmem:[#allocation2 + $0xd8] sm:$0xff] %vm347, %v337
  %vm376 = vcmask 259072
  %377 = vst.msk [vmem:[#allocation2 + $0xe0] sm:$0x3f] %vm376, %v342
  %v378 = vld [vmem:[%s0] sm:$0xf]
  %v379 = vld [vmem:[%s0 + $0x4] sm:$0xf]
  %v380 = vld [vmem:[%s0 + $0x8] sm:$0xf]
  %v381 = vld [vmem:[%s0 + $0xc] sm:$0xf]
  %v382 = vld [vmem:[%s0 + $0x10] sm:$0xf]
  %v383 = vld [vmem:[%s0 + $0x14] sm:$0xf]
  %v384 = vld [vmem:[%s0 + $0x18] sm:$0xf]
  %v385 = vld [vmem:[%s0 + $0x1c] sm:$0xf]
  %v386 = vld [vmem:[%s0 + $0x20] sm:$0xf]
  %v387 = vld [vmem:[%s0 + $0x24] sm:$0xf]
  %v388 = vld [vmem:[%s0 + $0x28] sm:$0xf]
  %v389 = vld [vmem:[%s0 + $0x2c] sm:$0xf]
  %v390 = vld [vmem:[%s0 + $0x30] sm:$0xf]
  %v391 = vld [vmem:[%s0 + $0x34] sm:$0xf]
  %v392 = vld [vmem:[%s0 + $0x38] sm:$0xf]
  %v393 = vld [vmem:[%s0 + $0x3c] sm:$0xf]
  %v394 = vld [vmem:[%s0 + $0x40] sm:$0xf]
  %v395 = vld [vmem:[%s0 + $0x44] sm:$0xf]
  %v396 = vld [vmem:[%s0 + $0x48] sm:$0xf]
  %v397 = vld [vmem:[%s0 + $0x4c] sm:$0xf]
  %v398 = vld [vmem:[%s0 + $0x50] sm:$0xf]
  %v399 = vld [vmem:[%s0 + $0x54] sm:$0xf]
  %v400 = vld [vmem:[%s0 + $0x58] sm:$0xf]
  %v401 = vld [vmem:[%s0 + $0x5c] sm:$0xf]
  %v402 = vld [vmem:[%s0 + $0x60] sm:$0xf]
  %v403 = vld [vmem:[%s0 + $0x64] sm:$0xf]
  %v404 = vld [vmem:[%s0 + $0x68] sm:$0xf]
  %v405 = vld [vmem:[%s0 + $0x6c] sm:$0xf]
  %v406 = vld [vmem:[%s0 + $0x70] sm:$0xf]
  %v407 = vld [vmem:[%s1 + $0x20] sm:$0xf]
  %v408 = vld [vmem:[%s1 + $0x24] sm:$0xf]
  %v409 = vld [vmem:[%s1 + $0x28] sm:$0xf]
  %v410 = vld [vmem:[%s1 + $0x2c] sm:$0xf]
  %v411 = vld [vmem:[%s1 + $0x30] sm:$0xf]
  %v412 = vld [vmem:[%s1 + $0x34] sm:$0xf]
  %v413 = vld [vmem:[%s1 + $0x38] sm:$0xf]
  %v414 = vld [vmem:[%s1 + $0x3c] sm:$0xf]
  %v444 = vunpack.c.l.b16 %v378
  %v445 = vunpack.c.l.b16 %v379
  %v446 = vunpack.c.l.b16 %v380
  %v447 = vunpack.c.l.b16 %v381
  %v448 = vunpack.c.l.b16 %v382
  %v449 = vunpack.c.l.b16 %v383
  %v450 = vunpack.c.l.b16 %v384
  %v451 = vunpack.c.l.b16 %v385
  %v452 = vunpack.c.l.b16 %v386
  %v453 = vunpack.c.l.b16 %v387
  %v454 = vunpack.c.l.b16 %v388
  %v455 = vunpack.c.l.b16 %v389
  %v456 = vunpack.c.l.b16 %v390
  %v457 = vunpack.c.l.b16 %v391
  %v458 = vunpack.c.l.b16 %v392
  %v459 = vunpack.c.l.b16 %v393
  %v460 = vunpack.c.l.b16 %v394
  %v461 = vunpack.c.l.b16 %v395
  %v462 = vunpack.c.l.b16 %v396
  %v463 = vunpack.c.l.b16 %v397
  %v464 = vunpack.c.l.b16 %v398
  %v465 = vunpack.c.l.b16 %v399
  %v466 = vunpack.c.l.b16 %v400
  %v467 = vunpack.c.l.b16 %v401
  %v468 = vunpack.c.l.b16 %v402
  %v469 = vunpack.c.l.b16 %v403
  %v470 = vunpack.c.l.b16 %v404
  %v471 = vunpack.c.l.b16 %v405
  %v472 = vunpack.c.l.b16 %v406
  %v473 = vpack.c.b16 %v445, %v444
  %v474 = vpack.c.b16 %v447, %v446
  %v475 = vpack.c.b16 %v449, %v448
  %v476 = vpack.c.b16 %v451, %v450
  %v477 = vpack.c.b16 %v453, %v452
  %v478 = vpack.c.b16 %v455, %v454
  %v479 = vpack.c.b16 %v457, %v456
  %v480 = vpack.c.b16 %v459, %v458
  %v481 = vpack.c.b16 %v461, %v460
  %v482 = vpack.c.b16 %v463, %v462
  %v483 = vpack.c.b16 %v465, %v464
  %v484 = vpack.c.b16 %v467, %v466
  %v485 = vpack.c.b16 %v469, %v468
  %v486 = vpack.c.b16 %v471, %v470
  %v487 = vpack.c.b16 %v472, %v472
  %vm488 = vsmask.f32 7424
  %v490 = vshrl.u32 %v473, 16
  %v492 = vshll.u32 %v473, 16
  %v494 = vrot.slane %v492, 1
  %v495 = vor.u32 %v490, %v494
  %v497 = vshll.u32 %v474, 16
  %v499 = vrot.slane %v497, 1
  %v500 = vsel %vm488, %v495, %v499
  %v501 = vshrl.u32 %v474, 16
  %v503 = vor.u32 %v501, %v499
  %v505 = vshll.u32 %v475, 16
  %v507 = vrot.slane %v505, 1
  %v508 = vsel %vm488, %v503, %v507
  %v509 = vshrl.u32 %v475, 16
  %v511 = vor.u32 %v509, %v507
  %v513 = vshll.u32 %v476, 16
  %v515 = vrot.slane %v513, 1
  %v516 = vsel %vm488, %v511, %v515
  %v517 = vshrl.u32 %v476, 16
  %v519 = vor.u32 %v517, %v515
  %v521 = vshll.u32 %v477, 16
  %v523 = vrot.slane %v521, 1
  %v524 = vsel %vm488, %v519, %v523
  %v525 = vshrl.u32 %v477, 16
  %v527 = vor.u32 %v525, %v523
  %v529 = vshll.u32 %v478, 16
  %v531 = vrot.slane %v529, 1
  %v532 = vsel %vm488, %v527, %v531
  %v533 = vshrl.u32 %v478, 16
  %v535 = vor.u32 %v533, %v531
  %v537 = vshll.u32 %v479, 16
  %v539 = vrot.slane %v537, 1
  %v540 = vsel %vm488, %v535, %v539
  %v541 = vshrl.u32 %v479, 16
  %v543 = vor.u32 %v541, %v539
  %v545 = vshll.u32 %v480, 16
  %v547 = vrot.slane %v545, 1
  %v548 = vsel %vm488, %v543, %v547
  %v549 = vshrl.u32 %v480, 16
  %v551 = vor.u32 %v549, %v547
  %v553 = vshll.u32 %v481, 16
  %v555 = vrot.slane %v553, 1
  %v556 = vsel %vm488, %v551, %v555
  %v557 = vshrl.u32 %v481, 16
  %v559 = vor.u32 %v557, %v555
  %v561 = vshll.u32 %v482, 16
  %v563 = vrot.slane %v561, 1
  %v564 = vsel %vm488, %v559, %v563
  %v565 = vshrl.u32 %v482, 16
  %v567 = vor.u32 %v565, %v563
  %v569 = vshll.u32 %v483, 16
  %v571 = vrot.slane %v569, 1
  %v572 = vsel %vm488, %v567, %v571
  %v573 = vshrl.u32 %v483, 16
  %v575 = vor.u32 %v573, %v571
  %v577 = vshll.u32 %v484, 16
  %v579 = vrot.slane %v577, 1
  %v580 = vsel %vm488, %v575, %v579
  %v581 = vshrl.u32 %v484, 16
  %v583 = vor.u32 %v581, %v579
  %v585 = vshll.u32 %v485, 16
  %v587 = vrot.slane %v585, 1
  %v588 = vsel %vm488, %v583, %v587
  %v589 = vshrl.u32 %v485, 16
  %v591 = vor.u32 %v589, %v587
  %v593 = vshll.u32 %v486, 16
  %v595 = vrot.slane %v593, 1
  %v596 = vsel %vm488, %v591, %v595
  %v597 = vshrl.u32 %v486, 16
  %v599 = vor.u32 %v597, %v595
  %v601 = vshll.u32 %v487, 16
  %v603 = vrot.slane %v601, 1
  %v604 = vsel %vm488, %v599, %v603
  %v605 = vshrl.u32 %v487, 16
  %v607 = vor.u32 %v605, %v603
  %v616 = vunpack.c.l.b16 %v407
  %v617 = vunpack.c.l.b16 %v408
  %v618 = vunpack.c.l.b16 %v409
  %v619 = vunpack.c.l.b16 %v410
  %v620 = vunpack.c.l.b16 %v411
  %v621 = vunpack.c.l.b16 %v412
  %v622 = vunpack.c.l.b16 %v413
  %v623 = vunpack.c.l.b16 %v414
  %v624 = vpack.c.b16 %v617, %v616
  %v625 = vpack.c.b16 %v619, %v618
  %v626 = vpack.c.b16 %v621, %v620
  %v627 = vpack.c.b16 %v623, %v622
  %v633 = vsel %vm149, %v500, 0
  %v636 = vsel %vm149, %v508, 0
  %v639 = vsel %vm149, %v516, 0
  %v642 = vsel %vm149, %v524, 0
  %v645 = vsel %vm149, %v532, 0
  %v648 = vsel %vm149, %v540, 0
  %v651 = vsel %vm149, %v548, 0
  %v654 = vsel %vm149, %v556, 0
  %v657 = vsel %vm149, %v564, 0
  %v660 = vsel %vm149, %v572, 0
  %v663 = vsel %vm149, %v580, 0
  %v666 = vsel %vm149, %v588, 0
  %v669 = vsel %vm149, %v596, 0
  %v672 = vsel %vm149, %v604, 0
  %v675 = vsel %vm149, %v607, 0
  %677 = vmatprep.subr.bf16.mxu0 0
  %678 = vmatpush1.bf16.msra.mxu0 %v624
  %679 = vmatprep.subr.bf16.mxu0 0
  %680 = vmatpush1.bf16.msra.mxu0 %v625
  %681 = vmatprep.subr.bf16.mxu0 0
  %682 = vmatpush1.bf16.msra.mxu0 %v626
  %683 = vmatprep.subr.bf16.mxu0 0
  %684 = vmatpush1.bf16.msra.mxu0 %v627
  %685 = vmatprep.subr.bf16.mxu0 0
  %686 = vmatpush1.bf16.msra.mxu0 0
  %687 = vmatprep.subr.bf16.mxu0 0
  %688 = vmatpush1.bf16.msra.mxu0 0
  %689 = vmatprep.subr.bf16.mxu0 0
  %690 = vmatpush1.bf16.msra.mxu0 0
  %691 = vmatprep.subr.bf16.mxu0 0
  %692 = vmatpush1.bf16.msra.mxu0 0
  %693 = vmatprep.subr.bf16.mxu0 0
  %694 = vmatpush1.bf16.msra.mxu0 0
  %695 = vmatprep.subr.bf16.mxu0 0
  %696 = vmatpush1.bf16.msra.mxu0 0
  %697 = vmatprep.subr.bf16.mxu0 0
  %698 = vmatpush1.bf16.msra.mxu0 0
  %699 = vmatprep.subr.bf16.mxu0 0
  %700 = vmatpush1.bf16.msra.mxu0 0
  %701 = vmatprep.subr.bf16.mxu0 0
  %702 = vmatpush1.bf16.msra.mxu0 0
  %703 = vmatprep.subr.bf16.mxu0 0
  %704 = vmatpush1.bf16.msra.mxu0 0
  %705 = vmatprep.subr.bf16.mxu0 0
  %706 = vmatpush1.bf16.msra.mxu0 0
  %707 = vmatprep.subr.bf16.mxu0 0
  %708 = vmatpush1.bf16.msra.mxu0 0
  %709 = vmatprep.mubr.bf16.mxu0 0
  %710 = vmatmul.mubr.bf16.gmra.mrb[0].mxu0 %v633
  %v711 = vpop.f32.mrb[0].mxu0
  %v712 = vadd.f32 0.0, %v711
  %v713 = vpop.f32.mrb[0].mxu0
  %v714 = vpop.f32.mrb[0].mxu0
  %v715 = vadd.f32 0.0, %v714
  %v716 = vpop.f32.mrb[0].mxu0
  %717 = vmatprep.mubr.bf16.mxu0 0
  %718 = vmatmul.mubr.bf16.gmra.mrb[0].mxu0 %v636
  %v719 = vpop.f32.mrb[0].mxu0
  %v720 = vadd.f32 0.0, %v719
  %v721 = vpop.f32.mrb[0].mxu0
  %v722 = vpop.f32.mrb[0].mxu0
  %v723 = vadd.f32 0.0, %v722
  %v724 = vpop.f32.mrb[0].mxu0
  %725 = vmatprep.mubr.bf16.mxu0 0
  %726 = vmatmul.mubr.bf16.gmra.mrb[0].mxu0 %v639
  %v727 = vpop.f32.mrb[0].mxu0
  %v728 = vadd.f32 0.0, %v727
  %v729 = vpop.f32.mrb[0].mxu0
  %v730 = vpop.f32.mrb[0].mxu0
  %v731 = vadd.f32 0.0, %v730
  %v732 = vpop.f32.mrb[0].mxu0
  %733 = vmatprep.mubr.bf16.mxu0 0
  %734 = vmatmul.mubr.bf16.gmra.mrb[0].mxu0 %v642
  %v735 = vpop.f32.mrb[0].mxu0
  %v736 = vadd.f32 0.0, %v735
  %v737 = vpop.f32.mrb[0].mxu0
  %v738 = vpop.f32.mrb[0].mxu0
  %v739 = vadd.f32 0.0, %v738
  %v740 = vpop.f32.mrb[0].mxu0
  %741 = vmatprep.mubr.bf16.mxu0 0
  %742 = vmatmul.mubr.bf16.gmra.mrb[0].mxu0 %v645
  %v743 = vpop.f32.mrb[0].mxu0
  %v744 = vadd.f32 0.0, %v743
  %v745 = vpop.f32.mrb[0].mxu0
  %v746 = vpop.f32.mrb[0].mxu0
  %v747 = vadd.f32 0.0, %v746
  %v748 = vpop.f32.mrb[0].mxu0
  %749 = vmatprep.mubr.bf16.mxu0 0
  %750 = vmatmul.mubr.bf16.gmra.mrb[0].mxu0 %v648
  %v751 = vpop.f32.mrb[0].mxu0
  %v752 = vadd.f32 0.0, %v751
  %v753 = vpop.f32.mrb[0].mxu0
  %v754 = vpop.f32.mrb[0].mxu0
  %v755 = vadd.f32 0.0, %v754
  %v756 = vpop.f32.mrb[0].mxu0
  %757 = vmatprep.mubr.bf16.mxu0 0
  %758 = vmatmul.mubr.bf16.gmra.mrb[0].mxu0 %v651
  %v759 = vpop.f32.mrb[0].mxu0
  %v760 = vadd.f32 0.0, %v759
  %v761 = vpop.f32.mrb[0].mxu0
  %v762 = vpop.f32.mrb[0].mxu0
  %v763 = vadd.f32 0.0, %v762
  %v764 = vpop.f32.mrb[0].mxu0
  %765 = vmatprep.mubr.bf16.mxu0 0
  %766 = vmatmul.mubr.bf16.gmra.mrb[0].mxu0 %v654
  %v767 = vpop.f32.mrb[0].mxu0
  %v768 = vadd.f32 0.0, %v767
  %v769 = vpop.f32.mrb[0].mxu0
  %v770 = vpop.f32.mrb[0].mxu0
  %v771 = vadd.f32 0.0, %v770
  %v772 = vpop.f32.mrb[0].mxu0
  %773 = vmatprep.mubr.bf16.mxu0 0
  %774 = vmatmul.mubr.bf16.gmra.mrb[0].mxu0 %v657
  %v775 = vpop.f32.mrb[0].mxu0
  %v776 = vadd.f32 0.0, %v775
  %v777 = vpop.f32.mrb[0].mxu0
  %v778 = vpop.f32.mrb[0].mxu0
  %v779 = vadd.f32 0.0, %v778
  %v780 = vpop.f32.mrb[0].mxu0
  %781 = vmatprep.mubr.bf16.mxu0 0
  %782 = vmatmul.mubr.bf16.gmra.mrb[0].mxu0 %v660
  %v783 = vpop.f32.mrb[0].mxu0
  %v784 = vadd.f32 0.0, %v783
  %v785 = vpop.f32.mrb[0].mxu0
  %v786 = vpop.f32.mrb[0].mxu0
  %v787 = vadd.f32 0.0, %v786
  %v788 = vpop.f32.mrb[0].mxu0
  %789 = vmatprep.mubr.bf16.mxu0 0
  %790 = vmatmul.mubr.bf16.gmra.mrb[0].mxu0 %v663
  %v791 = vpop.f32.mrb[0].mxu0
  %v792 = vadd.f32 0.0, %v791
  %v793 = vpop.f32.mrb[0].mxu0
  %v794 = vpop.f32.mrb[0].mxu0
  %v795 = vadd.f32 0.0, %v794
  %v796 = vpop.f32.mrb[0].mxu0
  %797 = vmatprep.mubr.bf16.mxu0 0
  %798 = vmatmul.mubr.bf16.gmra.mrb[0].mxu0 %v666
  %v799 = vpop.f32.mrb[0].mxu0
  %v800 = vadd.f32 0.0, %v799
  %v801 = vpop.f32.mrb[0].mxu0
  %v802 = vpop.f32.mrb[0].mxu0
  %v803 = vadd.f32 0.0, %v802
  %v804 = vpop.f32.mrb[0].mxu0
  %805 = vmatprep.mubr.bf16.mxu0 0
  %806 = vmatmul.mubr.bf16.gmra.mrb[0].mxu0 %v669
  %v807 = vpop.f32.mrb[0].mxu0
  %v808 = vadd.f32 0.0, %v807
  %v809 = vpop.f32.mrb[0].mxu0
  %v810 = vpop.f32.mrb[0].mxu0
  %v811 = vadd.f32 0.0, %v810
  %v812 = vpop.f32.mrb[0].mxu0
  %813 = vmatprep.mubr.bf16.mxu0 0
  %814 = vmatmul.mubr.bf16.gmra.mrb[0].mxu0 %v672
  %v815 = vpop.f32.mrb[0].mxu0
  %v816 = vadd.f32 0.0, %v815
  %v817 = vpop.f32.mrb[0].mxu0
  %v818 = vpop.f32.mrb[0].mxu0
  %v819 = vadd.f32 0.0, %v818
  %v820 = vpop.f32.mrb[0].mxu0
  %821 = vmatprep.mubr.bf16.mxu0 0
  %822 = vmatmul.mubr.bf16.gmra.mrb[0].mxu0 %v675
  %v823 = vpop.f32.mrb[0].mxu0
  %v824 = vadd.f32 0.0, %v823
  %v825 = vpop.f32.mrb[0].mxu0
  %v826 = vpop.f32.mrb[0].mxu0
  %v827 = vpop.f32.mrb[0].mxu0
  %828 = vdwg.mxu0
  %v829 = vld [vmem:[#allocation2] sm:$0xff]
  %v830 = vld [vmem:[#allocation2 + $0x8] sm:$0xff]
  %v831 = vld [vmem:[#allocation2 + $0x10] sm:$0xff]
  %v832 = vld [vmem:[#allocation2 + $0x18] sm:$0xff]
  %v833 = vld [vmem:[#allocation2 + $0x20] sm:$0xff]
  %v834 = vld [vmem:[#allocation2 + $0x28] sm:$0xff]
  %v835 = vld [vmem:[#allocation2 + $0x30] sm:$0xff]
  %v836 = vld [vmem:[#allocation2 + $0x38] sm:$0xff]
  %v837 = vld [vmem:[#allocation2 + $0x40] sm:$0xff]
  %v838 = vld [vmem:[#allocation2 + $0x48] sm:$0xff]
  %v839 = vld [vmem:[#allocation2 + $0x50] sm:$0xff]
  %v840 = vld [vmem:[#allocation2 + $0x58] sm:$0xff]
  %v841 = vld [vmem:[#allocation2 + $0x60] sm:$0xff]
  %v842 = vld [vmem:[#allocation2 + $0x68] sm:$0xff]
  %v843 = vld [vmem:[#allocation2 + $0x70] sm:$0xff]
  %v844 = vld [vmem:[#allocation2 + $0x78] sm:$0xff]
  %v845 = vld [vmem:[#allocation2 + $0x80] sm:$0xff]
  %v846 = vld [vmem:[#allocation2 + $0x88] sm:$0xff]
  %v847 = vld [vmem:[#allocation2 + $0x90] sm:$0xff]
  %v848 = vld [vmem:[#allocation2 + $0x98] sm:$0xff]
  %v849 = vld [vmem:[#allocation2 + $0xa0] sm:$0xff]
  %v850 = vld [vmem:[#allocation2 + $0xa8] sm:$0xff]
  %v851 = vld [vmem:[#allocation2 + $0xb0] sm:$0xff]
  %v852 = vld [vmem:[#allocation2 + $0xb8] sm:$0xff]
  %v853 = vld [vmem:[#allocation2 + $0xc0] sm:$0xff]
  %v854 = vld [vmem:[#allocation2 + $0xc8] sm:$0xff]
  %v855 = vld [vmem:[#allocation2 + $0xd0] sm:$0xff]
  %v856 = vld [vmem:[#allocation2 + $0xd8] sm:$0xff]
  %v857 = vld [vmem:[#allocation2 + $0xe0] sm:$0x3f]
  %v858 = vadd.f32 %v829, %v712
  %v859 = vadd.f32 %v830, %v715
  %v860 = vadd.f32 %v831, %v720
  %v861 = vadd.f32 %v832, %v723
  %v862 = vadd.f32 %v833, %v728
  %v863 = vadd.f32 %v834, %v731
  %v864 = vadd.f32 %v835, %v736
  %v865 = vadd.f32 %v836, %v739
  %v866 = vadd.f32 %v837, %v744
  %v867 = vadd.f32 %v838, %v747
  %v868 = vadd.f32 %v839, %v752
  %v869 = vadd.f32 %v840, %v755
  %v870 = vadd.f32 %v841, %v760
  %v871 = vadd.f32 %v842, %v763
  %v872 = vadd.f32 %v843, %v768
  %v873 = vadd.f32 %v844, %v771
  %v874 = vadd.f32 %v845, %v776
  %v875 = vadd.f32 %v846, %v779
  %v876 = vadd.f32 %v847, %v784
  %v877 = vadd.f32 %v848, %v787
  %v878 = vadd.f32 %v849, %v792
  %v879 = vadd.f32 %v850, %v795
  %v880 = vadd.f32 %v851, %v800
  %v881 = vadd.f32 %v852, %v803
  %v882 = vadd.f32 %v853, %v808
  %v883 = vadd.f32 %v854, %v811
  %v884 = vadd.f32 %v855, %v816
  %v885 = vadd.f32 %v856, %v819
  %v886 = vadd.f32 %v857, %v824
  %887 = vst.msk [vmem:[#allocation2] sm:$0xff] %vm347, %v858
  %888 = vst.msk [vmem:[#allocation2 + $0x8] sm:$0xff] %vm347, %v859
  %889 = vst.msk [vmem:[#allocation2 + $0x10] sm:$0xff] %vm347, %v860
  %890 = vst.msk [vmem:[#allocation2 + $0x18] sm:$0xff] %vm347, %v861
  %891 = vst.msk [vmem:[#allocation2 + $0x20] sm:$0xff] %vm347, %v862
  %892 = vst.msk [vmem:[#allocation2 + $0x28] sm:$0xff] %vm347, %v863
  %893 = vst.msk [vmem:[#allocation2 + $0x30] sm:$0xff] %vm347, %v864
  %894 = vst.msk [vmem:[#allocation2 + $0x38] sm:$0xff] %vm347, %v865
  %895 = vst.msk [vmem:[#allocation2 + $0x40] sm:$0xff] %vm347, %v866
  %896 = vst.msk [vmem:[#allocation2 + $0x48] sm:$0xff] %vm347, %v867
  %897 = vst.msk [vmem:[#allocation2 + $0x50] sm:$0xff] %vm347, %v868
  %898 = vst.msk [vmem:[#allocation2 + $0x58] sm:$0xff] %vm347, %v869
  %899 = vst.msk [vmem:[#allocation2 + $0x60] sm:$0xff] %vm347, %v870
  %900 = vst.msk [vmem:[#allocation2 + $0x68] sm:$0xff] %vm347, %v871
  %901 = vst.msk [vmem:[#allocation2 + $0x70] sm:$0xff] %vm347, %v872
  %902 = vst.msk [vmem:[#allocation2 + $0x78] sm:$0xff] %vm347, %v873
  %903 = vst.msk [vmem:[#allocation2 + $0x80] sm:$0xff] %vm347, %v874
  %904 = vst.msk [vmem:[#allocation2 + $0x88] sm:$0xff] %vm347, %v875
  %905 = vst.msk [vmem:[#allocation2 + $0x90] sm:$0xff] %vm347, %v876
  %906 = vst.msk [vmem:[#allocation2 + $0x98] sm:$0xff] %vm347, %v877
  %907 = vst.msk [vmem:[#allocation2 + $0xa0] sm:$0xff] %vm347, %v878
  %908 = vst.msk [vmem:[#allocation2 + $0xa8] sm:$0xff] %vm347, %v879
  %909 = vst.msk [vmem:[#allocation2 + $0xb0] sm:$0xff] %vm347, %v880
  %910 = vst.msk [vmem:[#allocation2 + $0xb8] sm:$0xff] %vm347, %v881
  %911 = vst.msk [vmem:[#allocation2 + $0xc0] sm:$0xff] %vm347, %v882
  %912 = vst.msk [vmem:[#allocation2 + $0xc8] sm:$0xff] %vm347, %v883
  %913 = vst.msk [vmem:[#allocation2 + $0xd0] sm:$0xff] %vm347, %v884
  %914 = vst.msk [vmem:[#allocation2 + $0xd8] sm:$0xff] %vm347, %v885
  %915 = vst.msk [vmem:[#allocation2 + $0xe0] sm:$0x3f] %vm376, %v886
  %v916 = vld [vmem:[%s0 + $0x4] sm:$0xe]
  %v917 = vld [vmem:[%s0 + $0x8] sm:$0xf]
  %v918 = vld [vmem:[%s0 + $0xc] sm:$0xf]
  %v919 = vld [vmem:[%s0 + $0x10] sm:$0xf]
  %v920 = vld [vmem:[%s0 + $0x14] sm:$0xf]
  %v921 = vld [vmem:[%s0 + $0x18] sm:$0xf]
  %v922 = vld [vmem:[%s0 + $0x1c] sm:$0xf]
  %v923 = vld [vmem:[%s0 + $0x20] sm:$0xf]
  %v924 = vld [vmem:[%s0 + $0x24] sm:$0xf]
  %v925 = vld [vmem:[%s0 + $0x28] sm:$0xf]
  %v926 = vld [vmem:[%s0 + $0x2c] sm:$0xf]
  %v927 = vld [vmem:[%s0 + $0x30] sm:$0xf]
  %v928 = vld [vmem:[%s0 + $0x34] sm:$0xf]
  %v929 = vld [vmem:[%s0 + $0x38] sm:$0xf]
  %v930 = vld [vmem:[%s0 + $0x3c] sm:$0xf]
  %v931 = vld [vmem:[%s0 + $0x40] sm:$0xf]
  %v932 = vld [vmem:[%s0 + $0x44] sm:$0xf]
  %v933 = vld [vmem:[%s0 + $0x48] sm:$0xf]
  %v934 = vld [vmem:[%s0 + $0x4c] sm:$0xf]
  %v935 = vld [vmem:[%s0 + $0x50] sm:$0xf]
  %v936 = vld [vmem:[%s0 + $0x54] sm:$0xf]
  %v937 = vld [vmem:[%s0 + $0x58] sm:$0xf]
  %v938 = vld [vmem:[%s0 + $0x5c] sm:$0xf]
  %v939 = vld [vmem:[%s0 + $0x60] sm:$0xf]
  %v940 = vld [vmem:[%s0 + $0x64] sm:$0xf]
  %v941 = vld [vmem:[%s0 + $0x68] sm:$0xf]
  %v942 = vld [vmem:[%s0 + $0x6c] sm:$0xf]
  %v943 = vld [vmem:[%s0 + $0x70] sm:$0xf]
  %v944 = vld [vmem:[%s0 + $0x74] sm:$0xf]
  %v945 = vld [vmem:[%s0 + $0x78] sm:$0x1]
  %v946 = vld [vmem:[%s1 + $0x40] sm:$0xf]
  %v947 = vld [vmem:[%s1 + $0x44] sm:$0xf]
  %v948 = vld [vmem:[%s1 + $0x48] sm:$0xf]
  %v949 = vld [vmem:[%s1 + $0x4c] sm:$0xf]
  %v950 = vld [vmem:[%s1 + $0x50] sm:$0xf]
  %v951 = vld [vmem:[%s1 + $0x54] sm:$0xf]
  %v952 = vld [vmem:[%s1 + $0x58] sm:$0xf]
  %v953 = vld [vmem:[%s1 + $0x5c] sm:$0xf]
  %v984 = vunpack.c.l.b16 %v916
  %v985 = vunpack.c.l.b16 %v917
  %v986 = vunpack.c.l.b16 %v918
  %v987 = vunpack.c.l.b16 %v919
  %v988 = vunpack.c.l.b16 %v920
  %v989 = vunpack.c.l.b16 %v921
  %v990 = vunpack.c.l.b16 %v922
  %v991 = vunpack.c.l.b16 %v923
  %v992 = vunpack.c.l.b16 %v924
  %v993 = vunpack.c.l.b16 %v925
  %v994 = vunpack.c.l.b16 %v926
  %v995 = vunpack.c.l.b16 %v927
  %v996 = vunpack.c.l.b16 %v928
  %v997 = vunpack.c.l.b16 %v929
  %v998 = vunpack.c.l.b16 %v930
  %v999 = vunpack.c.l.b16 %v931
  %v1000 = vunpack.c.l.b16 %v932
  %v1001 = vunpack.c.l.b16 %v933
  %v1002 = vunpack.c.l.b16 %v934
  %v1003 = vunpack.c.l.b16 %v935
  %v1004 = vunpack.c.l.b16 %v936
  %v1005 = vunpack.c.l.b16 %v937
  %v1006 = vunpack.c.l.b16 %v938
  %v1007 = vunpack.c.l.b16 %v939
  %v1008 = vunpack.c.l.b16 %v940
  %v1009 = vunpack.c.l.b16 %v941
  %v1010 = vunpack.c.l.b16 %v942
  %v1011 = vunpack.c.l.b16 %v943
  %v1012 = vunpack.c.l.b16 %v944
  %v1013 = vunpack.c.l.b16 %v945
  %v1014 = vpack.c.b16 %v985, %v984
  %v1015 = vpack.c.b16 %v987, %v986
  %v1016 = vpack.c.b16 %v989, %v988
  %v1017 = vpack.c.b16 %v991, %v990
  %v1018 = vpack.c.b16 %v993, %v992
  %v1019 = vpack.c.b16 %v995, %v994
  %v1020 = vpack.c.b16 %v997, %v996
  %v1021 = vpack.c.b16 %v999, %v998
  %v1022 = vpack.c.b16 %v1001, %v1000
  %v1023 = vpack.c.b16 %v1003, %v1002
  %v1024 = vpack.c.b16 %v1005, %v1004
  %v1025 = vpack.c.b16 %v1007, %v1006
  %v1026 = vpack.c.b16 %v1009, %v1008
  %v1027 = vpack.c.b16 %v1011, %v1010
  %v1028 = vpack.c.b16 %v1013, %v1012
  %vm1029 = vsmask.f32 6400
  %v1031 = vshrl.u32 %v1014, 16
  %v1033 = vrot.slane %v1031, 1
  %v1034 = vshll.u32 %v1014, 16
  %v1036 = vrot.slane %v1034, 2
  %v1037 = vor.u32 %v1033, %v1036
  %v1039 = vshrl.u32 %v1015, 16
  %v1041 = vrot.slane %v1039, 1
  %v1042 = vshll.u32 %v1015, 16
  %v1044 = vrot.slane %v1042, 2
  %v1045 = vor.u32 %v1041, %v1044
  %v1046 = vsel %vm1029, %v1037, %v1045
  %v1048 = vshrl.u32 %v1016, 16
  %v1050 = vrot.slane %v1048, 1
  %v1051 = vshll.u32 %v1016, 16
  %v1053 = vrot.slane %v1051, 2
  %v1054 = vor.u32 %v1050, %v1053
  %v1055 = vsel %vm1029, %v1045, %v1054
  %v1057 = vshrl.u32 %v1017, 16
  %v1059 = vrot.slane %v1057, 1
  %v1060 = vshll.u32 %v1017, 16
  %v1062 = vrot.slane %v1060, 2
  %v1063 = vor.u32 %v1059, %v1062
  %v1064 = vsel %vm1029, %v1054, %v1063
  %v1066 = vshrl.u32 %v1018, 16
  %v1068 = vrot.slane %v1066, 1
  %v1069 = vshll.u32 %v1018, 16
  %v1071 = vrot.slane %v1069, 2
  %v1072 = vor.u32 %v1068, %v1071
  %v1073 = vsel %vm1029, %v1063, %v1072
  %v1075 = vshrl.u32 %v1019, 16
  %v1077 = vrot.slane %v1075, 1
  %v1078 = vshll.u32 %v1019, 16
  %v1080 = vrot.slane %v1078, 2
  %v1081 = vor.u32 %v1077, %v1080
  %v1082 = vsel %vm1029, %v1072, %v1081
  %v1084 = vshrl.u32 %v1020, 16
  %v1086 = vrot.slane %v1084, 1
  %v1087 = vshll.u32 %v1020, 16
  %v1089 = vrot.slane %v1087, 2
  %v1090 = vor.u32 %v1086, %v1089
  %v1091 = vsel %vm1029, %v1081, %v1090
  %v1093 = vshrl.u32 %v1021, 16
  %v1095 = vrot.slane %v1093, 1
  %v1096 = vshll.u32 %v1021, 16
  %v1098 = vrot.slane %v1096, 2
  %v1099 = vor.u32 %v1095, %v1098
  %v1100 = vsel %vm1029, %v1090, %v1099
  %v1102 = vshrl.u32 %v1022, 16
  %v1104 = vrot.slane %v1102, 1
  %v1105 = vshll.u32 %v1022, 16
  %v1107 = vrot.slane %v1105, 2
  %v1108 = vor.u32 %v1104, %v1107
  %v1109 = vsel %vm1029, %v1099, %v1108
  %v1111 = vshrl.u32 %v1023, 16
  %v1113 = vrot.slane %v1111, 1
  %v1114 = vshll.u32 %v1023, 16
  %v1116 = vrot.slane %v1114, 2
  %v1117 = vor.u32 %v1113, %v1116
  %v1118 = vsel %vm1029, %v1108, %v1117
  %v1120 = vshrl.u32 %v1024, 16
  %v1122 = vrot.slane %v1120, 1
  %v1123 = vshll.u32 %v1024, 16
  %v1125 = vrot.slane %v1123, 2
  %v1126 = vor.u32 %v1122, %v1125
  %v1127 = vsel %vm1029, %v1117, %v1126
  %v1129 = vshrl.u32 %v1025, 16
  %v1131 = vrot.slane %v1129, 1
  %v1132 = vshll.u32 %v1025, 16
  %v1134 = vrot.slane %v1132, 2
  %v1135 = vor.u32 %v1131, %v1134
  %v1136 = vsel %vm1029, %v1126, %v1135
  %v1138 = vshrl.u32 %v1026, 16
  %v1140 = vrot.slane %v1138, 1
  %v1141 = vshll.u32 %v1026, 16
  %v1143 = vrot.slane %v1141, 2
  %v1144 = vor.u32 %v1140, %v1143
  %v1145 = vsel %vm1029, %v1135, %v1144
  %v1147 = vshrl.u32 %v1027, 16
  %v1149 = vrot.slane %v1147, 1
  %v1150 = vshll.u32 %v1027, 16
  %v1152 = vrot.slane %v1150, 2
  %v1153 = vor.u32 %v1149, %v1152
  %v1154 = vsel %vm1029, %v1144, %v1153
  %v1156 = vshrl.u32 %v1028, 16
  %v1158 = vrot.slane %v1156, 1
  %v1159 = vshll.u32 %v1028, 16
  %v1161 = vrot.slane %v1159, 2
  %v1162 = vor.u32 %v1158, %v1161
  %v1163 = vsel %vm1029, %v1153, %v1162
  %v1172 = vunpack.c.l.b16 %v946
  %v1173 = vunpack.c.l.b16 %v947
  %v1174 = vunpack.c.l.b16 %v948
  %v1175 = vunpack.c.l.b16 %v949
  %v1176 = vunpack.c.l.b16 %v950
  %v1177 = vunpack.c.l.b16 %v951
  %v1178 = vunpack.c.l.b16 %v952
  %v1179 = vunpack.c.l.b16 %v953
  %v1180 = vpack.c.b16 %v1173, %v1172
  %v1181 = vpack.c.b16 %v1175, %v1174
  %v1182 = vpack.c.b16 %v1177, %v1176
  %v1183 = vpack.c.b16 %v1179, %v1178
  %v1189 = vsel %vm149, %v1046, 0
  %v1192 = vsel %vm149, %v1055, 0
  %v1195 = vsel %vm149, %v1064, 0
  %v1198 = vsel %vm149, %v1073, 0
  %v1201 = vsel %vm149, %v1082, 0
  %v1204 = vsel %vm149, %v1091, 0
  %v1207 = vsel %vm149, %v1100, 0
  %v1210 = vsel %vm149, %v1109, 0
  %v1213 = vsel %vm149, %v1118, 0
  %v1216 = vsel %vm149, %v1127, 0
  %v1219 = vsel %vm149, %v1136, 0
  %v1222 = vsel %vm149, %v1145, 0
  %v1225 = vsel %vm149, %v1154, 0
  %v1228 = vsel %vm149, %v1163, 0
  %v1231 = vsel %vm149, %v1162, 0
  %1233 = vmatprep.subr.bf16.mxu0 0
  %1234 = vmatpush1.bf16.msra.mxu0 %v1180
  %1235 = vmatprep.subr.bf16.mxu0 0
  %1236 = vmatpush1.bf16.msra.mxu0 %v1181
  %1237 = vmatprep.subr.bf16.mxu0 0
  %1238 = vmatpush1.bf16.msra.mxu0 %v1182
  %1239 = vmatprep.subr.bf16.mxu0 0
  %1240 = vmatpush1.bf16.msra.mxu0 %v1183
  %1241 = vmatprep.subr.bf16.mxu0 0
  %1242 = vmatpush1.bf16.msra.mxu0 0
  %1243 = vmatprep.subr.bf16.mxu0 0
  %1244 = vmatpush1.bf16.msra.mxu0 0
  %1245 = vmatprep.subr.bf16.mxu0 0
  %1246 = vmatpush1.bf16.msra.mxu0 0
  %1247 = vmatprep.subr.bf16.mxu0 0
  %1248 = vmatpush1.bf16.msra.mxu0 0
  %1249 = vmatprep.subr.bf16.mxu0 0
  %1250 = vmatpush1.bf16.msra.mxu0 0
  %1251 = vmatprep.subr.bf16.mxu0 0
  %1252 = vmatpush1.bf16.msra.mxu0 0
  %1253 = vmatprep.subr.bf16.mxu0 0
  %1254 = vmatpush1.bf16.msra.mxu0 0
  %1255 = vmatprep.subr.bf16.mxu0 0
  %1256 = vmatpush1.bf16.msra.mxu0 0
  %1257 = vmatprep.subr.bf16.mxu0 0
  %1258 = vmatpush1.bf16.msra.mxu0 0
  %1259 = vmatprep.subr.bf16.mxu0 0
  %1260 = vmatpush1.bf16.msra.mxu0 0
  %1261 = vmatprep.subr.bf16.mxu0 0
  %1262 = vmatpush1.bf16.msra.mxu0 0
  %1263 = vmatprep.subr.bf16.mxu0 0
  %1264 = vmatpush1.bf16.msra.mxu0 0
  %1265 = vmatprep.mubr.bf16.mxu0 0
  %1266 = vmatmul.mubr.bf16.gmra.mrb[0].mxu0 %v1189
  %v1267 = vpop.f32.mrb[0].mxu0
  %v1268 = vadd.f32 0.0, %v1267
  %v1269 = vpop.f32.mrb[0].mxu0
  %v1270 = vpop.f32.mrb[0].mxu0
  %v1271 = vadd.f32 0.0, %v1270
  %v1272 = vpop.f32.mrb[0].mxu0
  %1273 = vmatprep.mubr.bf16.mxu0 0
  %1274 = vmatmul.mubr.bf16.gmra.mrb[0].mxu0 %v1192
  %v1275 = vpop.f32.mrb[0].mxu0
  %v1276 = vadd.f32 0.0, %v1275
  %v1277 = vpop.f32.mrb[0].mxu0
  %v1278 = vpop.f32.mrb[0].mxu0
  %v1279 = vadd.f32 0.0, %v1278
  %v1280 = vpop.f32.mrb[0].mxu0
  %1281 = vmatprep.mubr.bf16.mxu0 0
  %1282 = vmatmul.mubr.bf16.gmra.mrb[0].mxu0 %v1195
  %v1283 = vpop.f32.mrb[0].mxu0
  %v1284 = vadd.f32 0.0, %v1283
  %v1285 = vpop.f32.mrb[0].mxu0
  %v1286 = vpop.f32.mrb[0].mxu0
  %v1287 = vadd.f32 0.0, %v1286
  %v1288 = vpop.f32.mrb[0].mxu0
  %1289 = vmatprep.mubr.bf16.mxu0 0
  %1290 = vmatmul.mubr.bf16.gmra.mrb[0].mxu0 %v1198
  %v1291 = vpop.f32.mrb[0].mxu0
  %v1292 = vadd.f32 0.0, %v1291
  %v1293 = vpop.f32.mrb[0].mxu0
  %v1294 = vpop.f32.mrb[0].mxu0
  %v1295 = vadd.f32 0.0, %v1294
  %v1296 = vpop.f32.mrb[0].mxu0
  %1297 = vmatprep.mubr.bf16.mxu0 0
  %1298 = vmatmul.mubr.bf16.gmra.mrb[0].mxu0 %v1201
  %v1299 = vpop.f32.mrb[0].mxu0
  %v1300 = vadd.f32 0.0, %v1299
  %v1301 = vpop.f32.mrb[0].mxu0
  %v1302 = vpop.f32.mrb[0].mxu0
  %v1303 = vadd.f32 0.0, %v1302
  %v1304 = vpop.f32.mrb[0].mxu0
  %1305 = vmatprep.mubr.bf16.mxu0 0
  %1306 = vmatmul.mubr.bf16.gmra.mrb[0].mxu0 %v1204
  %v1307 = vpop.f32.mrb[0].mxu0
  %v1308 = vadd.f32 0.0, %v1307
  %v1309 = vpop.f32.mrb[0].mxu0
  %v1310 = vpop.f32.mrb[0].mxu0
  %v1311 = vadd.f32 0.0, %v1310
  %v1312 = vpop.f32.mrb[0].mxu0
  %1313 = vmatprep.mubr.bf16.mxu0 0
  %1314 = vmatmul.mubr.bf16.gmra.mrb[0].mxu0 %v1207
  %v1315 = vpop.f32.mrb[0].mxu0
  %v1316 = vadd.f32 0.0, %v1315
  %v1317 = vpop.f32.mrb[0].mxu0
  %v1318 = vpop.f32.mrb[0].mxu0
  %v1319 = vadd.f32 0.0, %v1318
  %v1320 = vpop.f32.mrb[0].mxu0
  %1321 = vmatprep.mubr.bf16.mxu0 0
  %1322 = vmatmul.mubr.bf16.gmra.mrb[0].mxu0 %v1210
  %v1323 = vpop.f32.mrb[0].mxu0
  %v1324 = vadd.f32 0.0, %v1323
  %v1325 = vpop.f32.mrb[0].mxu0
  %v1326 = vpop.f32.mrb[0].mxu0
  %v1327 = vadd.f32 0.0, %v1326
  %v1328 = vpop.f32.mrb[0].mxu0
  %1329 = vmatprep.mubr.bf16.mxu0 0
  %1330 = vmatmul.mubr.bf16.gmra.mrb[0].mxu0 %v1213
  %v1331 = vpop.f32.mrb[0].mxu0
  %v1332 = vadd.f32 0.0, %v1331
  %v1333 = vpop.f32.mrb[0].mxu0
  %v1334 = vpop.f32.mrb[0].mxu0
  %v1335 = vadd.f32 0.0, %v1334
  %v1336 = vpop.f32.mrb[0].mxu0
  %1337 = vmatprep.mubr.bf16.mxu0 0
  %1338 = vmatmul.mubr.bf16.gmra.mrb[0].mxu0 %v1216
  %v1339 = vpop.f32.mrb[0].mxu0
  %v1340 = vadd.f32 0.0, %v1339
  %v1341 = vpop.f32.mrb[0].mxu0
  %v1342 = vpop.f32.mrb[0].mxu0
  %v1343 = vadd.f32 0.0, %v1342
  %v1344 = vpop.f32.mrb[0].mxu0
  %1345 = vmatprep.mubr.bf16.mxu0 0
  %1346 = vmatmul.mubr.bf16.gmra.mrb[0].mxu0 %v1219
  %v1347 = vpop.f32.mrb[0].mxu0
  %v1348 = vadd.f32 0.0, %v1347
  %v1349 = vpop.f32.mrb[0].mxu0
  %v1350 = vpop.f32.mrb[0].mxu0
  %v1351 = vadd.f32 0.0, %v1350
  %v1352 = vpop.f32.mrb[0].mxu0
  %1353 = vmatprep.mubr.bf16.mxu0 0
  %1354 = vmatmul.mubr.bf16.gmra.mrb[0].mxu0 %v1222
  %v1355 = vpop.f32.mrb[0].mxu0
  %v1356 = vadd.f32 0.0, %v1355
  %v1357 = vpop.f32.mrb[0].mxu0
  %v1358 = vpop.f32.mrb[0].mxu0
  %v1359 = vadd.f32 0.0, %v1358
  %v1360 = vpop.f32.mrb[0].mxu0
  %1361 = vmatprep.mubr.bf16.mxu0 0
  %1362 = vmatmul.mubr.bf16.gmra.mrb[0].mxu0 %v1225
  %v1363 = vpop.f32.mrb[0].mxu0
  %v1364 = vadd.f32 0.0, %v1363
  %v1365 = vpop.f32.mrb[0].mxu0
  %v1366 = vpop.f32.mrb[0].mxu0
  %v1367 = vadd.f32 0.0, %v1366
  %v1368 = vpop.f32.mrb[0].mxu0
  %1369 = vmatprep.mubr.bf16.mxu0 0
  %1370 = vmatmul.mubr.bf16.gmra.mrb[0].mxu0 %v1228
  %v1371 = vpop.f32.mrb[0].mxu0
  %v1372 = vadd.f32 0.0, %v1371
  %v1373 = vpop.f32.mrb[0].mxu0
  %v1374 = vpop.f32.mrb[0].mxu0
  %v1375 = vadd.f32 0.0, %v1374
  %v1376 = vpop.f32.mrb[0].mxu0
  %1377 = vmatprep.mubr.bf16.mxu0 0
  %1378 = vmatmul.mubr.bf16.gmra.mrb[0].mxu0 %v1231
  %v1379 = vpop.f32.mrb[0].mxu0
  %v1380 = vadd.f32 0.0, %v1379
  %v1381 = vpop.f32.mrb[0].mxu0
  %v1382 = vpop.f32.mrb[0].mxu0
  %v1383 = vpop.f32.mrb[0].mxu0
  %1384 = vdwg.mxu0
  %v1385 = vld [vmem:[#allocation2] sm:$0xff]
  %v1386 = vld [vmem:[#allocation2 + $0x8] sm:$0xff]
  %v1387 = vld [vmem:[#allocation2 + $0x10] sm:$0xff]
  %v1388 = vld [vmem:[#allocation2 + $0x18] sm:$0xff]
  %v1389 = vld [vmem:[#allocation2 + $0x20] sm:$0xff]
  %v1390 = vld [vmem:[#allocation2 + $0x28] sm:$0xff]
  %v1391 = vld [vmem:[#allocation2 + $0x30] sm:$0xff]
  %v1392 = vld [vmem:[#allocation2 + $0x38] sm:$0xff]
  %v1393 = vld [vmem:[#allocation2 + $0x40] sm:$0xff]
  %v1394 = vld [vmem:[#allocation2 + $0x48] sm:$0xff]
  %v1395 = vld [vmem:[#allocation2 + $0x50] sm:$0xff]
  %v1396 = vld [vmem:[#allocation2 + $0x58] sm:$0xff]
  %v1397 = vld [vmem:[#allocation2 + $0x60] sm:$0xff]
  %v1398 = vld [vmem:[#allocation2 + $0x68] sm:$0xff]
  %v1399 = vld [vmem:[#allocation2 + $0x70] sm:$0xff]
  %v1400 = vld [vmem:[#allocation2 + $0x78] sm:$0xff]
  %v1401 = vld [vmem:[#allocation2 + $0x80] sm:$0xff]
  %v1402 = vld [vmem:[#allocation2 + $0x88] sm:$0xff]
  %v1403 = vld [vmem:[#allocation2 + $0x90] sm:$0xff]
  %v1404 = vld [vmem:[#allocation2 + $0x98] sm:$0xff]
  %v1405 = vld [vmem:[#allocation2 + $0xa0] sm:$0xff]
  %v1406 = vld [vmem:[#allocation2 + $0xa8] sm:$0xff]
  %v1407 = vld [vmem:[#allocation2 + $0xb0] sm:$0xff]
  %v1408 = vld [vmem:[#allocation2 + $0xb8] sm:$0xff]
  %v1409 = vld [vmem:[#allocation2 + $0xc0] sm:$0xff]
  %v1410 = vld [vmem:[#allocation2 + $0xc8] sm:$0xff]
  %v1411 = vld [vmem:[#allocation2 + $0xd0] sm:$0xff]
  %v1412 = vld [vmem:[#allocation2 + $0xd8] sm:$0xff]
  %v1413 = vld [vmem:[#allocation2 + $0xe0] sm:$0x3f]
  %v1414 = vadd.f32 %v1385, %v1268
  %v1415 = vadd.f32 %v1386, %v1271
  %v1416 = vadd.f32 %v1387, %v1276
  %v1417 = vadd.f32 %v1388, %v1279
  %v1418 = vadd.f32 %v1389, %v1284
  %v1419 = vadd.f32 %v1390, %v1287
  %v1420 = vadd.f32 %v1391, %v1292
  %v1421 = vadd.f32 %v1392, %v1295
  %v1422 = vadd.f32 %v1393, %v1300
  %v1423 = vadd.f32 %v1394, %v1303
  %v1424 = vadd.f32 %v1395, %v1308
  %v1425 = vadd.f32 %v1396, %v1311
  %v1426 = vadd.f32 %v1397, %v1316
  %v1427 = vadd.f32 %v1398, %v1319
  %v1428 = vadd.f32 %v1399, %v1324
  %v1429 = vadd.f32 %v1400, %v1327
  %v1430 = vadd.f32 %v1401, %v1332
  %v1431 = vadd.f32 %v1402, %v1335
  %v1432 = vadd.f32 %v1403, %v1340
  %v1433 = vadd.f32 %v1404, %v1343
  %v1434 = vadd.f32 %v1405, %v1348
  %v1435 = vadd.f32 %v1406, %v1351
  %v1436 = vadd.f32 %v1407, %v1356
  %v1437 = vadd.f32 %v1408, %v1359
  %v1438 = vadd.f32 %v1409, %v1364
  %v1439 = vadd.f32 %v1410, %v1367
  %v1440 = vadd.f32 %v1411, %v1372
  %v1441 = vadd.f32 %v1412, %v1375
  %v1442 = vadd.f32 %v1413, %v1380
  %1443 = vst.msk [vmem:[#allocation2] sm:$0xff] %vm347, %v1414
  %1444 = vst.msk [vmem:[#allocation2 + $0x8] sm:$0xff] %vm347, %v1415
  %1445 = vst.msk [vmem:[#allocation2 + $0x10] sm:$0xff] %vm347, %v1416
  %1446 = vst.msk [vmem:[#allocation2 + $0x18] sm:$0xff] %vm347, %v1417
  %1447 = vst.msk [vmem:[#allocation2 + $0x20] sm:$0xff] %vm347, %v1418
  %1448 = vst.msk [vmem:[#allocation2 + $0x28] sm:$0xff] %vm347, %v1419
  %1449 = vst.msk [vmem:[#allocation2 + $0x30] sm:$0xff] %vm347, %v1420
  %1450 = vst.msk [vmem:[#allocation2 + $0x38] sm:$0xff] %vm347, %v1421
  %1451 = vst.msk [vmem:[#allocation2 + $0x40] sm:$0xff] %vm347, %v1422
  %1452 = vst.msk [vmem:[#allocation2 + $0x48] sm:$0xff] %vm347, %v1423
  %1453 = vst.msk [vmem:[#allocation2 + $0x50] sm:$0xff] %vm347, %v1424
  %1454 = vst.msk [vmem:[#allocation2 + $0x58] sm:$0xff] %vm347, %v1425
  %1455 = vst.msk [vmem:[#allocation2 + $0x60] sm:$0xff] %vm347, %v1426
  %1456 = vst.msk [vmem:[#allocation2 + $0x68] sm:$0xff] %vm347, %v1427
  %1457 = vst.msk [vmem:[#allocation2 + $0x70] sm:$0xff] %vm347, %v1428
  %1458 = vst.msk [vmem:[#allocation2 + $0x78] sm:$0xff] %vm347, %v1429
  %1459 = vst.msk [vmem:[#allocation2 + $0x80] sm:$0xff] %vm347, %v1430
  %1460 = vst.msk [vmem:[#allocation2 + $0x88] sm:$0xff] %vm347, %v1431
  %1461 = vst.msk [vmem:[#allocation2 + $0x90] sm:$0xff] %vm347, %v1432
  %1462 = vst.msk [vmem:[#allocation2 + $0x98] sm:$0xff] %vm347, %v1433
  %1463 = vst.msk [vmem:[#allocation2 + $0xa0] sm:$0xff] %vm347, %v1434
  %1464 = vst.msk [vmem:[#allocation2 + $0xa8] sm:$0xff] %vm347, %v1435
  %1465 = vst.msk [vmem:[#allocation2 + $0xb0] sm:$0xff] %vm347, %v1436
  %1466 = vst.msk [vmem:[#allocation2 + $0xb8] sm:$0xff] %vm347, %v1437
  %1467 = vst.msk [vmem:[#allocation2 + $0xc0] sm:$0xff] %vm347, %v1438
  %1468 = vst.msk [vmem:[#allocation2 + $0xc8] sm:$0xff] %vm347, %v1439
  %1469 = vst.msk [vmem:[#allocation2 + $0xd0] sm:$0xff] %vm347, %v1440
  %1470 = vst.msk [vmem:[#allocation2 + $0xd8] sm:$0xff] %vm347, %v1441
  %1471 = vst.msk [vmem:[#allocation2 + $0xe0] sm:$0x3f] %vm376, %v1442
  %v1472 = vld [vmem:[%s0 + $0x4] sm:$0xc]
  %v1473 = vld [vmem:[%s0 + $0x8] sm:$0xf]
  %v1474 = vld [vmem:[%s0 + $0xc] sm:$0xf]
  %v1475 = vld [vmem:[%s0 + $0x10] sm:$0xf]
  %v1476 = vld [vmem:[%s0 + $0x14] sm:$0xf]
  %v1477 = vld [vmem:[%s0 + $0x18] sm:$0xf]
  %v1478 = vld [vmem:[%s0 + $0x1c] sm:$0xf]
  %v1479 = vld [vmem:[%s0 + $0x20] sm:$0xf]
  %v1480 = vld [vmem:[%s0 + $0x24] sm:$0xf]
  %v1481 = vld [vmem:[%s0 + $0x28] sm:$0xf]
  %v1482 = vld [vmem:[%s0 + $0x2c] sm:$0xf]
  %v1483 = vld [vmem:[%s0 + $0x30] sm:$0xf]
  %v1484 = vld [vmem:[%s0 + $0x34] sm:$0xf]
  %v1485 = vld [vmem:[%s0 + $0x38] sm:$0xf]
  %v1486 = vld [vmem:[%s0 + $0x3c] sm:$0xf]
  %v1487 = vld [vmem:[%s0 + $0x40] sm:$0xf]
  %v1488 = vld [vmem:[%s0 + $0x44] sm:$0xf]
  %v1489 = vld [vmem:[%s0 + $0x48] sm:$0xf]
  %v1490 = vld [vmem:[%s0 + $0x4c] sm:$0xf]
  %v1491 = vld [vmem:[%s0 + $0x50] sm:$0xf]
  %v1492 = vld [vmem:[%s0 + $0x54] sm:$0xf]
  %v1493 = vld [vmem:[%s0 + $0x58] sm:$0xf]
  %v1494 = vld [vmem:[%s0 + $0x5c] sm:$0xf]
  %v1495 = vld [vmem:[%s0 + $0x60] sm:$0xf]
  %v1496 = vld [vmem:[%s0 + $0x64] sm:$0xf]
  %v1497 = vld [vmem:[%s0 + $0x68] sm:$0xf]
  %v1498 = vld [vmem:[%s0 + $0x6c] sm:$0xf]
  %v1499 = vld [vmem:[%s0 + $0x70] sm:$0xf]
  %v1500 = vld [vmem:[%s0 + $0x74] sm:$0xf]
  %v1501 = vld [vmem:[%s0 + $0x78] sm:$0x1]
  %v1502 = vld [vmem:[%s1 + $0x60] sm:$0xf]
  %v1503 = vld [vmem:[%s1 + $0x64] sm:$0xf]
  %v1504 = vld [vmem:[%s1 + $0x68] sm:$0xf]
  %v1505 = vld [vmem:[%s1 + $0x6c] sm:$0xf]
  %v1506 = vld [vmem:[%s1 + $0x70] sm:$0xf]
  %v1507 = vld [vmem:[%s1 + $0x74] sm:$0xf]
  %v1508 = vld [vmem:[%s1 + $0x78] sm:$0xf]
  %v1509 = vld [vmem:[%s1 + $0x7c] sm:$0xf]
  %v1540 = vunpack.c.l.b16 %v1472
  %v1541 = vunpack.c.l.b16 %v1473
  %v1542 = vunpack.c.l.b16 %v1474
  %v1543 = vunpack.c.l.b16 %v1475
  %v1544 = vunpack.c.l.b16 %v1476
  %v1545 = vunpack.c.l.b16 %v1477
  %v1546 = vunpack.c.l.b16 %v1478
  %v1547 = vunpack.c.l.b16 %v1479
  %v1548 = vunpack.c.l.b16 %v1480
  %v1549 = vunpack.c.l.b16 %v1481
  %v1550 = vunpack.c.l.b16 %v1482
  %v1551 = vunpack.c.l.b16 %v1483
  %v1552 = vunpack.c.l.b16 %v1484
  %v1553 = vunpack.c.l.b16 %v1485
  %v1554 = vunpack.c.l.b16 %v1486
  %v1555 = vunpack.c.l.b16 %v1487
  %v1556 = vunpack.c.l.b16 %v1488
  %v1557 = vunpack.c.l.b16 %v1489
  %v1558 = vunpack.c.l.b16 %v1490
  %v1559 = vunpack.c.l.b16 %v1491
  %v1560 = vunpack.c.l.b16 %v1492
  %v1561 = vunpack.c.l.b16 %v1493
  %v1562 = vunpack.c.l.b16 %v1494
  %v1563 = vunpack.c.l.b16 %v1495
  %v1564 = vunpack.c.l.b16 %v1496
  %v1565 = vunpack.c.l.b16 %v1497
  %v1566 = vunpack.c.l.b16 %v1498
  %v1567 = vunpack.c.l.b16 %v1499
  %v1568 = vunpack.c.l.b16 %v1500
  %v1569 = vunpack.c.l.b16 %v1501
  %v1570 = vpack.c.b16 %v1541, %v1540
  %v1571 = vpack.c.b16 %v1543, %v1542
  %v1572 = vpack.c.b16 %v1545, %v1544
  %v1573 = vpack.c.b16 %v1547, %v1546
  %v1574 = vpack.c.b16 %v1549, %v1548
  %v1575 = vpack.c.b16 %v1551, %v1550
  %v1576 = vpack.c.b16 %v1553, %v1552
  %v1577 = vpack.c.b16 %v1555, %v1554
  %v1578 = vpack.c.b16 %v1557, %v1556
  %v1579 = vpack.c.b16 %v1559, %v1558
  %v1580 = vpack.c.b16 %v1561, %v1560
  %v1581 = vpack.c.b16 %v1563, %v1562
  %v1582 = vpack.c.b16 %v1565, %v1564
  %v1583 = vpack.c.b16 %v1567, %v1566
  %v1584 = vpack.c.b16 %v1569, %v1568
  %vm1585 = vcmask 1045504
  %v1586 = vrot.slane %v1570, 2
  %v1587 = vrot.slane %v1571, 2
  %v1588 = vsel %vm1585, %v1586, %v1587
  %v1589 = vrot.slane %v1572, 2
  %v1590 = vsel %vm1585, %v1587, %v1589
  %v1591 = vrot.slane %v1573, 2
  %v1592 = vsel %vm1585, %v1589, %v1591
  %v1593 = vrot.slane %v1574, 2
  %v1594 = vsel %vm1585, %v1591, %v1593
  %v1595 = vrot.slane %v1575, 2
  %v1596 = vsel %vm1585, %v1593, %v1595
  %v1597 = vrot.slane %v1576, 2
  %v1598 = vsel %vm1585, %v1595, %v1597
  %v1599 = vrot.slane %v1577, 2
  %v1600 = vsel %vm1585, %v1597, %v1599
  %v1601 = vrot.slane %v1578, 2
  %v1602 = vsel %vm1585, %v1599, %v1601
  %v1603 = vrot.slane %v1579, 2
  %v1604 = vsel %vm1585, %v1601, %v1603
  %v1605 = vrot.slane %v1580, 2
  %v1606 = vsel %vm1585, %v1603, %v1605
  %v1607 = vrot.slane %v1581, 2
  %v1608 = vsel %vm1585, %v1605, %v1607
  %v1609 = vrot.slane %v1582, 2
  %v1610 = vsel %vm1585, %v1607, %v1609
  %v1611 = vrot.slane %v1583, 2
  %v1612 = vsel %vm1585, %v1609, %v1611
  %v1613 = vrot.slane %v1584, 2
  %v1614 = vsel %vm1585, %v1611, %v1613
  %v1623 = vunpack.c.l.b16 %v1502
  %v1624 = vunpack.c.l.b16 %v1503
  %v1625 = vunpack.c.l.b16 %v1504
  %v1626 = vunpack.c.l.b16 %v1505
  %v1627 = vunpack.c.l.b16 %v1506
  %v1628 = vunpack.c.l.b16 %v1507
  %v1629 = vunpack.c.l.b16 %v1508
  %v1630 = vunpack.c.l.b16 %v1509
  %v1631 = vpack.c.b16 %v1624, %v1623
  %v1632 = vpack.c.b16 %v1626, %v1625
  %v1633 = vpack.c.b16 %v1628, %v1627
  %v1634 = vpack.c.b16 %v1630, %v1629
  %v1640 = vsel %vm149, %v1588, 0
  %v1643 = vsel %vm149, %v1590, 0
  %v1646 = vsel %vm149, %v1592, 0
  %v1649 = vsel %vm149, %v1594, 0
  %v1652 = vsel %vm149, %v1596, 0
  %v1655 = vsel %vm149, %v1598, 0
  %v1658 = vsel %vm149, %v1600, 0
  %v1661 = vsel %vm149, %v1602, 0
  %v1664 = vsel %vm149, %v1604, 0
  %v1667 = vsel %vm149, %v1606, 0
  %v1670 = vsel %vm149, %v1608, 0
  %v1673 = vsel %vm149, %v1610, 0
  %v1676 = vsel %vm149, %v1612, 0
  %v1679 = vsel %vm149, %v1614, 0
  %v1682 = vsel %vm149, %v1613, 0
  %1684 = vmatprep.subr.bf16.mxu0 0
  %1685 = vmatpush1.bf16.msra.mxu0 %v1631
  %1686 = vmatprep.subr.bf16.mxu0 0
  %1687 = vmatpush1.bf16.msra.mxu0 %v1632
  %1688 = vmatprep.subr.bf16.mxu0 0
  %1689 = vmatpush1.bf16.msra.mxu0 %v1633
  %1690 = vmatprep.subr.bf16.mxu0 0
  %1691 = vmatpush1.bf16.msra.mxu0 %v1634
  %1692 = vmatprep.subr.bf16.mxu0 0
  %1693 = vmatpush1.bf16.msra.mxu0 0
  %1694 = vmatprep.subr.bf16.mxu0 0
  %1695 = vmatpush1.bf16.msra.mxu0 0
  %1696 = vmatprep.subr.bf16.mxu0 0
  %1697 = vmatpush1.bf16.msra.mxu0 0
  %1698 = vmatprep.subr.bf16.mxu0 0
  %1699 = vmatpush1.bf16.msra.mxu0 0
  %1700 = vmatprep.subr.bf16.mxu0 0
  %1701 = vmatpush1.bf16.msra.mxu0 0
  %1702 = vmatprep.subr.bf16.mxu0 0
  %1703 = vmatpush1.bf16.msra.mxu0 0
  %1704 = vmatprep.subr.bf16.mxu0 0
  %1705 = vmatpush1.bf16.msra.mxu0 0
  %1706 = vmatprep.subr.bf16.mxu0 0
  %1707 = vmatpush1.bf16.msra.mxu0 0
  %1708 = vmatprep.subr.bf16.mxu0 0
  %1709 = vmatpush1.bf16.msra.mxu0 0
  %1710 = vmatprep.subr.bf16.mxu0 0
  %1711 = vmatpush1.bf16.msra.mxu0 0
  %1712 = vmatprep.subr.bf16.mxu0 0
  %1713 = vmatpush1.bf16.msra.mxu0 0
  %1714 = vmatprep.subr.bf16.mxu0 0
  %1715 = vmatpush1.bf16.msra.mxu0 0
  %1716 = vmatprep.mubr.bf16.mxu0 0
  %1717 = vmatmul.mubr.bf16.gmra.mrb[0].mxu0 %v1640
  %v1718 = vpop.f32.mrb[0].mxu0
  %v1719 = vadd.f32 0.0, %v1718
  %v1720 = vpop.f32.mrb[0].mxu0
  %v1721 = vpop.f32.mrb[0].mxu0
  %v1722 = vadd.f32 0.0, %v1721
  %v1723 = vpop.f32.mrb[0].mxu0
  %1724 = vmatprep.mubr.bf16.mxu0 0
  %1725 = vmatmul.mubr.bf16.gmra.mrb[0].mxu0 %v1643
  %v1726 = vpop.f32.mrb[0].mxu0
  %v1727 = vadd.f32 0.0, %v1726
  %v1728 = vpop.f32.mrb[0].mxu0
  %v1729 = vpop.f32.mrb[0].mxu0
  %v1730 = vadd.f32 0.0, %v1729
  %v1731 = vpop.f32.mrb[0].mxu0
  %1732 = vmatprep.mubr.bf16.mxu0 0
  %1733 = vmatmul.mubr.bf16.gmra.mrb[0].mxu0 %v1646
  %v1734 = vpop.f32.mrb[0].mxu0
  %v1735 = vadd.f32 0.0, %v1734
  %v1736 = vpop.f32.mrb[0].mxu0
  %v1737 = vpop.f32.mrb[0].mxu0
  %v1738 = vadd.f32 0.0, %v1737
  %v1739 = vpop.f32.mrb[0].mxu0
  %1740 = vmatprep.mubr.bf16.mxu0 0
  %1741 = vmatmul.mubr.bf16.gmra.mrb[0].mxu0 %v1649
  %v1742 = vpop.f32.mrb[0].mxu0
  %v1743 = vadd.f32 0.0, %v1742
  %v1744 = vpop.f32.mrb[0].mxu0
  %v1745 = vpop.f32.mrb[0].mxu0
  %v1746 = vadd.f32 0.0, %v1745
  %v1747 = vpop.f32.mrb[0].mxu0
  %1748 = vmatprep.mubr.bf16.mxu0 0
  %1749 = vmatmul.mubr.bf16.gmra.mrb[0].mxu0 %v1652
  %v1750 = vpop.f32.mrb[0].mxu0
  %v1751 = vadd.f32 0.0, %v1750
  %v1752 = vpop.f32.mrb[0].mxu0
  %v1753 = vpop.f32.mrb[0].mxu0
  %v1754 = vadd.f32 0.0, %v1753
  %v1755 = vpop.f32.mrb[0].mxu0
  %1756 = vmatprep.mubr.bf16.mxu0 0
  %1757 = vmatmul.mubr.bf16.gmra.mrb[0].mxu0 %v1655
  %v1758 = vpop.f32.mrb[0].mxu0
  %v1759 = vadd.f32 0.0, %v1758
  %v1760 = vpop.f32.mrb[0].mxu0
  %v1761 = vpop.f32.mrb[0].mxu0
  %v1762 = vadd.f32 0.0, %v1761
  %v1763 = vpop.f32.mrb[0].mxu0
  %1764 = vmatprep.mubr.bf16.mxu0 0
  %1765 = vmatmul.mubr.bf16.gmra.mrb[0].mxu0 %v1658
  %v1766 = vpop.f32.mrb[0].mxu0
  %v1767 = vadd.f32 0.0, %v1766
  %v1768 = vpop.f32.mrb[0].mxu0
  %v1769 = vpop.f32.mrb[0].mxu0
  %v1770 = vadd.f32 0.0, %v1769
  %v1771 = vpop.f32.mrb[0].mxu0
  %1772 = vmatprep.mubr.bf16.mxu0 0
  %1773 = vmatmul.mubr.bf16.gmra.mrb[0].mxu0 %v1661
  %v1774 = vpop.f32.mrb[0].mxu0
  %v1775 = vadd.f32 0.0, %v1774
  %v1776 = vpop.f32.mrb[0].mxu0
  %v1777 = vpop.f32.mrb[0].mxu0
  %v1778 = vadd.f32 0.0, %v1777
  %v1779 = vpop.f32.mrb[0].mxu0
  %1780 = vmatprep.mubr.bf16.mxu0 0
  %1781 = vmatmul.mubr.bf16.gmra.mrb[0].mxu0 %v1664
  %v1782 = vpop.f32.mrb[0].mxu0
  %v1783 = vadd.f32 0.0, %v1782
  %v1784 = vpop.f32.mrb[0].mxu0
  %v1785 = vpop.f32.mrb[0].mxu0
  %v1786 = vadd.f32 0.0, %v1785
  %v1787 = vpop.f32.mrb[0].mxu0
  %1788 = vmatprep.mubr.bf16.mxu0 0
  %1789 = vmatmul.mubr.bf16.gmra.mrb[0].mxu0 %v1667
  %v1790 = vpop.f32.mrb[0].mxu0
  %v1791 = vadd.f32 0.0, %v1790
  %v1792 = vpop.f32.mrb[0].mxu0
  %v1793 = vpop.f32.mrb[0].mxu0
  %v1794 = vadd.f32 0.0, %v1793
  %v1795 = vpop.f32.mrb[0].mxu0
  %1796 = vmatprep.mubr.bf16.mxu0 0
  %1797 = vmatmul.mubr.bf16.gmra.mrb[0].mxu0 %v1670
  %v1798 = vpop.f32.mrb[0].mxu0
  %v1799 = vadd.f32 0.0, %v1798
  %v1800 = vpop.f32.mrb[0].mxu0
  %v1801 = vpop.f32.mrb[0].mxu0
  %v1802 = vadd.f32 0.0, %v1801
  %v1803 = vpop.f32.mrb[0].mxu0
  %1804 = vmatprep.mubr.bf16.mxu0 0
  %1805 = vmatmul.mubr.bf16.gmra.mrb[0].mxu0 %v1673
  %v1806 = vpop.f32.mrb[0].mxu0
  %v1807 = vadd.f32 0.0, %v1806
  %v1808 = vpop.f32.mrb[0].mxu0
  %v1809 = vpop.f32.mrb[0].mxu0
  %v1810 = vadd.f32 0.0, %v1809
  %v1811 = vpop.f32.mrb[0].mxu0
  %1812 = vmatprep.mubr.bf16.mxu0 0
  %1813 = vmatmul.mubr.bf16.gmra.mrb[0].mxu0 %v1676
  %v1814 = vpop.f32.mrb[0].mxu0
  %v1815 = vadd.f32 0.0, %v1814
  %v1816 = vpop.f32.mrb[0].mxu0
  %v1817 = vpop.f32.mrb[0].mxu0
  %v1818 = vadd.f32 0.0, %v1817
  %v1819 = vpop.f32.mrb[0].mxu0
  %1820 = vmatprep.mubr.bf16.mxu0 0
  %1821 = vmatmul.mubr.bf16.gmra.mrb[0].mxu0 %v1679
  %v1822 = vpop.f32.mrb[0].mxu0
  %v1823 = vadd.f32 0.0, %v1822
  %v1824 = vpop.f32.mrb[0].mxu0
  %v1825 = vpop.f32.mrb[0].mxu0
  %v1826 = vadd.f32 0.0, %v1825
  %v1827 = vpop.f32.mrb[0].mxu0
  %1828 = vmatprep.mubr.bf16.mxu0 0
  %1829 = vmatmul.mubr.bf16.gmra.mrb[0].mxu0 %v1682
  %v1830 = vpop.f32.mrb[0].mxu0
  %v1831 = vadd.f32 0.0, %v1830
  %v1832 = vpop.f32.mrb[0].mxu0
  %v1833 = vpop.f32.mrb[0].mxu0
  %v1834 = vpop.f32.mrb[0].mxu0
  %1835 = vdwg.mxu0
  %v1836 = vld [vmem:[#allocation2] sm:$0xff]
  %v1837 = vld [vmem:[#allocation2 + $0x8] sm:$0xff]
  %v1838 = vld [vmem:[#allocation2 + $0x10] sm:$0xff]
  %v1839 = vld [vmem:[#allocation2 + $0x18] sm:$0xff]
  %v1840 = vld [vmem:[#allocation2 + $0x20] sm:$0xff]
  %v1841 = vld [vmem:[#allocation2 + $0x28] sm:$0xff]
  %v1842 = vld [vmem:[#allocation2 + $0x30] sm:$0xff]
  %v1843 = vld [vmem:[#allocation2 + $0x38] sm:$0xff]
  %v1844 = vld [vmem:[#allocation2 + $0x40] sm:$0xff]
  %v1845 = vld [vmem:[#allocation2 + $0x48] sm:$0xff]
  %v1846 = vld [vmem:[#allocation2 + $0x50] sm:$0xff]
  %v1847 = vld [vmem:[#allocation2 + $0x58] sm:$0xff]
  %v1848 = vld [vmem:[#allocation2 + $0x60] sm:$0xff]
  %v1849 = vld [vmem:[#allocation2 + $0x68] sm:$0xff]
  %v1850 = vld [vmem:[#allocation2 + $0x70] sm:$0xff]
  %v1851 = vld [vmem:[#allocation2 + $0x78] sm:$0xff]
  %v1852 = vld [vmem:[#allocation2 + $0x80] sm:$0xff]
  %v1853 = vld [vmem:[#allocation2 + $0x88] sm:$0xff]
  %v1854 = vld [vmem:[#allocation2 + $0x90] sm:$0xff]
  %v1855 = vld [vmem:[#allocation2 + $0x98] sm:$0xff]
  %v1856 = vld [vmem:[#allocation2 + $0xa0] sm:$0xff]
  %v1857 = vld [vmem:[#allocation2 + $0xa8] sm:$0xff]
  %v1858 = vld [vmem:[#allocation2 + $0xb0] sm:$0xff]
  %v1859 = vld [vmem:[#allocation2 + $0xb8] sm:$0xff]
  %v1860 = vld [vmem:[#allocation2 + $0xc0] sm:$0xff]
  %v1861 = vld [vmem:[#allocation2 + $0xc8] sm:$0xff]
  %v1862 = vld [vmem:[#allocation2 + $0xd0] sm:$0xff]
  %v1863 = vld [vmem:[#allocation2 + $0xd8] sm:$0xff]
  %v1864 = vld [vmem:[#allocation2 + $0xe0] sm:$0x3f]
  %v1865 = vadd.f32 %v1836, %v1719
  %v1866 = vadd.f32 %v1837, %v1722
  %v1867 = vadd.f32 %v1838, %v1727
  %v1868 = vadd.f32 %v1839, %v1730
  %v1869 = vadd.f32 %v1840, %v1735
  %v1870 = vadd.f32 %v1841, %v1738
  %v1871 = vadd.f32 %v1842, %v1743
  %v1872 = vadd.f32 %v1843, %v1746
  %v1873 = vadd.f32 %v1844, %v1751
  %v1874 = vadd.f32 %v1845, %v1754
  %v1875 = vadd.f32 %v1846, %v1759
  %v1876 = vadd.f32 %v1847, %v1762
  %v1877 = vadd.f32 %v1848, %v1767
  %v1878 = vadd.f32 %v1849, %v1770
  %v1879 = vadd.f32 %v1850, %v1775
  %v1880 = vadd.f32 %v1851, %v1778
  %v1881 = vadd.f32 %v1852, %v1783
  %v1882 = vadd.f32 %v1853, %v1786
  %v1883 = vadd.f32 %v1854, %v1791
  %v1884 = vadd.f32 %v1855, %v1794
  %v1885 = vadd.f32 %v1856, %v1799
  %v1886 = vadd.f32 %v1857, %v1802
  %v1887 = vadd.f32 %v1858, %v1807
  %v1888 = vadd.f32 %v1859, %v1810
  %v1889 = vadd.f32 %v1860, %v1815
  %v1890 = vadd.f32 %v1861, %v1818
  %v1891 = vadd.f32 %v1862, %v1823
  %v1892 = vadd.f32 %v1863, %v1826
  %v1893 = vadd.f32 %v1864, %v1831
  %1894 = vst.msk [vmem:[#allocation2] sm:$0xff] %vm347, %v1865
  %1895 = vst.msk [vmem:[#allocation2 + $0x8] sm:$0xff] %vm347, %v1866
  %1896 = vst.msk [vmem:[#allocation2 + $0x10] sm:$0xff] %vm347, %v1867
  %1897 = vst.msk [vmem:[#allocation2 + $0x18] sm:$0xff] %vm347, %v1868
  %1898 = vst.msk [vmem:[#allocation2 + $0x20] sm:$0xff] %vm347, %v1869
  %1899 = vst.msk [vmem:[#allocation2 + $0x28] sm:$0xff] %vm347, %v1870
  %1900 = vst.msk [vmem:[#allocation2 + $0x30] sm:$0xff] %vm347, %v1871
  %1901 = vst.msk [vmem:[#allocation2 + $0x38] sm:$0xff] %vm347, %v1872
  %1902 = vst.msk [vmem:[#allocation2 + $0x40] sm:$0xff] %vm347, %v1873
  %1903 = vst.msk [vmem:[#allocation2 + $0x48] sm:$0xff] %vm347, %v1874
  %1904 = vst.msk [vmem:[#allocation2 + $0x50] sm:$0xff] %vm347, %v1875
  %1905 = vst.msk [vmem:[#allocation2 + $0x58] sm:$0xff] %vm347, %v1876
  %1906 = vst.msk [vmem:[#allocation2 + $0x60] sm:$0xff] %vm347, %v1877
  %1907 = vst.msk [vmem:[#allocation2 + $0x68] sm:$0xff] %vm347, %v1878
  %1908 = vst.msk [vmem:[#allocation2 + $0x70] sm:$0xff] %vm347, %v1879
  %1909 = vst.msk [vmem:[#allocation2 + $0x78] sm:$0xff] %vm347, %v1880
  %1910 = vst.msk [vmem:[#allocation2 + $0x80] sm:$0xff] %vm347, %v1881
  %1911 = vst.msk [vmem:[#allocation2 + $0x88] sm:$0xff] %vm347, %v1882
  %1912 = vst.msk [vmem:[#allocation2 + $0x90] sm:$0xff] %vm347, %v1883
  %1913 = vst.msk [vmem:[#allocation2 + $0x98] sm:$0xff] %vm347, %v1884
  %1914 = vst.msk [vmem:[#allocation2 + $0xa0] sm:$0xff] %vm347, %v1885
  %1915 = vst.msk [vmem:[#allocation2 + $0xa8] sm:$0xff] %vm347, %v1886
  %1916 = vst.msk [vmem:[#allocation2 + $0xb0] sm:$0xff] %vm347, %v1887
  %1917 = vst.msk [vmem:[#allocation2 + $0xb8] sm:$0xff] %vm347, %v1888
  %1918 = vst.msk [vmem:[#allocation2 + $0xc0] sm:$0xff] %vm347, %v1889
  %1919 = vst.msk [vmem:[#allocation2 + $0xc8] sm:$0xff] %vm347, %v1890
  %1920 = vst.msk [vmem:[#allocation2 + $0xd0] sm:$0xff] %vm347, %v1891
  %1921 = vst.msk [vmem:[#allocation2 + $0xd8] sm:$0xff] %vm347, %v1892
  %1922 = vst.msk [vmem:[#allocation2 + $0xe0] sm:$0x3f] %vm376, %v1893
  %v1923 = vld [vmem:[%s2] sm:$0x1]
  %v1924 = vld [vmem:[#allocation2] sm:$0xff]
  %v1925 = vld [vmem:[#allocation2 + $0x8] sm:$0x3]
  %v1927 = vlaneseq
  %v1928 = vshrl.u32 %v1927, 7
  %v1929 = vsub.s32 0, %v1928
  %v1930 = vrot.slane %v1923, %v1929
  %v1932 = vadd.f32 %v1924, %v1930
  %v1933 = vadd.f32 %v1925, %v1930
  %v1934 = vmax.f32 %v1932, 0.0
  %v1935 = vmax.f32 %v1933, 0.0
  %v1936 = vpack.c.bf16 %v1935, %v1934
  %v1938 = vunpack.c.l.b16 %v1936
  %v1939 = vunpack.c.h.b16 %v1936
  %v1940 = vpack.c.b16 %v1938, %v1938
  %v1941 = vpack.c.b16 %v1939, %v1939
  %vm1944 = vcmask 257024
  %1945 = vst.msk [vmem:[%s3] sm:$0xf] %vm1944, %v1940
  %vm1946 = vcmask 253952
  %1947 = vst.msk [vmem:[%s3 + $0x4] sm:$0x1] %vm1946, %v1941
  %v1948 = vld [vmem:[#allocation2 + $0xb] sm:$0xff]
  %v1949 = vld [vmem:[#allocation2 + $0x13] sm:$0x3]
  %v1950 = vadd.f32 %v1948, %v1930
  %v1951 = vadd.f32 %v1949, %v1930
  %v1952 = vmax.f32 %v1950, 0.0
  %v1953 = vmax.f32 %v1951, 0.0
  %v1954 = vpack.c.bf16 %v1953, %v1952
  %v1956 = vunpack.c.l.b16 %v1954
  %v1957 = vunpack.c.h.b16 %v1954
  %v1958 = vpack.c.b16 %v1956, %v1956
  %v1959 = vpack.c.b16 %v1957, %v1957
  %s1962 = scalar_lea.vmem %s3, 8
  %1963 = vst.msk [vmem:[%s1962] sm:$0xf] %vm1944, %v1958
  %1964 = vst.msk [vmem:[%s1962 + $0x4] sm:$0x1] %vm1946, %v1959
  %v1965 = vld [vmem:[#allocation2 + $0x16] sm:$0xff]
  %v1966 = vld [vmem:[#allocation2 + $0x1e] sm:$0x3]
  %v1967 = vadd.f32 %v1965, %v1930
  %v1968 = vadd.f32 %v1966, %v1930
  %v1969 = vmax.f32 %v1967, 0.0
  %v1970 = vmax.f32 %v1968, 0.0
  %v1971 = vpack.c.bf16 %v1970, %v1969
  %v1973 = vunpack.c.l.b16 %v1971
  %v1974 = vunpack.c.h.b16 %v1971
  %v1975 = vpack.c.b16 %v1973, %v1973
  %v1976 = vpack.c.b16 %v1974, %v1974
  %s1979 = scalar_lea.vmem %s3, 16
  %1980 = vst.msk [vmem:[%s1979] sm:$0xf] %vm1944, %v1975
  %1981 = vst.msk [vmem:[%s1979 + $0x4] sm:$0x1] %vm1946, %v1976
  %v1982 = vld [vmem:[#allocation2 + $0x21] sm:$0xff]
  %v1983 = vld [vmem:[#allocation2 + $0x29] sm:$0x3]
  %v1984 = vadd.f32 %v1982, %v1930
  %v1985 = vadd.f32 %v1983, %v1930
  %v1986 = vmax.f32 %v1984, 0.0
  %v1987 = vmax.f32 %v1985, 0.0
  %v1988 = vpack.c.bf16 %v1987, %v1986
  %v1990 = vunpack.c.l.b16 %v1988
  %v1991 = vunpack.c.h.b16 %v1988
  %v1992 = vpack.c.b16 %v1990, %v1990
  %v1993 = vpack.c.b16 %v1991, %v1991
  %s1996 = scalar_lea.vmem %s3, 24
  %1997 = vst.msk [vmem:[%s1996] sm:$0xf] %vm1944, %v1992
  %1998 = vst.msk [vmem:[%s1996 + $0x4] sm:$0x1] %vm1946, %v1993
  %v1999 = vld [vmem:[#allocation2 + $0x2c] sm:$0xff]
  %v2000 = vld [vmem:[#allocation2 + $0x34] sm:$0x3]
  %v2001 = vadd.f32 %v1999, %v1930
  %v2002 = vadd.f32 %v2000, %v1930
  %v2003 = vmax.f32 %v2001, 0.0
  %v2004 = vmax.f32 %v2002, 0.0
  %v2005 = vpack.c.bf16 %v2004, %v2003
  %v2007 = vunpack.c.l.b16 %v2005
  %v2008 = vunpack.c.h.b16 %v2005
  %v2009 = vpack.c.b16 %v2007, %v2007
  %v2010 = vpack.c.b16 %v2008, %v2008
  %s2013 = scalar_lea.vmem %s3, 32
  %2014 = vst.msk [vmem:[%s2013] sm:$0xf] %vm1944, %v2009
  %2015 = vst.msk [vmem:[%s2013 + $0x4] sm:$0x1] %vm1946, %v2010
  %v2016 = vld [vmem:[#allocation2 + $0x37] sm:$0xff]
  %v2017 = vld [vmem:[#allocation2 + $0x3f] sm:$0x3]
  %v2018 = vadd.f32 %v2016, %v1930
  %v2019 = vadd.f32 %v2017, %v1930
  %v2020 = vmax.f32 %v2018, 0.0
  %v2021 = vmax.f32 %v2019, 0.0
  %v2022 = vpack.c.bf16 %v2021, %v2020
  %v2024 = vunpack.c.l.b16 %v2022
  %v2025 = vunpack.c.h.b16 %v2022
  %v2026 = vpack.c.b16 %v2024, %v2024
  %v2027 = vpack.c.b16 %v2025, %v2025
  %s2030 = scalar_lea.vmem %s3, 40
  %2031 = vst.msk [vmem:[%s2030] sm:$0xf] %vm1944, %v2026
  %2032 = vst.msk [vmem:[%s2030 + $0x4] sm:$0x1] %vm1946, %v2027
  %v2033 = vld [vmem:[#allocation2 + $0x42] sm:$0xff]
  %v2034 = vld [vmem:[#allocation2 + $0x4a] sm:$0x3]
  %v2035 = vadd.f32 %v2033, %v1930
  %v2036 = vadd.f32 %v2034, %v1930
  %v2037 = vmax.f32 %v2035, 0.0
  %v2038 = vmax.f32 %v2036, 0.0
  %v2039 = vpack.c.bf16 %v2038, %v2037
  %v2041 = vunpack.c.l.b16 %v2039
  %v2042 = vunpack.c.h.b16 %v2039
  %v2043 = vpack.c.b16 %v2041, %v2041
  %v2044 = vpack.c.b16 %v2042, %v2042
  %s2047 = scalar_lea.vmem %s3, 48
  %2048 = vst.msk [vmem:[%s2047] sm:$0xf] %vm1944, %v2043
  %2049 = vst.msk [vmem:[%s2047 + $0x4] sm:$0x1] %vm1946, %v2044
  %v2050 = vld [vmem:[#allocation2 + $0x4d] sm:$0xff]
  %v2051 = vld [vmem:[#allocation2 + $0x55] sm:$0x3]
  %v2052 = vadd.f32 %v2050, %v1930
  %v2053 = vadd.f32 %v2051, %v1930
  %v2054 = vmax.f32 %v2052, 0.0
  %v2055 = vmax.f32 %v2053, 0.0
  %v2056 = vpack.c.bf16 %v2055, %v2054
  %v2058 = vunpack.c.l.b16 %v2056
  %v2059 = vunpack.c.h.b16 %v2056
  %v2060 = vpack.c.b16 %v2058, %v2058
  %v2061 = vpack.c.b16 %v2059, %v2059
  %s2064 = scalar_lea.vmem %s3, 56
  %2065 = vst.msk [vmem:[%s2064] sm:$0xf] %vm1944, %v2060
  %2066 = vst.msk [vmem:[%s2064 + $0x4] sm:$0x1] %vm1946, %v2061
  %v2067 = vld [vmem:[#allocation2 + $0x58] sm:$0xff]
  %v2068 = vld [vmem:[#allocation2 + $0x60] sm:$0x3]
  %v2069 = vadd.f32 %v2067, %v1930
  %v2070 = vadd.f32 %v2068, %v1930
  %v2071 = vmax.f32 %v2069, 0.0
  %v2072 = vmax.f32 %v2070, 0.0
  %v2073 = vpack.c.bf16 %v2072, %v2071
  %v2075 = vunpack.c.l.b16 %v2073
  %v2076 = vunpack.c.h.b16 %v2073
  %v2077 = vpack.c.b16 %v2075, %v2075
  %v2078 = vpack.c.b16 %v2076, %v2076
  %s2081 = scalar_lea.vmem %s3, 64
  %2082 = vst.msk [vmem:[%s2081] sm:$0xf] %vm1944, %v2077
  %2083 = vst.msk [vmem:[%s2081 + $0x4] sm:$0x1] %vm1946, %v2078
  %v2084 = vld [vmem:[#allocation2 + $0x63] sm:$0xff]
  %v2085 = vld [vmem:[#allocation2 + $0x6b] sm:$0x3]
  %v2086 = vadd.f32 %v2084, %v1930
  %v2087 = vadd.f32 %v2085, %v1930
  %v2088 = vmax.f32 %v2086, 0.0
  %v2089 = vmax.f32 %v2087, 0.0
  %v2090 = vpack.c.bf16 %v2089, %v2088
  %v2092 = vunpack.c.l.b16 %v2090
  %v2093 = vunpack.c.h.b16 %v2090
  %v2094 = vpack.c.b16 %v2092, %v2092
  %v2095 = vpack.c.b16 %v2093, %v2093
  %s2098 = scalar_lea.vmem %s3, 72
  %2099 = vst.msk [vmem:[%s2098] sm:$0xf] %vm1944, %v2094
  %2100 = vst.msk [vmem:[%s2098 + $0x4] sm:$0x1] %vm1946, %v2095
  %v2101 = vld [vmem:[#allocation2 + $0x79] sm:$0xff]
  %v2102 = vld [vmem:[#allocation2 + $0x81] sm:$0x3]
  %v2103 = vadd.f32 %v2101, %v1930
  %v2104 = vadd.f32 %v2102, %v1930
  %v2105 = vmax.f32 %v2103, 0.0
  %v2106 = vmax.f32 %v2104, 0.0
  %v2107 = vpack.c.bf16 %v2106, %v2105
  %v2109 = vunpack.c.l.b16 %v2107
  %v2110 = vunpack.c.h.b16 %v2107
  %v2111 = vpack.c.b16 %v2109, %v2109
  %v2112 = vpack.c.b16 %v2110, %v2110
  %s2115 = scalar_lea.vmem %s3, 80
  %2116 = vst.msk [vmem:[%s2115] sm:$0xf] %vm1944, %v2111
  %2117 = vst.msk [vmem:[%s2115 + $0x4] sm:$0x1] %vm1946, %v2112
  %v2118 = vld [vmem:[#allocation2 + $0x84] sm:$0xff]
  %v2119 = vld [vmem:[#allocation2 + $0x8c] sm:$0x3]
  %v2120 = vadd.f32 %v2118, %v1930
  %v2121 = vadd.f32 %v2119, %v1930
  %v2122 = vmax.f32 %v2120, 0.0
  %v2123 = vmax.f32 %v2121, 0.0
  %v2124 = vpack.c.bf16 %v2123, %v2122
  %v2126 = vunpack.c.l.b16 %v2124
  %v2127 = vunpack.c.h.b16 %v2124
  %v2128 = vpack.c.b16 %v2126, %v2126
  %v2129 = vpack.c.b16 %v2127, %v2127
  %s2132 = scalar_lea.vmem %s3, 88
  %2133 = vst.msk [vmem:[%s2132] sm:$0xf] %vm1944, %v2128
  %2134 = vst.msk [vmem:[%s2132 + $0x4] sm:$0x1] %vm1946, %v2129
  %v2135 = vld [vmem:[#allocation2 + $0x8f] sm:$0xff]
  %v2136 = vld [vmem:[#allocation2 + $0x97] sm:$0x3]
  %v2137 = vadd.f32 %v2135, %v1930
  %v2138 = vadd.f32 %v2136, %v1930
  %v2139 = vmax.f32 %v2137, 0.0
  %v2140 = vmax.f32 %v2138, 0.0
  %v2141 = vpack.c.bf16 %v2140, %v2139
  %v2143 = vunpack.c.l.b16 %v2141
  %v2144 = vunpack.c.h.b16 %v2141
  %v2145 = vpack.c.b16 %v2143, %v2143
  %v2146 = vpack.c.b16 %v2144, %v2144
  %s2149 = scalar_lea.vmem %s3, 96
  %2150 = vst.msk [vmem:[%s2149] sm:$0xf] %vm1944, %v2145
  %2151 = vst.msk [vmem:[%s2149 + $0x4] sm:$0x1] %vm1946, %v2146
  %v2152 = vld [vmem:[#allocation2 + $0x9a] sm:$0xff]
  %v2153 = vld [vmem:[#allocation2 + $0xa2] sm:$0x3]
  %v2154 = vadd.f32 %v2152, %v1930
  %v2155 = vadd.f32 %v2153, %v1930
  %v2156 = vmax.f32 %v2154, 0.0
  %v2157 = vmax.f32 %v2155, 0.0
  %v2158 = vpack.c.bf16 %v2157, %v2156
  %v2160 = vunpack.c.l.b16 %v2158
  %v2161 = vunpack.c.h.b16 %v2158
  %v2162 = vpack.c.b16 %v2160, %v2160
  %v2163 = vpack.c.b16 %v2161, %v2161
  %s2166 = scalar_lea.vmem %s3, 104
  %2167 = vst.msk [vmem:[%s2166] sm:$0xf] %vm1944, %v2162
  %2168 = vst.msk [vmem:[%s2166 + $0x4] sm:$0x1] %vm1946, %v2163
  %v2169 = vld [vmem:[#allocation2 + $0xa5] sm:$0xff]
  %v2170 = vld [vmem:[#allocation2 + $0xad] sm:$0x3]
  %v2171 = vadd.f32 %v2169, %v1930
  %v2172 = vadd.f32 %v2170, %v1930
  %v2173 = vmax.f32 %v2171, 0.0
  %v2174 = vmax.f32 %v2172, 0.0
  %v2175 = vpack.c.bf16 %v2174, %v2173
  %v2177 = vunpack.c.l.b16 %v2175
  %v2178 = vunpack.c.h.b16 %v2175
  %v2179 = vpack.c.b16 %v2177, %v2177
  %v2180 = vpack.c.b16 %v2178, %v2178
  %s2183 = scalar_lea.vmem %s3, 112
  %2184 = vst.msk [vmem:[%s2183] sm:$0xf] %vm1944, %v2179
  %2185 = vst.msk [vmem:[%s2183 + $0x4] sm:$0x1] %vm1946, %v2180
  %v2186 = vld [vmem:[#allocation2 + $0xb0] sm:$0xff]
  %v2187 = vld [vmem:[#allocation2 + $0xb8] sm:$0x3]
  %v2188 = vadd.f32 %v2186, %v1930
  %v2189 = vadd.f32 %v2187, %v1930
  %v2190 = vmax.f32 %v2188, 0.0
  %v2191 = vmax.f32 %v2189, 0.0
  %v2192 = vpack.c.bf16 %v2191, %v2190
  %v2194 = vunpack.c.l.b16 %v2192
  %v2195 = vunpack.c.h.b16 %v2192
  %v2196 = vpack.c.b16 %v2194, %v2194
  %v2197 = vpack.c.b16 %v2195, %v2195
  %s2200 = scalar_lea.vmem %s3, 120
  %2201 = vst.msk [vmem:[%s2200] sm:$0xf] %vm1944, %v2196
  %2202 = vst.msk [vmem:[%s2200 + $0x4] sm:$0x1] %vm1946, %v2197
  %v2203 = vld [vmem:[#allocation2 + $0xbb] sm:$0xff]
  %v2204 = vld [vmem:[#allocation2 + $0xc3] sm:$0x3]
  %v2205 = vadd.f32 %v2203, %v1930
  %v2206 = vadd.f32 %v2204, %v1930
  %v2207 = vmax.f32 %v2205, 0.0
  %v2208 = vmax.f32 %v2206, 0.0
  %v2209 = vpack.c.bf16 %v2208, %v2207
  %v2211 = vunpack.c.l.b16 %v2209
  %v2212 = vunpack.c.h.b16 %v2209
  %v2213 = vpack.c.b16 %v2211, %v2211
  %v2214 = vpack.c.b16 %v2212, %v2212
  %s2217 = scalar_lea.vmem %s3, 128
  %2218 = vst.msk [vmem:[%s2217] sm:$0xf] %vm1944, %v2213
  %2219 = vst.msk [vmem:[%s2217 + $0x4] sm:$0x1] %vm1946, %v2214
  %v2220 = vld [vmem:[#allocation2 + $0xc6] sm:$0xff]
  %v2221 = vld [vmem:[#allocation2 + $0xce] sm:$0x3]
  %v2222 = vadd.f32 %v2220, %v1930
  %v2223 = vadd.f32 %v2221, %v1930
  %v2224 = vmax.f32 %v2222, 0.0
  %v2225 = vmax.f32 %v2223, 0.0
  %v2226 = vpack.c.bf16 %v2225, %v2224
  %v2228 = vunpack.c.l.b16 %v2226
  %v2229 = vunpack.c.h.b16 %v2226
  %v2230 = vpack.c.b16 %v2228, %v2228
  %v2231 = vpack.c.b16 %v2229, %v2229
  %s2234 = scalar_lea.vmem %s3, 136
  %2235 = vst.msk [vmem:[%s2234] sm:$0xf] %vm1944, %v2230
  %2236 = vst.msk [vmem:[%s2234 + $0x4] sm:$0x1] %vm1946, %v2231
  %v2237 = vld [vmem:[#allocation2 + $0xd1] sm:$0xff]
  %v2238 = vld [vmem:[#allocation2 + $0xd9] sm:$0x3]
  %v2239 = vadd.f32 %v2237, %v1930
  %v2240 = vadd.f32 %v2238, %v1930
  %v2241 = vmax.f32 %v2239, 0.0
  %v2242 = vmax.f32 %v2240, 0.0
  %v2243 = vpack.c.bf16 %v2242, %v2241
  %v2245 = vunpack.c.l.b16 %v2243
  %v2246 = vunpack.c.h.b16 %v2243
  %v2247 = vpack.c.b16 %v2245, %v2245
  %v2248 = vpack.c.b16 %v2246, %v2246
  %s2251 = scalar_lea.vmem %s3, 144
  %2252 = vst.msk [vmem:[%s2251] sm:$0xf] %vm1944, %v2247
  %2253 = vst.msk [vmem:[%s2251 + $0x4] sm:$0x1] %vm1946, %v2248
  %v2254 = vld [vmem:[#allocation2 + $0xdc] sm:$0xff]
  %v2255 = vld [vmem:[#allocation2 + $0xe4] sm:$0x3]
  %v2256 = vadd.f32 %v2254, %v1930
  %v2257 = vadd.f32 %v2255, %v1930
  %v2258 = vmax.f32 %v2256, 0.0
  %v2259 = vmax.f32 %v2257, 0.0
  %v2260 = vpack.c.bf16 %v2259, %v2258
  %v2262 = vunpack.c.l.b16 %v2260
  %v2263 = vunpack.c.h.b16 %v2260
  %v2264 = vpack.c.b16 %v2262, %v2262
  %v2265 = vpack.c.b16 %v2263, %v2263
  %s2268 = scalar_lea.vmem %s3, 152
  %2269 = vst.msk [vmem:[%s2268] sm:$0xf] %vm1944, %v2264
  %2270 = vst.msk [vmem:[%s2268 + $0x4] sm:$0x1] %vm1946, %v2265
  // Predicated region
  $region14: #{cat_q_conv_net_forward.4} parent=0 // pred_check
    _
  $region15: #{cat_q_conv_net_forward.4} parent=0 // pred_check_branch
    %2272 = sbr.rel (0) target = $region17
  $region16: #{cat_q_conv_net_forward.4} parent=0 // pred_region
    _
  $region17: #{cat_q_conv_net_forward.4} parent=0 // pred_fallthru
    _
  // Predicated region
  $region18: #{cat_q_conv_net_forward.4} parent=0 // pred_check
    _
  $region19: #{cat_q_conv_net_forward.4} parent=0 // pred_check_branch
    %2274 = sbr.rel (0) target = $region21
  $region20: #{cat_q_conv_net_forward.4} parent=0 // pred_region
    _
  $region21: #{cat_q_conv_net_forward.4} parent=0 // pred_fallthru
    _

// kernel: cat_q_conv_net_forward.5
$region0: #{cat_q_conv_net_forward.5}
  #allocation0 [shape = 'u32[]', space=smem, size = 0x4, offset = 0x4, fixed_abs, tag = 'smem constant byte address 0x4 - core index']
  #allocation1 [shape = 'u32[144,128]{1,0:T(1,128)}', space=vmem, size = 0x12000, scoped, tag = 'internal scratch']
  #allocation2 [shape = 'f32[44,64]{1,0:T(8,128)}', space=vmem, size = 0x6000, scoped, tag = 'scratch operand']
  %s0 = inlined_call_operand.vmem [shape: bf16[50,128], index: 0, kind: input, shape index: {}]
  %s1 = inlined_call_operand.vmem [shape: bf16[512,64], index: 1, kind: input, shape index: {}]
  %s2 = inlined_call_operand.vmem [shape: f32[1,64], index: 2, kind: input, shape index: {}]
  %s3 = inlined_call_operand.vmem [shape: bf16[2,4,4,64], index: 3, kind: output, shape index: {}]
  %s4 = sld [smem:[#allocation0]]
  $region22: #{cat_q_conv_net_forward.5} parent=0
    _
  %s6 = ssub.s32 1, %s4
  %s7 = scalar_select 0, %s6, %s4
  // Predicated region
  $region2: #{cat_q_conv_net_forward.5} parent=0 // pred_check
    _
  $region3: #{cat_q_conv_net_forward.5} parent=0 // pred_check_branch
    %9 = sbr.rel (0) target = $region5
  $region4: #{cat_q_conv_net_forward.5} parent=0 // pred_region
    _
  $region5: #{cat_q_conv_net_forward.5} parent=0 // pred_fallthru
    _
  // Predicated region
  $region6: #{cat_q_conv_net_forward.5} parent=0 // pred_check
    _
  $region7: #{cat_q_conv_net_forward.5} parent=0 // pred_check_branch
    %11 = sbr.rel (0) target = $region9
  $region8: #{cat_q_conv_net_forward.5} parent=0 // pred_region
    _
  $region9: #{cat_q_conv_net_forward.5} parent=0 // pred_fallthru
    _
  // Predicated region
  $region10: #{cat_q_conv_net_forward.5} parent=0 // pred_check
    _
  $region11: #{cat_q_conv_net_forward.5} parent=0 // pred_check_branch
    %13 = sbr.rel (0) target = $region13
  $region12: #{cat_q_conv_net_forward.5} parent=0 // pred_region
    _
  $region13: #{cat_q_conv_net_forward.5} parent=0 // pred_fallthru
    _
  %v15 = vld [vmem:[%s0] sm:$0xf]
  %v16 = vld [vmem:[%s0 + $0x4] sm:$0xf]
  %v17 = vld [vmem:[%s0 + $0x8] sm:$0xf]
  %v18 = vld [vmem:[%s0 + $0xc] sm:$0xf]
  %v19 = vld [vmem:[%s0 + $0x10] sm:$0xf]
  %v20 = vld [vmem:[%s0 + $0x14] sm:$0x3]
  %v21 = vld [vmem:[%s1] sm:$0xf]
  %v22 = vld [vmem:[%s1 + $0x4] sm:$0xf]
  %v23 = vld [vmem:[%s1 + $0x8] sm:$0xf]
  %v24 = vld [vmem:[%s1 + $0xc] sm:$0xf]
  %v25 = vld [vmem:[%s1 + $0x10] sm:$0xf]
  %v26 = vld [vmem:[%s1 + $0x14] sm:$0xf]
  %v27 = vld [vmem:[%s1 + $0x18] sm:$0xf]
  %v28 = vld [vmem:[%s1 + $0x1c] sm:$0xf]
  %v29 = vld [vmem:[%s1 + $0x20] sm:$0xf]
  %v30 = vld [vmem:[%s1 + $0x24] sm:$0xf]
  %v31 = vld [vmem:[%s1 + $0x28] sm:$0xf]
  %v32 = vld [vmem:[%s1 + $0x2c] sm:$0xf]
  %v33 = vld [vmem:[%s1 + $0x30] sm:$0xf]
  %v34 = vld [vmem:[%s1 + $0x34] sm:$0xf]
  %v35 = vld [vmem:[%s1 + $0x38] sm:$0xf]
  %v36 = vld [vmem:[%s1 + $0x3c] sm:$0xf]
  %v43 = vunpack.c.l.b16 %v15
  %v44 = vunpack.c.l.b16 %v16
  %v45 = vunpack.c.l.b16 %v17
  %v46 = vunpack.c.l.b16 %v18
  %v47 = vunpack.c.l.b16 %v19
  %v48 = vunpack.c.l.b16 %v20
  %v49 = vpack.c.b16 %v44, %v43
  %v50 = vpack.c.b16 %v46, %v45
  %v51 = vpack.c.b16 %v48, %v47
  %v71 = vunpack.c.l.b16 %v21
  %v72 = vunpack.c.l.b16 %v22
  %v73 = vunpack.c.l.b16 %v23
  %v74 = vunpack.c.l.b16 %v24
  %v75 = vunpack.c.l.b16 %v25
  %v76 = vunpack.c.l.b16 %v26
  %v77 = vunpack.c.l.b16 %v27
  %v78 = vunpack.c.l.b16 %v28
  %v79 = vunpack.c.l.b16 %v29
  %v80 = vunpack.c.l.b16 %v30
  %v81 = vunpack.c.l.b16 %v31
  %v82 = vunpack.c.l.b16 %v32
  %v83 = vunpack.c.l.b16 %v33
  %v84 = vunpack.c.l.b16 %v34
  %v85 = vunpack.c.l.b16 %v35
  %v86 = vunpack.c.l.b16 %v36
  %v87 = vpack.c.b16 %v72, %v71
  %v88 = vpack.c.b16 %v74, %v73
  %v89 = vpack.c.b16 %v76, %v75
  %v90 = vpack.c.b16 %v78, %v77
  %v91 = vpack.c.b16 %v80, %v79
  %v92 = vpack.c.b16 %v82, %v81
  %v93 = vpack.c.b16 %v84, %v83
  %v94 = vpack.c.b16 %v86, %v85
  %103 = vmatprep.subr.bf16.mxu0 0
  %104 = vmatpush1.bf16.msra.mxu0 %v87
  %105 = vmatprep.subr.bf16.mxu0 0
  %106 = vmatpush1.bf16.msra.mxu0 %v88
  %107 = vmatprep.subr.bf16.mxu0 0
  %108 = vmatpush1.bf16.msra.mxu0 %v89
  %109 = vmatprep.subr.bf16.mxu0 0
  %110 = vmatpush1.bf16.msra.mxu0 %v90
  %111 = vmatprep.subr.bf16.mxu0 0
  %112 = vmatpush1.bf16.msra.mxu0 %v91
  %113 = vmatprep.subr.bf16.mxu0 0
  %114 = vmatpush1.bf16.msra.mxu0 %v92
  %115 = vmatprep.subr.bf16.mxu0 0
  %116 = vmatpush1.bf16.msra.mxu0 %v93
  %117 = vmatprep.subr.bf16.mxu0 0
  %118 = vmatpush1.bf16.msra.mxu0 %v94
  %119 = vmatprep.subr.bf16.mxu0 0
  %120 = vmatpush1.bf16.msra.mxu0 0
  %121 = vmatprep.subr.bf16.mxu0 0
  %122 = vmatpush1.bf16.msra.mxu0 0
  %123 = vmatprep.subr.bf16.mxu0 0
  %124 = vmatpush1.bf16.msra.mxu0 0
  %125 = vmatprep.subr.bf16.mxu0 0
  %126 = vmatpush1.bf16.msra.mxu0 0
  %127 = vmatprep.subr.bf16.mxu0 0
  %128 = vmatpush1.bf16.msra.mxu0 0
  %129 = vmatprep.subr.bf16.mxu0 0
  %130 = vmatpush1.bf16.msra.mxu0 0
  %131 = vmatprep.subr.bf16.mxu0 0
  %132 = vmatpush1.bf16.msra.mxu0 0
  %133 = vmatprep.subr.bf16.mxu0 0
  %134 = vmatpush1.bf16.msra.mxu0 0
  %135 = vmatprep.mubr.bf16.mxu0 0
  %136 = vmatmul.mubr.bf16.gmra.mrb[0].mxu0 %v49
  %v137 = vpop.f32.mrb[0].mxu0
  %v138 = vadd.f32 0.0, %v137
  %v139 = vpop.f32.mrb[0].mxu0
  %v140 = vpop.f32.mrb[0].mxu0
  %v141 = vadd.f32 0.0, %v140
  %v142 = vpop.f32.mrb[0].mxu0
  %143 = vmatprep.mubr.bf16.mxu0 0
  %144 = vmatmul.mubr.bf16.gmra.mrb[0].mxu0 %v50
  %v145 = vpop.f32.mrb[0].mxu0
  %v146 = vadd.f32 0.0, %v145
  %v147 = vpop.f32.mrb[0].mxu0
  %v148 = vpop.f32.mrb[0].mxu0
  %v149 = vadd.f32 0.0, %v148
  %v150 = vpop.f32.mrb[0].mxu0
  %151 = vmatprep.mubr.bf16.mxu0 0
  %152 = vmatmul.mubr.bf16.gmra.mrb[0].mxu0 %v51
  %v153 = vpop.f32.mrb[0].mxu0
  %v154 = vadd.f32 0.0, %v153
  %v155 = vpop.f32.mrb[0].mxu0
  %v156 = vpop.f32.mrb[0].mxu0
  %v157 = vadd.f32 0.0, %v156
  %v158 = vpop.f32.mrb[0].mxu0
  %159 = vdwg.mxu0
  %vm160 = vcmask 523264
  %161 = vst.msk [vmem:[#allocation2] sm:$0xff] %vm160, %v138
  %162 = vst.msk [vmem:[#allocation2 + $0x8] sm:$0xff] %vm160, %v141
  %163 = vst.msk [vmem:[#allocation2 + $0x10] sm:$0xff] %vm160, %v146
  %164 = vst.msk [vmem:[#allocation2 + $0x18] sm:$0xff] %vm160, %v149
  %165 = vst.msk [vmem:[#allocation2 + $0x20] sm:$0xff] %vm160, %v154
  %vm166 = vcmask 519168
  %167 = vst.msk [vmem:[#allocation2 + $0x28] sm:$0xf] %vm166, %v157
  %v168 = vld [vmem:[%s0] sm:$0xf]
  %v169 = vld [vmem:[%s0 + $0x4] sm:$0xf]
  %v170 = vld [vmem:[%s0 + $0x8] sm:$0xf]
  %v171 = vld [vmem:[%s0 + $0xc] sm:$0xf]
  %v172 = vld [vmem:[%s0 + $0x10] sm:$0xf]
  %v173 = vld [vmem:[%s0 + $0x14] sm:$0x7]
  %v174 = vld [vmem:[%s1 + $0x40] sm:$0xf]
  %v175 = vld [vmem:[%s1 + $0x44] sm:$0xf]
  %v176 = vld [vmem:[%s1 + $0x48] sm:$0xf]
  %v177 = vld [vmem:[%s1 + $0x4c] sm:$0xf]
  %v178 = vld [vmem:[%s1 + $0x50] sm:$0xf]
  %v179 = vld [vmem:[%s1 + $0x54] sm:$0xf]
  %v180 = vld [vmem:[%s1 + $0x58] sm:$0xf]
  %v181 = vld [vmem:[%s1 + $0x5c] sm:$0xf]
  %v182 = vld [vmem:[%s1 + $0x60] sm:$0xf]
  %v183 = vld [vmem:[%s1 + $0x64] sm:$0xf]
  %v184 = vld [vmem:[%s1 + $0x68] sm:$0xf]
  %v185 = vld [vmem:[%s1 + $0x6c] sm:$0xf]
  %v186 = vld [vmem:[%s1 + $0x70] sm:$0xf]
  %v187 = vld [vmem:[%s1 + $0x74] sm:$0xf]
  %v188 = vld [vmem:[%s1 + $0x78] sm:$0xf]
  %v189 = vld [vmem:[%s1 + $0x7c] sm:$0xf]
  %v196 = vunpack.c.l.b16 %v168
  %v197 = vunpack.c.l.b16 %v169
  %v198 = vunpack.c.l.b16 %v170
  %v199 = vunpack.c.l.b16 %v171
  %v200 = vunpack.c.l.b16 %v172
  %v201 = vunpack.c.l.b16 %v173
  %v202 = vpack.c.b16 %v197, %v196
  %v203 = vpack.c.b16 %v199, %v198
  %v204 = vpack.c.b16 %v201, %v200
  %vm205 = vsmask.f32 7424
  %v207 = vshrl.u32 %v202, 16
  %v209 = vshll.u32 %v202, 16
  %v211 = vrot.slane %v209, 1
  %v212 = vor.u32 %v207, %v211
  %v214 = vshll.u32 %v203, 16
  %v216 = vrot.slane %v214, 1
  %v217 = vsel %vm205, %v212, %v216
  %v218 = vshrl.u32 %v203, 16
  %v220 = vor.u32 %v218, %v216
  %v222 = vshll.u32 %v204, 16
  %v224 = vrot.slane %v222, 1
  %v225 = vsel %vm205, %v220, %v224
  %v226 = vshrl.u32 %v204, 16
  %v228 = vor.u32 %v226, %v224
  %v248 = vunpack.c.l.b16 %v174
  %v249 = vunpack.c.l.b16 %v175
  %v250 = vunpack.c.l.b16 %v176
  %v251 = vunpack.c.l.b16 %v177
  %v252 = vunpack.c.l.b16 %v178
  %v253 = vunpack.c.l.b16 %v179
  %v254 = vunpack.c.l.b16 %v180
  %v255 = vunpack.c.l.b16 %v181
  %v256 = vunpack.c.l.b16 %v182
  %v257 = vunpack.c.l.b16 %v183
  %v258 = vunpack.c.l.b16 %v184
  %v259 = vunpack.c.l.b16 %v185
  %v260 = vunpack.c.l.b16 %v186
  %v261 = vunpack.c.l.b16 %v187
  %v262 = vunpack.c.l.b16 %v188
  %v263 = vunpack.c.l.b16 %v189
  %v264 = vpack.c.b16 %v249, %v248
  %v265 = vpack.c.b16 %v251, %v250
  %v266 = vpack.c.b16 %v253, %v252
  %v267 = vpack.c.b16 %v255, %v254
  %v268 = vpack.c.b16 %v257, %v256
  %v269 = vpack.c.b16 %v259, %v258
  %v270 = vpack.c.b16 %v261, %v260
  %v271 = vpack.c.b16 %v263, %v262
  %280 = vmatprep.subr.bf16.mxu0 0
  %281 = vmatpush1.bf16.msra.mxu0 %v264
  %282 = vmatprep.subr.bf16.mxu0 0
  %283 = vmatpush1.bf16.msra.mxu0 %v265
  %284 = vmatprep.subr.bf16.mxu0 0
  %285 = vmatpush1.bf16.msra.mxu0 %v266
  %286 = vmatprep.subr.bf16.mxu0 0
  %287 = vmatpush1.bf16.msra.mxu0 %v267
  %288 = vmatprep.subr.bf16.mxu0 0
  %289 = vmatpush1.bf16.msra.mxu0 %v268
  %290 = vmatprep.subr.bf16.mxu0 0
  %291 = vmatpush1.bf16.msra.mxu0 %v269
  %292 = vmatprep.subr.bf16.mxu0 0
  %293 = vmatpush1.bf16.msra.mxu0 %v270
  %294 = vmatprep.subr.bf16.mxu0 0
  %295 = vmatpush1.bf16.msra.mxu0 %v271
  %296 = vmatprep.subr.bf16.mxu0 0
  %297 = vmatpush1.bf16.msra.mxu0 0
  %298 = vmatprep.subr.bf16.mxu0 0
  %299 = vmatpush1.bf16.msra.mxu0 0
  %300 = vmatprep.subr.bf16.mxu0 0
  %301 = vmatpush1.bf16.msra.mxu0 0
  %302 = vmatprep.subr.bf16.mxu0 0
  %303 = vmatpush1.bf16.msra.mxu0 0
  %304 = vmatprep.subr.bf16.mxu0 0
  %305 = vmatpush1.bf16.msra.mxu0 0
  %306 = vmatprep.subr.bf16.mxu0 0
  %307 = vmatpush1.bf16.msra.mxu0 0
  %308 = vmatprep.subr.bf16.mxu0 0
  %309 = vmatpush1.bf16.msra.mxu0 0
  %310 = vmatprep.subr.bf16.mxu0 0
  %311 = vmatpush1.bf16.msra.mxu0 0
  %312 = vmatprep.mubr.bf16.mxu0 0
  %313 = vmatmul.mubr.bf16.gmra.mrb[0].mxu0 %v217
  %v314 = vpop.f32.mrb[0].mxu0
  %v315 = vadd.f32 0.0, %v314
  %v316 = vpop.f32.mrb[0].mxu0
  %v317 = vpop.f32.mrb[0].mxu0
  %v318 = vadd.f32 0.0, %v317
  %v319 = vpop.f32.mrb[0].mxu0
  %320 = vmatprep.mubr.bf16.mxu0 0
  %321 = vmatmul.mubr.bf16.gmra.mrb[0].mxu0 %v225
  %v322 = vpop.f32.mrb[0].mxu0
  %v323 = vadd.f32 0.0, %v322
  %v324 = vpop.f32.mrb[0].mxu0
  %v325 = vpop.f32.mrb[0].mxu0
  %v326 = vadd.f32 0.0, %v325
  %v327 = vpop.f32.mrb[0].mxu0
  %328 = vmatprep.mubr.bf16.mxu0 0
  %329 = vmatmul.mubr.bf16.gmra.mrb[0].mxu0 %v228
  %v330 = vpop.f32.mrb[0].mxu0
  %v331 = vadd.f32 0.0, %v330
  %v332 = vpop.f32.mrb[0].mxu0
  %v333 = vpop.f32.mrb[0].mxu0
  %v334 = vadd.f32 0.0, %v333
  %v335 = vpop.f32.mrb[0].mxu0
  %336 = vdwg.mxu0
  %v337 = vld [vmem:[#allocation2] sm:$0xff]
  %v338 = vld [vmem:[#allocation2 + $0x8] sm:$0xff]
  %v339 = vld [vmem:[#allocation2 + $0x10] sm:$0xff]
  %v340 = vld [vmem:[#allocation2 + $0x18] sm:$0xff]
  %v341 = vld [vmem:[#allocation2 + $0x20] sm:$0xff]
  %v342 = vld [vmem:[#allocation2 + $0x28] sm:$0xf]
  %v343 = vadd.f32 %v337, %v315
  %v344 = vadd.f32 %v338, %v318
  %v345 = vadd.f32 %v339, %v323
  %v346 = vadd.f32 %v340, %v326
  %v347 = vadd.f32 %v341, %v331
  %v348 = vadd.f32 %v342, %v334
  %349 = vst.msk [vmem:[#allocation2] sm:$0xff] %vm160, %v343
  %350 = vst.msk [vmem:[#allocation2 + $0x8] sm:$0xff] %vm160, %v344
  %351 = vst.msk [vmem:[#allocation2 + $0x10] sm:$0xff] %vm160, %v345
  %352 = vst.msk [vmem:[#allocation2 + $0x18] sm:$0xff] %vm160, %v346
  %353 = vst.msk [vmem:[#allocation2 + $0x20] sm:$0xff] %vm160, %v347
  %354 = vst.msk [vmem:[#allocation2 + $0x28] sm:$0xf] %vm166, %v348
  %v355 = vld [vmem:[%s0] sm:$0xc]
  %v356 = vld [vmem:[%s0 + $0x4] sm:$0xf]
  %v357 = vld [vmem:[%s0 + $0x8] sm:$0xf]
  %v358 = vld [vmem:[%s0 + $0xc] sm:$0xf]
  %v359 = vld [vmem:[%s0 + $0x10] sm:$0xf]
  %v360 = vld [vmem:[%s0 + $0x14] sm:$0xf]
  %v361 = vld [vmem:[%s0 + $0x18] sm:$0x1]
  %v362 = vld [vmem:[%s1 + $0x80] sm:$0xf]
  %v363 = vld [vmem:[%s1 + $0x84] sm:$0xf]
  %v364 = vld [vmem:[%s1 + $0x88] sm:$0xf]
  %v365 = vld [vmem:[%s1 + $0x8c] sm:$0xf]
  %v366 = vld [vmem:[%s1 + $0x90] sm:$0xf]
  %v367 = vld [vmem:[%s1 + $0x94] sm:$0xf]
  %v368 = vld [vmem:[%s1 + $0x98] sm:$0xf]
  %v369 = vld [vmem:[%s1 + $0x9c] sm:$0xf]
  %v370 = vld [vmem:[%s1 + $0xa0] sm:$0xf]
  %v371 = vld [vmem:[%s1 + $0xa4] sm:$0xf]
  %v372 = vld [vmem:[%s1 + $0xa8] sm:$0xf]
  %v373 = vld [vmem:[%s1 + $0xac] sm:$0xf]
  %v374 = vld [vmem:[%s1 + $0xb0] sm:$0xf]
  %v375 = vld [vmem:[%s1 + $0xb4] sm:$0xf]
  %v376 = vld [vmem:[%s1 + $0xb8] sm:$0xf]
  %v377 = vld [vmem:[%s1 + $0xbc] sm:$0xf]
  %v385 = vunpack.c.l.b16 %v355
  %v386 = vunpack.c.l.b16 %v356
  %v387 = vunpack.c.l.b16 %v357
  %v388 = vunpack.c.l.b16 %v358
  %v389 = vunpack.c.l.b16 %v359
  %v390 = vunpack.c.l.b16 %v360
  %v391 = vunpack.c.l.b16 %v361
  %v392 = vpack.c.b16 %v386, %v385
  %v393 = vpack.c.b16 %v388, %v387
  %v394 = vpack.c.b16 %v390, %v389
  %v395 = vpack.c.b16 %v391, %v391
  %vm396 = vsmask.f32 5376
  %v398 = vshrl.u32 %v392, 16
  %v400 = vrot.slane %v398, 2
  %v401 = vshll.u32 %v392, 16
  %v403 = vrot.slane %v401, 3
  %v404 = vor.u32 %v400, %v403
  %v406 = vshrl.u32 %v393, 16
  %v408 = vrot.slane %v406, 2
  %v409 = vshll.u32 %v393, 16
  %v411 = vrot.slane %v409, 3
  %v412 = vor.u32 %v408, %v411
  %v413 = vsel %vm396, %v404, %v412
  %v415 = vshrl.u32 %v394, 16
  %v417 = vrot.slane %v415, 2
  %v418 = vshll.u32 %v394, 16
  %v420 = vrot.slane %v418, 3
  %v421 = vor.u32 %v417, %v420
  %v422 = vsel %vm396, %v412, %v421
  %v424 = vshll.u32 %v395, 16
  %v426 = vrot.slane %v424, 3
  %v427 = vsel %vm396, %v421, %v426
  %v447 = vunpack.c.l.b16 %v362
  %v448 = vunpack.c.l.b16 %v363
  %v449 = vunpack.c.l.b16 %v364
  %v450 = vunpack.c.l.b16 %v365
  %v451 = vunpack.c.l.b16 %v366
  %v452 = vunpack.c.l.b16 %v367
  %v453 = vunpack.c.l.b16 %v368
  %v454 = vunpack.c.l.b16 %v369
  %v455 = vunpack.c.l.b16 %v370
  %v456 = vunpack.c.l.b16 %v371
  %v457 = vunpack.c.l.b16 %v372
  %v458 = vunpack.c.l.b16 %v373
  %v459 = vunpack.c.l.b16 %v374
  %v460 = vunpack.c.l.b16 %v375
  %v461 = vunpack.c.l.b16 %v376
  %v462 = vunpack.c.l.b16 %v377
  %v463 = vpack.c.b16 %v448, %v447
  %v464 = vpack.c.b16 %v450, %v449
  %v465 = vpack.c.b16 %v452, %v451
  %v466 = vpack.c.b16 %v454, %v453
  %v467 = vpack.c.b16 %v456, %v455
  %v468 = vpack.c.b16 %v458, %v457
  %v469 = vpack.c.b16 %v460, %v459
  %v470 = vpack.c.b16 %v462, %v461
  %479 = vmatprep.subr.bf16.mxu0 0
  %480 = vmatpush1.bf16.msra.mxu0 %v463
  %481 = vmatprep.subr.bf16.mxu0 0
  %482 = vmatpush1.bf16.msra.mxu0 %v464
  %483 = vmatprep.subr.bf16.mxu0 0
  %484 = vmatpush1.bf16.msra.mxu0 %v465
  %485 = vmatprep.subr.bf16.mxu0 0
  %486 = vmatpush1.bf16.msra.mxu0 %v466
  %487 = vmatprep.subr.bf16.mxu0 0
  %488 = vmatpush1.bf16.msra.mxu0 %v467
  %489 = vmatprep.subr.bf16.mxu0 0
  %490 = vmatpush1.bf16.msra.mxu0 %v468
  %491 = vmatprep.subr.bf16.mxu0 0
  %492 = vmatpush1.bf16.msra.mxu0 %v469
  %493 = vmatprep.subr.bf16.mxu0 0
  %494 = vmatpush1.bf16.msra.mxu0 %v470
  %495 = vmatprep.subr.bf16.mxu0 0
  %496 = vmatpush1.bf16.msra.mxu0 0
  %497 = vmatprep.subr.bf16.mxu0 0
  %498 = vmatpush1.bf16.msra.mxu0 0
  %499 = vmatprep.subr.bf16.mxu0 0
  %500 = vmatpush1.bf16.msra.mxu0 0
  %501 = vmatprep.subr.bf16.mxu0 0
  %502 = vmatpush1.bf16.msra.mxu0 0
  %503 = vmatprep.subr.bf16.mxu0 0
  %504 = vmatpush1.bf16.msra.mxu0 0
  %505 = vmatprep.subr.bf16.mxu0 0
  %506 = vmatpush1.bf16.msra.mxu0 0
  %507 = vmatprep.subr.bf16.mxu0 0
  %508 = vmatpush1.bf16.msra.mxu0 0
  %509 = vmatprep.subr.bf16.mxu0 0
  %510 = vmatpush1.bf16.msra.mxu0 0
  %511 = vmatprep.mubr.bf16.mxu0 0
  %512 = vmatmul.mubr.bf16.gmra.mrb[0].mxu0 %v413
  %v513 = vpop.f32.mrb[0].mxu0
  %v514 = vadd.f32 0.0, %v513
  %v515 = vpop.f32.mrb[0].mxu0
  %v516 = vpop.f32.mrb[0].mxu0
  %v517 = vadd.f32 0.0, %v516
  %v518 = vpop.f32.mrb[0].mxu0
  %519 = vmatprep.mubr.bf16.mxu0 0
  %520 = vmatmul.mubr.bf16.gmra.mrb[0].mxu0 %v422
  %v521 = vpop.f32.mrb[0].mxu0
  %v522 = vadd.f32 0.0, %v521
  %v523 = vpop.f32.mrb[0].mxu0
  %v524 = vpop.f32.mrb[0].mxu0
  %v525 = vadd.f32 0.0, %v524
  %v526 = vpop.f32.mrb[0].mxu0
  %527 = vmatprep.mubr.bf16.mxu0 0
  %528 = vmatmul.mubr.bf16.gmra.mrb[0].mxu0 %v427
  %v529 = vpop.f32.mrb[0].mxu0
  %v530 = vadd.f32 0.0, %v529
  %v531 = vpop.f32.mrb[0].mxu0
  %v532 = vpop.f32.mrb[0].mxu0
  %v533 = vadd.f32 0.0, %v532
  %v534 = vpop.f32.mrb[0].mxu0
  %535 = vdwg.mxu0
  %v536 = vld [vmem:[#allocation2] sm:$0xff]
  %v537 = vld [vmem:[#allocation2 + $0x8] sm:$0xff]
  %v538 = vld [vmem:[#allocation2 + $0x10] sm:$0xff]
  %v539 = vld [vmem:[#allocation2 + $0x18] sm:$0xff]
  %v540 = vld [vmem:[#allocation2 + $0x20] sm:$0xff]
  %v541 = vld [vmem:[#allocation2 + $0x28] sm:$0xf]
  %v542 = vadd.f32 %v536, %v514
  %v543 = vadd.f32 %v537, %v517
  %v544 = vadd.f32 %v538, %v522
  %v545 = vadd.f32 %v539, %v525
  %v546 = vadd.f32 %v540, %v530
  %v547 = vadd.f32 %v541, %v533
  %548 = vst.msk [vmem:[#allocation2] sm:$0xff] %vm160, %v542
  %549 = vst.msk [vmem:[#allocation2 + $0x8] sm:$0xff] %vm160, %v543
  %550 = vst.msk [vmem:[#allocation2 + $0x10] sm:$0xff] %vm160, %v544
  %551 = vst.msk [vmem:[#allocation2 + $0x18] sm:$0xff] %vm160, %v545
  %552 = vst.msk [vmem:[#allocation2 + $0x20] sm:$0xff] %vm160, %v546
  %553 = vst.msk [vmem:[#allocation2 + $0x28] sm:$0xf] %vm166, %v547
  %v554 = vld [vmem:[%s0] sm:$0x8]
  %v555 = vld [vmem:[%s0 + $0x4] sm:$0xf]
  %v556 = vld [vmem:[%s0 + $0x8] sm:$0xf]
  %v557 = vld [vmem:[%s0 + $0xc] sm:$0xf]
  %v558 = vld [vmem:[%s0 + $0x10] sm:$0xf]
  %v559 = vld [vmem:[%s0 + $0x14] sm:$0xf]
  %v560 = vld [vmem:[%s0 + $0x18] sm:$0x1]
  %v561 = vld [vmem:[%s1 + $0xc0] sm:$0xf]
  %v562 = vld [vmem:[%s1 + $0xc4] sm:$0xf]
  %v563 = vld [vmem:[%s1 + $0xc8] sm:$0xf]
  %v564 = vld [vmem:[%s1 + $0xcc] sm:$0xf]
  %v565 = vld [vmem:[%s1 + $0xd0] sm:$0xf]
  %v566 = vld [vmem:[%s1 + $0xd4] sm:$0xf]
  %v567 = vld [vmem:[%s1 + $0xd8] sm:$0xf]
  %v568 = vld [vmem:[%s1 + $0xdc] sm:$0xf]
  %v569 = vld [vmem:[%s1 + $0xe0] sm:$0xf]
  %v570 = vld [vmem:[%s1 + $0xe4] sm:$0xf]
  %v571 = vld [vmem:[%s1 + $0xe8] sm:$0xf]
  %v572 = vld [vmem:[%s1 + $0xec] sm:$0xf]
  %v573 = vld [vmem:[%s1 + $0xf0] sm:$0xf]
  %v574 = vld [vmem:[%s1 + $0xf4] sm:$0xf]
  %v575 = vld [vmem:[%s1 + $0xf8] sm:$0xf]
  %v576 = vld [vmem:[%s1 + $0xfc] sm:$0xf]
  %v584 = vunpack.c.l.b16 %v554
  %v585 = vunpack.c.l.b16 %v555
  %v586 = vunpack.c.l.b16 %v556
  %v587 = vunpack.c.l.b16 %v557
  %v588 = vunpack.c.l.b16 %v558
  %v589 = vunpack.c.l.b16 %v559
  %v590 = vunpack.c.l.b16 %v560
  %v591 = vpack.c.b16 %v585, %v584
  %v592 = vpack.c.b16 %v587, %v586
  %v593 = vpack.c.b16 %v589, %v588
  %v594 = vpack.c.b16 %v590, %v590
  %vm595 = vcmask 1044480
  %v596 = vrot.slane %v591, 3
  %v597 = vrot.slane %v592, 3
  %v598 = vsel %vm595, %v596, %v597
  %v599 = vrot.slane %v593, 3
  %v600 = vsel %vm595, %v597, %v599
  %v601 = vrot.slane %v594, 3
  %v602 = vsel %vm595, %v599, %v601
  %v622 = vunpack.c.l.b16 %v561
  %v623 = vunpack.c.l.b16 %v562
  %v624 = vunpack.c.l.b16 %v563
  %v625 = vunpack.c.l.b16 %v564
  %v626 = vunpack.c.l.b16 %v565
  %v627 = vunpack.c.l.b16 %v566
  %v628 = vunpack.c.l.b16 %v567
  %v629 = vunpack.c.l.b16 %v568
  %v630 = vunpack.c.l.b16 %v569
  %v631 = vunpack.c.l.b16 %v570
  %v632 = vunpack.c.l.b16 %v571
  %v633 = vunpack.c.l.b16 %v572
  %v634 = vunpack.c.l.b16 %v573
  %v635 = vunpack.c.l.b16 %v574
  %v636 = vunpack.c.l.b16 %v575
  %v637 = vunpack.c.l.b16 %v576
  %v638 = vpack.c.b16 %v623, %v622
  %v639 = vpack.c.b16 %v625, %v624
  %v640 = vpack.c.b16 %v627, %v626
  %v641 = vpack.c.b16 %v629, %v628
  %v642 = vpack.c.b16 %v631, %v630
  %v643 = vpack.c.b16 %v633, %v632
  %v644 = vpack.c.b16 %v635, %v634
  %v645 = vpack.c.b16 %v637, %v636
  %654 = vmatprep.subr.bf16.mxu0 0
  %655 = vmatpush1.bf16.msra.mxu0 %v638
  %656 = vmatprep.subr.bf16.mxu0 0
  %657 = vmatpush1.bf16.msra.mxu0 %v639
  %658 = vmatprep.subr.bf16.mxu0 0
  %659 = vmatpush1.bf16.msra.mxu0 %v640
  %660 = vmatprep.subr.bf16.mxu0 0
  %661 = vmatpush1.bf16.msra.mxu0 %v641
  %662 = vmatprep.subr.bf16.mxu0 0
  %663 = vmatpush1.bf16.msra.mxu0 %v642
  %664 = vmatprep.subr.bf16.mxu0 0
  %665 = vmatpush1.bf16.msra.mxu0 %v643
  %666 = vmatprep.subr.bf16.mxu0 0
  %667 = vmatpush1.bf16.msra.mxu0 %v644
  %668 = vmatprep.subr.bf16.mxu0 0
  %669 = vmatpush1.bf16.msra.mxu0 %v645
  %670 = vmatprep.subr.bf16.mxu0 0
  %671 = vmatpush1.bf16.msra.mxu0 0
  %672 = vmatprep.subr.bf16.mxu0 0
  %673 = vmatpush1.bf16.msra.mxu0 0
  %674 = vmatprep.subr.bf16.mxu0 0
  %675 = vmatpush1.bf16.msra.mxu0 0
  %676 = vmatprep.subr.bf16.mxu0 0
  %677 = vmatpush1.bf16.msra.mxu0 0
  %678 = vmatprep.subr.bf16.mxu0 0
  %679 = vmatpush1.bf16.msra.mxu0 0
  %680 = vmatprep.subr.bf16.mxu0 0
  %681 = vmatpush1.bf16.msra.mxu0 0
  %682 = vmatprep.subr.bf16.mxu0 0
  %683 = vmatpush1.bf16.msra.mxu0 0
  %684 = vmatprep.subr.bf16.mxu0 0
  %685 = vmatpush1.bf16.msra.mxu0 0
  %686 = vmatprep.mubr.bf16.mxu0 0
  %687 = vmatmul.mubr.bf16.gmra.mrb[0].mxu0 %v598
  %v688 = vpop.f32.mrb[0].mxu0
  %v689 = vadd.f32 0.0, %v688
  %v690 = vpop.f32.mrb[0].mxu0
  %v691 = vpop.f32.mrb[0].mxu0
  %v692 = vadd.f32 0.0, %v691
  %v693 = vpop.f32.mrb[0].mxu0
  %694 = vmatprep.mubr.bf16.mxu0 0
  %695 = vmatmul.mubr.bf16.gmra.mrb[0].mxu0 %v600
  %v696 = vpop.f32.mrb[0].mxu0
  %v697 = vadd.f32 0.0, %v696
  %v698 = vpop.f32.mrb[0].mxu0
  %v699 = vpop.f32.mrb[0].mxu0
  %v700 = vadd.f32 0.0, %v699
  %v701 = vpop.f32.mrb[0].mxu0
  %702 = vmatprep.mubr.bf16.mxu0 0
  %703 = vmatmul.mubr.bf16.gmra.mrb[0].mxu0 %v602
  %v704 = vpop.f32.mrb[0].mxu0
  %v705 = vadd.f32 0.0, %v704
  %v706 = vpop.f32.mrb[0].mxu0
  %v707 = vpop.f32.mrb[0].mxu0
  %v708 = vadd.f32 0.0, %v707
  %v709 = vpop.f32.mrb[0].mxu0
  %710 = vdwg.mxu0
  %v711 = vld [vmem:[#allocation2] sm:$0xff]
  %v712 = vld [vmem:[#allocation2 + $0x8] sm:$0xff]
  %v713 = vld [vmem:[#allocation2 + $0x10] sm:$0xff]
  %v714 = vld [vmem:[#allocation2 + $0x18] sm:$0xff]
  %v715 = vld [vmem:[#allocation2 + $0x20] sm:$0xff]
  %v716 = vld [vmem:[#allocation2 + $0x28] sm:$0xf]
  %v717 = vadd.f32 %v711, %v689
  %v718 = vadd.f32 %v712, %v692
  %v719 = vadd.f32 %v713, %v697
  %v720 = vadd.f32 %v714, %v700
  %v721 = vadd.f32 %v715, %v705
  %v722 = vadd.f32 %v716, %v708
  %723 = vst.msk [vmem:[#allocation2] sm:$0xff] %vm160, %v717
  %724 = vst.msk [vmem:[#allocation2 + $0x8] sm:$0xff] %vm160, %v718
  %725 = vst.msk [vmem:[#allocation2 + $0x10] sm:$0xff] %vm160, %v719
  %726 = vst.msk [vmem:[#allocation2 + $0x18] sm:$0xff] %vm160, %v720
  %727 = vst.msk [vmem:[#allocation2 + $0x20] sm:$0xff] %vm160, %v721
  %728 = vst.msk [vmem:[#allocation2 + $0x28] sm:$0xf] %vm166, %v722
  %v729 = vld [vmem:[%s2] sm:$0x1]
  %v730 = vld [vmem:[#allocation2] sm:$0xf]
  %v732 = vlaneseq
  %v733 = vshrl.u32 %v732, 7
  %v734 = vsub.s32 0, %v733
  %v735 = vrot.slane %v729, %v734
  %v737 = vadd.f32 %v730, %v735
  %v738 = vmax.f32 %v737, 0.0
  %v739 = vpack.c.bf16 %v738, %v738
  %vm740 = vcmask 517120
  %741 = vst.msk [vmem:[%s3] sm:$0x3] %vm740, %v739
  %v742 = vld [vmem:[#allocation2 + $0x5] sm:$0xf]
  %v743 = vadd.f32 %v742, %v735
  %v744 = vmax.f32 %v743, 0.0
  %v745 = vpack.c.bf16 %v744, %v744
  %s746 = scalar_lea.vmem %s3, 2
  %747 = vst.msk [vmem:[%s746] sm:$0x3] %vm740, %v745
  %v748 = vld [vmem:[#allocation2 + $0xa] sm:$0xf]
  %v749 = vadd.f32 %v748, %v735
  %v750 = vmax.f32 %v749, 0.0
  %v751 = vpack.c.bf16 %v750, %v750
  %s752 = scalar_lea.vmem %s3, 4
  %753 = vst.msk [vmem:[%s752] sm:$0x3] %vm740, %v751
  %v754 = vld [vmem:[#allocation2 + $0xf] sm:$0xf]
  %v755 = vadd.f32 %v754, %v735
  %v756 = vmax.f32 %v755, 0.0
  %v757 = vpack.c.bf16 %v756, %v756
  %s758 = scalar_lea.vmem %s3, 6
  %759 = vst.msk [vmem:[%s758] sm:$0x3] %vm740, %v757
  %v760 = vld [vmem:[#allocation2 + $0x19] sm:$0xf]
  %v761 = vadd.f32 %v760, %v735
  %v762 = vmax.f32 %v761, 0.0
  %v763 = vpack.c.bf16 %v762, %v762
  %s764 = scalar_lea.vmem %s3, 8
  %765 = vst.msk [vmem:[%s764] sm:$0x3] %vm740, %v763
  %v766 = vld [vmem:[#allocation2 + $0x1e] sm:$0xf]
  %v767 = vadd.f32 %v766, %v735
  %v768 = vmax.f32 %v767, 0.0
  %v769 = vpack.c.bf16 %v768, %v768
  %s770 = scalar_lea.vmem %s3, 10
  %771 = vst.msk [vmem:[%s770] sm:$0x3] %vm740, %v769
  %v772 = vld [vmem:[#allocation2 + $0x23] sm:$0xf]
  %v773 = vadd.f32 %v772, %v735
  %v774 = vmax.f32 %v773, 0.0
  %v775 = vpack.c.bf16 %v774, %v774
  %s776 = scalar_lea.vmem %s3, 12
  %777 = vst.msk [vmem:[%s776] sm:$0x3] %vm740, %v775
  %v778 = vld [vmem:[#allocation2 + $0x28] sm:$0xf]
  %v779 = vadd.f32 %v778, %v735
  %v780 = vmax.f32 %v779, 0.0
  %v781 = vpack.c.bf16 %v780, %v780
  %s782 = scalar_lea.vmem %s3, 14
  %783 = vst.msk [vmem:[%s782] sm:$0x3] %vm740, %v781
  // Predicated region
  $region14: #{cat_q_conv_net_forward.5} parent=0 // pred_check
    _
  $region15: #{cat_q_conv_net_forward.5} parent=0 // pred_check_branch
    %785 = sbr.rel (0) target = $region17
  $region16: #{cat_q_conv_net_forward.5} parent=0 // pred_region
    _
  $region17: #{cat_q_conv_net_forward.5} parent=0 // pred_fallthru
    _
  // Predicated region
  $region18: #{cat_q_conv_net_forward.5} parent=0 // pred_check
    _
  $region19: #{cat_q_conv_net_forward.5} parent=0 // pred_check_branch
    %787 = sbr.rel (0) target = $region21
  $region20: #{cat_q_conv_net_forward.5} parent=0 // pred_region
    _
  $region21: #{cat_q_conv_net_forward.5} parent=0 // pred_fallthru
    _

// kernel: cat_q_conv_net_forward.6
$region0: #{cat_q_conv_net_forward.6}
  #allocation0 [shape = 'u32[]', space=smem, size = 0x4, offset = 0x4, fixed_abs, tag = 'smem constant byte address 0x4 - core index']
  #allocation1 [shape = 'u32[144,128]{1,0:T(1,128)}', space=vmem, size = 0x12000, scoped, tag = 'internal scratch']
  #allocation2 [shape = 'f32[22,64]{1,0:T(8,128)}', space=vmem, size = 0x3000, scoped, tag = 'scratch operand']
  %s0 = inlined_call_operand.vmem [shape: bf16[32,64], index: 0, kind: input, shape index: {}]
  %s1 = inlined_call_operand.vmem [shape: bf16[576,64], index: 1, kind: input, shape index: {}]
  %s2 = inlined_call_operand.vmem [shape: f32[1,64], index: 2, kind: input, shape index: {}]
  %s3 = inlined_call_operand.vmem [shape: bf16[2,2,2,64], index: 3, kind: output, shape index: {}]
  %s4 = sld [smem:[#allocation0]]
  $region22: #{cat_q_conv_net_forward.6} parent=0
    _
  %s6 = ssub.s32 1, %s4
  %s7 = scalar_select 0, %s6, %s4
  // Predicated region
  $region2: #{cat_q_conv_net_forward.6} parent=0 // pred_check
    _
  $region3: #{cat_q_conv_net_forward.6} parent=0 // pred_check_branch
    %9 = sbr.rel (0) target = $region5
  $region4: #{cat_q_conv_net_forward.6} parent=0 // pred_region
    _
  $region5: #{cat_q_conv_net_forward.6} parent=0 // pred_fallthru
    _
  // Predicated region
  $region6: #{cat_q_conv_net_forward.6} parent=0 // pred_check
    _
  $region7: #{cat_q_conv_net_forward.6} parent=0 // pred_check_branch
    %11 = sbr.rel (0) target = $region9
  $region8: #{cat_q_conv_net_forward.6} parent=0 // pred_region
    _
  $region9: #{cat_q_conv_net_forward.6} parent=0 // pred_fallthru
    _
  // Predicated region
  $region10: #{cat_q_conv_net_forward.6} parent=0 // pred_check
    _
  $region11: #{cat_q_conv_net_forward.6} parent=0 // pred_check_branch
    %13 = sbr.rel (0) target = $region13
  $region12: #{cat_q_conv_net_forward.6} parent=0 // pred_region
    _
  $region13: #{cat_q_conv_net_forward.6} parent=0 // pred_fallthru
    _
  %v15 = vld [vmem:[%s0] sm:$0xf]
  %v16 = vld [vmem:[%s0 + $0x4] sm:$0xf]
  %v17 = vld [vmem:[%s0 + $0x8] sm:$0x7]
  %v18 = vld [vmem:[%s1] sm:$0xf]
  %v19 = vld [vmem:[%s1 + $0x4] sm:$0xf]
  %v20 = vld [vmem:[%s1 + $0x8] sm:$0xf]
  %v21 = vld [vmem:[%s1 + $0xc] sm:$0xf]
  %v22 = vld [vmem:[%s1 + $0x10] sm:$0xf]
  %v23 = vld [vmem:[%s1 + $0x14] sm:$0xf]
  %v24 = vld [vmem:[%s1 + $0x18] sm:$0xf]
  %v25 = vld [vmem:[%s1 + $0x1c] sm:$0xf]
  %v29 = vunpack.c.l.b16 %v15
  %v30 = vunpack.c.l.b16 %v16
  %v31 = vunpack.c.l.b16 %v17
  %v32 = vpack.c.b16 %v30, %v29
  %v33 = vpack.c.b16 %v31, %v31
  %v42 = vunpack.c.l.b16 %v18
  %v43 = vunpack.c.l.b16 %v19
  %v44 = vunpack.c.l.b16 %v20
  %v45 = vunpack.c.l.b16 %v21
  %v46 = vunpack.c.l.b16 %v22
  %v47 = vunpack.c.l.b16 %v23
  %v48 = vunpack.c.l.b16 %v24
  %v49 = vunpack.c.l.b16 %v25
  %v50 = vpack.c.b16 %v43, %v42
  %v51 = vpack.c.b16 %v45, %v44
  %v52 = vpack.c.b16 %v47, %v46
  %v53 = vpack.c.b16 %v49, %v48
  %vm58 = vcmask 523264
  %v60 = vsel %vm58, %v32, 0
  %v63 = vsel %vm58, %v33, 0
  %65 = vmatprep.subr.bf16.mxu0 0
  %66 = vmatpush1.bf16.msra.mxu0 %v50
  %67 = vmatprep.subr.bf16.mxu0 0
  %68 = vmatpush1.bf16.msra.mxu0 %v51
  %69 = vmatprep.subr.bf16.mxu0 0
  %70 = vmatpush1.bf16.msra.mxu0 %v52
  %71 = vmatprep.subr.bf16.mxu0 0
  %72 = vmatpush1.bf16.msra.mxu0 %v53
  %73 = vmatprep.subr.bf16.mxu0 0
  %74 = vmatpush1.bf16.msra.mxu0 0
  %75 = vmatprep.subr.bf16.mxu0 0
  %76 = vmatpush1.bf16.msra.mxu0 0
  %77 = vmatprep.subr.bf16.mxu0 0
  %78 = vmatpush1.bf16.msra.mxu0 0
  %79 = vmatprep.subr.bf16.mxu0 0
  %80 = vmatpush1.bf16.msra.mxu0 0
  %81 = vmatprep.subr.bf16.mxu0 0
  %82 = vmatpush1.bf16.msra.mxu0 0
  %83 = vmatprep.subr.bf16.mxu0 0
  %84 = vmatpush1.bf16.msra.mxu0 0
  %85 = vmatprep.subr.bf16.mxu0 0
  %86 = vmatpush1.bf16.msra.mxu0 0
  %87 = vmatprep.subr.bf16.mxu0 0
  %88 = vmatpush1.bf16.msra.mxu0 0
  %89 = vmatprep.subr.bf16.mxu0 0
  %90 = vmatpush1.bf16.msra.mxu0 0
  %91 = vmatprep.subr.bf16.mxu0 0
  %92 = vmatpush1.bf16.msra.mxu0 0
  %93 = vmatprep.subr.bf16.mxu0 0
  %94 = vmatpush1.bf16.msra.mxu0 0
  %95 = vmatprep.subr.bf16.mxu0 0
  %96 = vmatpush1.bf16.msra.mxu0 0
  %97 = vmatprep.mubr.bf16.mxu0 0
  %98 = vmatmul.mubr.bf16.gmra.mrb[0].mxu0 %v60
  %v99 = vpop.f32.mrb[0].mxu0
  %v100 = vadd.f32 0.0, %v99
  %v101 = vpop.f32.mrb[0].mxu0
  %v102 = vpop.f32.mrb[0].mxu0
  %v103 = vadd.f32 0.0, %v102
  %v104 = vpop.f32.mrb[0].mxu0
  %105 = vmatprep.mubr.bf16.mxu0 0
  %106 = vmatmul.mubr.bf16.gmra.mrb[0].mxu0 %v63
  %v107 = vpop.f32.mrb[0].mxu0
  %v108 = vadd.f32 0.0, %v107
  %v109 = vpop.f32.mrb[0].mxu0
  %v110 = vpop.f32.mrb[0].mxu0
  %v111 = vpop.f32.mrb[0].mxu0
  %112 = vdwg.mxu0
  %113 = vst.msk [vmem:[#allocation2] sm:$0xff] %vm58, %v100
  %114 = vst.msk [vmem:[#allocation2 + $0x8] sm:$0xff] %vm58, %v103
  %vm115 = vcmask 521216
  %116 = vst.msk [vmem:[#allocation2 + $0x10] sm:$0x3f] %vm115, %v108
  %v117 = vld [vmem:[%s0] sm:$0xf]
  %v118 = vld [vmem:[%s0 + $0x4] sm:$0xf]
  %v119 = vld [vmem:[%s0 + $0x8] sm:$0xf]
  %v120 = vld [vmem:[%s1 + $0x20] sm:$0xf]
  %v121 = vld [vmem:[%s1 + $0x24] sm:$0xf]
  %v122 = vld [vmem:[%s1 + $0x28] sm:$0xf]
  %v123 = vld [vmem:[%s1 + $0x2c] sm:$0xf]
  %v124 = vld [vmem:[%s1 + $0x30] sm:$0xf]
  %v125 = vld [vmem:[%s1 + $0x34] sm:$0xf]
  %v126 = vld [vmem:[%s1 + $0x38] sm:$0xf]
  %v127 = vld [vmem:[%s1 + $0x3c] sm:$0xf]
  %v131 = vunpack.c.l.b16 %v117
  %v132 = vunpack.c.l.b16 %v118
  %v133 = vunpack.c.l.b16 %v119
  %v134 = vpack.c.b16 %v132, %v131
  %v135 = vpack.c.b16 %v133, %v133
  %vm136 = vsmask.f32 7424
  %v138 = vshrl.u32 %v134, 16
  %v140 = vshll.u32 %v134, 16
  %v142 = vrot.slane %v140, 1
  %v143 = vor.u32 %v138, %v142
  %v145 = vshll.u32 %v135, 16
  %v147 = vrot.slane %v145, 1
  %v148 = vsel %vm136, %v143, %v147
  %v149 = vshrl.u32 %v135, 16
  %v151 = vor.u32 %v149, %v147
  %v160 = vunpack.c.l.b16 %v120
  %v161 = vunpack.c.l.b16 %v121
  %v162 = vunpack.c.l.b16 %v122
  %v163 = vunpack.c.l.b16 %v123
  %v164 = vunpack.c.l.b16 %v124
  %v165 = vunpack.c.l.b16 %v125
  %v166 = vunpack.c.l.b16 %v126
  %v167 = vunpack.c.l.b16 %v127
  %v168 = vpack.c.b16 %v161, %v160
  %v169 = vpack.c.b16 %v163, %v162
  %v170 = vpack.c.b16 %v165, %v164
  %v171 = vpack.c.b16 %v167, %v166
  %v177 = vsel %vm58, %v148, 0
  %v180 = vsel %vm58, %v151, 0
  %182 = vmatprep.subr.bf16.mxu0 0
  %183 = vmatpush1.bf16.msra.mxu0 %v168
  %184 = vmatprep.subr.bf16.mxu0 0
  %185 = vmatpush1.bf16.msra.mxu0 %v169
  %186 = vmatprep.subr.bf16.mxu0 0
  %187 = vmatpush1.bf16.msra.mxu0 %v170
  %188 = vmatprep.subr.bf16.mxu0 0
  %189 = vmatpush1.bf16.msra.mxu0 %v171
  %190 = vmatprep.subr.bf16.mxu0 0
  %191 = vmatpush1.bf16.msra.mxu0 0
  %192 = vmatprep.subr.bf16.mxu0 0
  %193 = vmatpush1.bf16.msra.mxu0 0
  %194 = vmatprep.subr.bf16.mxu0 0
  %195 = vmatpush1.bf16.msra.mxu0 0
  %196 = vmatprep.subr.bf16.mxu0 0
  %197 = vmatpush1.bf16.msra.mxu0 0
  %198 = vmatprep.subr.bf16.mxu0 0
  %199 = vmatpush1.bf16.msra.mxu0 0
  %200 = vmatprep.subr.bf16.mxu0 0
  %201 = vmatpush1.bf16.msra.mxu0 0
  %202 = vmatprep.subr.bf16.mxu0 0
  %203 = vmatpush1.bf16.msra.mxu0 0
  %204 = vmatprep.subr.bf16.mxu0 0
  %205 = vmatpush1.bf16.msra.mxu0 0
  %206 = vmatprep.subr.bf16.mxu0 0
  %207 = vmatpush1.bf16.msra.mxu0 0
  %208 = vmatprep.subr.bf16.mxu0 0
  %209 = vmatpush1.bf16.msra.mxu0 0
  %210 = vmatprep.subr.bf16.mxu0 0
  %211 = vmatpush1.bf16.msra.mxu0 0
  %212 = vmatprep.subr.bf16.mxu0 0
  %213 = vmatpush1.bf16.msra.mxu0 0
  %214 = vmatprep.mubr.bf16.mxu0 0
  %215 = vmatmul.mubr.bf16.gmra.mrb[0].mxu0 %v177
  %v216 = vpop.f32.mrb[0].mxu0
  %v217 = vadd.f32 0.0, %v216
  %v218 = vpop.f32.mrb[0].mxu0
  %v219 = vpop.f32.mrb[0].mxu0
  %v220 = vadd.f32 0.0, %v219
  %v221 = vpop.f32.mrb[0].mxu0
  %222 = vmatprep.mubr.bf16.mxu0 0
  %223 = vmatmul.mubr.bf16.gmra.mrb[0].mxu0 %v180
  %v224 = vpop.f32.mrb[0].mxu0
  %v225 = vadd.f32 0.0, %v224
  %v226 = vpop.f32.mrb[0].mxu0
  %v227 = vpop.f32.mrb[0].mxu0
  %v228 = vpop.f32.mrb[0].mxu0
  %229 = vdwg.mxu0
  %v230 = vld [vmem:[#allocation2] sm:$0xff]
  %v231 = vld [vmem:[#allocation2 + $0x8] sm:$0xff]
  %v232 = vld [vmem:[#allocation2 + $0x10] sm:$0x3f]
  %v233 = vadd.f32 %v230, %v217
  %v234 = vadd.f32 %v231, %v220
  %v235 = vadd.f32 %v232, %v225
  %236 = vst.msk [vmem:[#allocation2] sm:$0xff] %vm58, %v233
  %237 = vst.msk [vmem:[#allocation2 + $0x8] sm:$0xff] %vm58, %v234
  %238 = vst.msk [vmem:[#allocation2 + $0x10] sm:$0x3f] %vm115, %v235
  %v239 = vld [vmem:[%s0] sm:$0xe]
  %v240 = vld [vmem:[%s0 + $0x4] sm:$0xf]
  %v241 = vld [vmem:[%s0 + $0x8] sm:$0xf]
  %v242 = vld [vmem:[%s1 + $0x40] sm:$0xf]
  %v243 = vld [vmem:[%s1 + $0x44] sm:$0xf]
  %v244 = vld [vmem:[%s1 + $0x48] sm:$0xf]
  %v245 = vld [vmem:[%s1 + $0x4c] sm:$0xf]
  %v246 = vld [vmem:[%s1 + $0x50] sm:$0xf]
  %v247 = vld [vmem:[%s1 + $0x54] sm:$0xf]
  %v248 = vld [vmem:[%s1 + $0x58] sm:$0xf]
  %v249 = vld [vmem:[%s1 + $0x5c] sm:$0xf]
  %v253 = vunpack.c.l.b16 %v239
  %v254 = vunpack.c.l.b16 %v240
  %v255 = vunpack.c.l.b16 %v241
  %v256 = vpack.c.b16 %v254, %v253
  %v257 = vpack.c.b16 %v255, %v255
  %vm258 = vcmask 1046528
  %v259 = vrot.slane %v256, 1
  %v260 = vrot.slane %v257, 1
  %v261 = vsel %vm258, %v259, %v260
  %v270 = vunpack.c.l.b16 %v242
  %v271 = vunpack.c.l.b16 %v243
  %v272 = vunpack.c.l.b16 %v244
  %v273 = vunpack.c.l.b16 %v245
  %v274 = vunpack.c.l.b16 %v246
  %v275 = vunpack.c.l.b16 %v247
  %v276 = vunpack.c.l.b16 %v248
  %v277 = vunpack.c.l.b16 %v249
  %v278 = vpack.c.b16 %v271, %v270
  %v279 = vpack.c.b16 %v273, %v272
  %v280 = vpack.c.b16 %v275, %v274
  %v281 = vpack.c.b16 %v277, %v276
  %v287 = vsel %vm58, %v261, 0
  %v290 = vsel %vm58, %v260, 0
  %292 = vmatprep.subr.bf16.mxu0 0
  %293 = vmatpush1.bf16.msra.mxu0 %v278
  %294 = vmatprep.subr.bf16.mxu0 0
  %295 = vmatpush1.bf16.msra.mxu0 %v279
  %296 = vmatprep.subr.bf16.mxu0 0
  %297 = vmatpush1.bf16.msra.mxu0 %v280
  %298 = vmatprep.subr.bf16.mxu0 0
  %299 = vmatpush1.bf16.msra.mxu0 %v281
  %300 = vmatprep.subr.bf16.mxu0 0
  %301 = vmatpush1.bf16.msra.mxu0 0
  %302 = vmatprep.subr.bf16.mxu0 0
  %303 = vmatpush1.bf16.msra.mxu0 0
  %304 = vmatprep.subr.bf16.mxu0 0
  %305 = vmatpush1.bf16.msra.mxu0 0
  %306 = vmatprep.subr.bf16.mxu0 0
  %307 = vmatpush1.bf16.msra.mxu0 0
  %308 = vmatprep.subr.bf16.mxu0 0
  %309 = vmatpush1.bf16.msra.mxu0 0
  %310 = vmatprep.subr.bf16.mxu0 0
  %311 = vmatpush1.bf16.msra.mxu0 0
  %312 = vmatprep.subr.bf16.mxu0 0
  %313 = vmatpush1.bf16.msra.mxu0 0
  %314 = vmatprep.subr.bf16.mxu0 0
  %315 = vmatpush1.bf16.msra.mxu0 0
  %316 = vmatprep.subr.bf16.mxu0 0
  %317 = vmatpush1.bf16.msra.mxu0 0
  %318 = vmatprep.subr.bf16.mxu0 0
  %319 = vmatpush1.bf16.msra.mxu0 0
  %320 = vmatprep.subr.bf16.mxu0 0
  %321 = vmatpush1.bf16.msra.mxu0 0
  %322 = vmatprep.subr.bf16.mxu0 0
  %323 = vmatpush1.bf16.msra.mxu0 0
  %324 = vmatprep.mubr.bf16.mxu0 0
  %325 = vmatmul.mubr.bf16.gmra.mrb[0].mxu0 %v287
  %v326 = vpop.f32.mrb[0].mxu0
  %v327 = vadd.f32 0.0, %v326
  %v328 = vpop.f32.mrb[0].mxu0
  %v329 = vpop.f32.mrb[0].mxu0
  %v330 = vadd.f32 0.0, %v329
  %v331 = vpop.f32.mrb[0].mxu0
  %332 = vmatprep.mubr.bf16.mxu0 0
  %333 = vmatmul.mubr.bf16.gmra.mrb[0].mxu0 %v290
  %v334 = vpop.f32.mrb[0].mxu0
  %v335 = vadd.f32 0.0, %v334
  %v336 = vpop.f32.mrb[0].mxu0
  %v337 = vpop.f32.mrb[0].mxu0
  %v338 = vpop.f32.mrb[0].mxu0
  %339 = vdwg.mxu0
  %v340 = vld [vmem:[#allocation2] sm:$0xff]
  %v341 = vld [vmem:[#allocation2 + $0x8] sm:$0xff]
  %v342 = vld [vmem:[#allocation2 + $0x10] sm:$0x3f]
  %v343 = vadd.f32 %v340, %v327
  %v344 = vadd.f32 %v341, %v330
  %v345 = vadd.f32 %v342, %v335
  %346 = vst.msk [vmem:[#allocation2] sm:$0xff] %vm58, %v343
  %347 = vst.msk [vmem:[#allocation2 + $0x8] sm:$0xff] %vm58, %v344
  %348 = vst.msk [vmem:[#allocation2 + $0x10] sm:$0x3f] %vm115, %v345
  %v349 = vld [vmem:[%s0] sm:$0xc]
  %v350 = vld [vmem:[%s0 + $0x4] sm:$0xf]
  %v351 = vld [vmem:[%s0 + $0x8] sm:$0xf]
  %v352 = vld [vmem:[%s0 + $0xc] sm:$0x1]
  %v353 = vld [vmem:[%s1 + $0x60] sm:$0xf]
  %v354 = vld [vmem:[%s1 + $0x64] sm:$0xf]
  %v355 = vld [vmem:[%s1 + $0x68] sm:$0xf]
  %v356 = vld [vmem:[%s1 + $0x6c] sm:$0xf]
  %v357 = vld [vmem:[%s1 + $0x70] sm:$0xf]
  %v358 = vld [vmem:[%s1 + $0x74] sm:$0xf]
  %v359 = vld [vmem:[%s1 + $0x78] sm:$0xf]
  %v360 = vld [vmem:[%s1 + $0x7c] sm:$0xf]
  %v365 = vunpack.c.l.b16 %v349
  %v366 = vunpack.c.l.b16 %v350
  %v367 = vunpack.c.l.b16 %v351
  %v368 = vunpack.c.l.b16 %v352
  %v369 = vpack.c.b16 %v366, %v365
  %v370 = vpack.c.b16 %v368, %v367
  %vm371 = vcmask 1045504
  %v372 = vrot.slane %v369, 2
  %v373 = vrot.slane %v370, 2
  %v374 = vsel %vm371, %v372, %v373
  %v383 = vunpack.c.l.b16 %v353
  %v384 = vunpack.c.l.b16 %v354
  %v385 = vunpack.c.l.b16 %v355
  %v386 = vunpack.c.l.b16 %v356
  %v387 = vunpack.c.l.b16 %v357
  %v388 = vunpack.c.l.b16 %v358
  %v389 = vunpack.c.l.b16 %v359
  %v390 = vunpack.c.l.b16 %v360
  %v391 = vpack.c.b16 %v384, %v383
  %v392 = vpack.c.b16 %v386, %v385
  %v393 = vpack.c.b16 %v388, %v387
  %v394 = vpack.c.b16 %v390, %v389
  %v400 = vsel %vm58, %v374, 0
  %v403 = vsel %vm58, %v373, 0
  %405 = vmatprep.subr.bf16.mxu0 0
  %406 = vmatpush1.bf16.msra.mxu0 %v391
  %407 = vmatprep.subr.bf16.mxu0 0
  %408 = vmatpush1.bf16.msra.mxu0 %v392
  %409 = vmatprep.subr.bf16.mxu0 0
  %410 = vmatpush1.bf16.msra.mxu0 %v393
  %411 = vmatprep.subr.bf16.mxu0 0
  %412 = vmatpush1.bf16.msra.mxu0 %v394
  %413 = vmatprep.subr.bf16.mxu0 0
  %414 = vmatpush1.bf16.msra.mxu0 0
  %415 = vmatprep.subr.bf16.mxu0 0
  %416 = vmatpush1.bf16.msra.mxu0 0
  %417 = vmatprep.subr.bf16.mxu0 0
  %418 = vmatpush1.bf16.msra.mxu0 0
  %419 = vmatprep.subr.bf16.mxu0 0
  %420 = vmatpush1.bf16.msra.mxu0 0
  %421 = vmatprep.subr.bf16.mxu0 0
  %422 = vmatpush1.bf16.msra.mxu0 0
  %423 = vmatprep.subr.bf16.mxu0 0
  %424 = vmatpush1.bf16.msra.mxu0 0
  %425 = vmatprep.subr.bf16.mxu0 0
  %426 = vmatpush1.bf16.msra.mxu0 0
  %427 = vmatprep.subr.bf16.mxu0 0
  %428 = vmatpush1.bf16.msra.mxu0 0
  %429 = vmatprep.subr.bf16.mxu0 0
  %430 = vmatpush1.bf16.msra.mxu0 0
  %431 = vmatprep.subr.bf16.mxu0 0
  %432 = vmatpush1.bf16.msra.mxu0 0
  %433 = vmatprep.subr.bf16.mxu0 0
  %434 = vmatpush1.bf16.msra.mxu0 0
  %435 = vmatprep.subr.bf16.mxu0 0
  %436 = vmatpush1.bf16.msra.mxu0 0
  %437 = vmatprep.mubr.bf16.mxu0 0
  %438 = vmatmul.mubr.bf16.gmra.mrb[0].mxu0 %v400
  %v439 = vpop.f32.mrb[0].mxu0
  %v440 = vadd.f32 0.0, %v439
  %v441 = vpop.f32.mrb[0].mxu0
  %v442 = vpop.f32.mrb[0].mxu0
  %v443 = vadd.f32 0.0, %v442
  %v444 = vpop.f32.mrb[0].mxu0
  %445 = vmatprep.mubr.bf16.mxu0 0
  %446 = vmatmul.mubr.bf16.gmra.mrb[0].mxu0 %v403
  %v447 = vpop.f32.mrb[0].mxu0
  %v448 = vadd.f32 0.0, %v447
  %v449 = vpop.f32.mrb[0].mxu0
  %v450 = vpop.f32.mrb[0].mxu0
  %v451 = vpop.f32.mrb[0].mxu0
  %452 = vdwg.mxu0
  %v453 = vld [vmem:[#allocation2] sm:$0xff]
  %v454 = vld [vmem:[#allocation2 + $0x8] sm:$0xff]
  %v455 = vld [vmem:[#allocation2 + $0x10] sm:$0x3f]
  %v456 = vadd.f32 %v453, %v440
  %v457 = vadd.f32 %v454, %v443
  %v458 = vadd.f32 %v455, %v448
  %459 = vst.msk [vmem:[#allocation2] sm:$0xff] %vm58, %v456
  %460 = vst.msk [vmem:[#allocation2 + $0x8] sm:$0xff] %vm58, %v457
  %461 = vst.msk [vmem:[#allocation2 + $0x10] sm:$0x3f] %vm115, %v458
  %v462 = vld [vmem:[%s0] sm:$0xc]
  %v463 = vld [vmem:[%s0 + $0x4] sm:$0xf]
  %v464 = vld [vmem:[%s0 + $0x8] sm:$0xf]
  %v465 = vld [vmem:[%s0 + $0xc] sm:$0x3]
  %v466 = vld [vmem:[%s1 + $0x80] sm:$0xf]
  %v467 = vld [vmem:[%s1 + $0x84] sm:$0xf]
  %v468 = vld [vmem:[%s1 + $0x88] sm:$0xf]
  %v469 = vld [vmem:[%s1 + $0x8c] sm:$0xf]
  %v470 = vld [vmem:[%s1 + $0x90] sm:$0xf]
  %v471 = vld [vmem:[%s1 + $0x94] sm:$0xf]
  %v472 = vld [vmem:[%s1 + $0x98] sm:$0xf]
  %v473 = vld [vmem:[%s1 + $0x9c] sm:$0xf]
  %v478 = vunpack.c.l.b16 %v462
  %v479 = vunpack.c.l.b16 %v463
  %v480 = vunpack.c.l.b16 %v464
  %v481 = vunpack.c.l.b16 %v465
  %v482 = vpack.c.b16 %v479, %v478
  %v483 = vpack.c.b16 %v481, %v480
  %vm484 = vsmask.f32 5376
  %v486 = vshrl.u32 %v482, 16
  %v488 = vrot.slane %v486, 2
  %v489 = vshll.u32 %v482, 16
  %v491 = vrot.slane %v489, 3
  %v492 = vor.u32 %v488, %v491
  %v494 = vshrl.u32 %v483, 16
  %v496 = vrot.slane %v494, 2
  %v497 = vshll.u32 %v483, 16
  %v499 = vrot.slane %v497, 3
  %v500 = vor.u32 %v496, %v499
  %v501 = vsel %vm484, %v492, %v500
  %v510 = vunpack.c.l.b16 %v466
  %v511 = vunpack.c.l.b16 %v467
  %v512 = vunpack.c.l.b16 %v468
  %v513 = vunpack.c.l.b16 %v469
  %v514 = vunpack.c.l.b16 %v470
  %v515 = vunpack.c.l.b16 %v471
  %v516 = vunpack.c.l.b16 %v472
  %v517 = vunpack.c.l.b16 %v473
  %v518 = vpack.c.b16 %v511, %v510
  %v519 = vpack.c.b16 %v513, %v512
  %v520 = vpack.c.b16 %v515, %v514
  %v521 = vpack.c.b16 %v517, %v516
  %v527 = vsel %vm58, %v501, 0
  %v530 = vsel %vm58, %v500, 0
  %532 = vmatprep.subr.bf16.mxu0 0
  %533 = vmatpush1.bf16.msra.mxu0 %v518
  %534 = vmatprep.subr.bf16.mxu0 0
  %535 = vmatpush1.bf16.msra.mxu0 %v519
  %536 = vmatprep.subr.bf16.mxu0 0
  %537 = vmatpush1.bf16.msra.mxu0 %v520
  %538 = vmatprep.subr.bf16.mxu0 0
  %539 = vmatpush1.bf16.msra.mxu0 %v521
  %540 = vmatprep.subr.bf16.mxu0 0
  %541 = vmatpush1.bf16.msra.mxu0 0
  %542 = vmatprep.subr.bf16.mxu0 0
  %543 = vmatpush1.bf16.msra.mxu0 0
  %544 = vmatprep.subr.bf16.mxu0 0
  %545 = vmatpush1.bf16.msra.mxu0 0
  %546 = vmatprep.subr.bf16.mxu0 0
  %547 = vmatpush1.bf16.msra.mxu0 0
  %548 = vmatprep.subr.bf16.mxu0 0
  %549 = vmatpush1.bf16.msra.mxu0 0
  %550 = vmatprep.subr.bf16.mxu0 0
  %551 = vmatpush1.bf16.msra.mxu0 0
  %552 = vmatprep.subr.bf16.mxu0 0
  %553 = vmatpush1.bf16.msra.mxu0 0
  %554 = vmatprep.subr.bf16.mxu0 0
  %555 = vmatpush1.bf16.msra.mxu0 0
  %556 = vmatprep.subr.bf16.mxu0 0
  %557 = vmatpush1.bf16.msra.mxu0 0
  %558 = vmatprep.subr.bf16.mxu0 0
  %559 = vmatpush1.bf16.msra.mxu0 0
  %560 = vmatprep.subr.bf16.mxu0 0
  %561 = vmatpush1.bf16.msra.mxu0 0
  %562 = vmatprep.subr.bf16.mxu0 0
  %563 = vmatpush1.bf16.msra.mxu0 0
  %564 = vmatprep.mubr.bf16.mxu0 0
  %565 = vmatmul.mubr.bf16.gmra.mrb[0].mxu0 %v527
  %v566 = vpop.f32.mrb[0].mxu0
  %v567 = vadd.f32 0.0, %v566
  %v568 = vpop.f32.mrb[0].mxu0
  %v569 = vpop.f32.mrb[0].mxu0
  %v570 = vadd.f32 0.0, %v569
  %v571 = vpop.f32.mrb[0].mxu0
  %572 = vmatprep.mubr.bf16.mxu0 0
  %573 = vmatmul.mubr.bf16.gmra.mrb[0].mxu0 %v530
  %v574 = vpop.f32.mrb[0].mxu0
  %v575 = vadd.f32 0.0, %v574
  %v576 = vpop.f32.mrb[0].mxu0
  %v577 = vpop.f32.mrb[0].mxu0
  %v578 = vpop.f32.mrb[0].mxu0
  %579 = vdwg.mxu0
  %v580 = vld [vmem:[#allocation2] sm:$0xff]
  %v581 = vld [vmem:[#allocation2 + $0x8] sm:$0xff]
  %v582 = vld [vmem:[#allocation2 + $0x10] sm:$0x3f]
  %v583 = vadd.f32 %v580, %v567
  %v584 = vadd.f32 %v581, %v570
  %v585 = vadd.f32 %v582, %v575
  %586 = vst.msk [vmem:[#allocation2] sm:$0xff] %vm58, %v583
  %587 = vst.msk [vmem:[#allocation2 + $0x8] sm:$0xff] %vm58, %v584
  %588 = vst.msk [vmem:[#allocation2 + $0x10] sm:$0x3f] %vm115, %v585
  %v589 = vld [vmem:[%s0] sm:$0x8]
  %v590 = vld [vmem:[%s0 + $0x4] sm:$0xf]
  %v591 = vld [vmem:[%s0 + $0x8] sm:$0xf]
  %v592 = vld [vmem:[%s0 + $0xc] sm:$0x3]
  %v593 = vld [vmem:[%s1 + $0xa0] sm:$0xf]
  %v594 = vld [vmem:[%s1 + $0xa4] sm:$0xf]
  %v595 = vld [vmem:[%s1 + $0xa8] sm:$0xf]
  %v596 = vld [vmem:[%s1 + $0xac] sm:$0xf]
  %v597 = vld [vmem:[%s1 + $0xb0] sm:$0xf]
  %v598 = vld [vmem:[%s1 + $0xb4] sm:$0xf]
  %v599 = vld [vmem:[%s1 + $0xb8] sm:$0xf]
  %v600 = vld [vmem:[%s1 + $0xbc] sm:$0xf]
  %v605 = vunpack.c.l.b16 %v589
  %v606 = vunpack.c.l.b16 %v590
  %v607 = vunpack.c.l.b16 %v591
  %v608 = vunpack.c.l.b16 %v592
  %v609 = vpack.c.b16 %v606, %v605
  %v610 = vpack.c.b16 %v608, %v607
  %vm611 = vcmask 1044480
  %v612 = vrot.slane %v609, 3
  %v613 = vrot.slane %v610, 3
  %v614 = vsel %vm611, %v612, %v613
  %v623 = vunpack.c.l.b16 %v593
  %v624 = vunpack.c.l.b16 %v594
  %v625 = vunpack.c.l.b16 %v595
  %v626 = vunpack.c.l.b16 %v596
  %v627 = vunpack.c.l.b16 %v597
  %v628 = vunpack.c.l.b16 %v598
  %v629 = vunpack.c.l.b16 %v599
  %v630 = vunpack.c.l.b16 %v600
  %v631 = vpack.c.b16 %v624, %v623
  %v632 = vpack.c.b16 %v626, %v625
  %v633 = vpack.c.b16 %v628, %v627
  %v634 = vpack.c.b16 %v630, %v629
  %v640 = vsel %vm58, %v614, 0
  %v643 = vsel %vm58, %v613, 0
  %645 = vmatprep.subr.bf16.mxu0 0
  %646 = vmatpush1.bf16.msra.mxu0 %v631
  %647 = vmatprep.subr.bf16.mxu0 0
  %648 = vmatpush1.bf16.msra.mxu0 %v632
  %649 = vmatprep.subr.bf16.mxu0 0
  %650 = vmatpush1.bf16.msra.mxu0 %v633
  %651 = vmatprep.subr.bf16.mxu0 0
  %652 = vmatpush1.bf16.msra.mxu0 %v634
  %653 = vmatprep.subr.bf16.mxu0 0
  %654 = vmatpush1.bf16.msra.mxu0 0
  %655 = vmatprep.subr.bf16.mxu0 0
  %656 = vmatpush1.bf16.msra.mxu0 0
  %657 = vmatprep.subr.bf16.mxu0 0
  %658 = vmatpush1.bf16.msra.mxu0 0
  %659 = vmatprep.subr.bf16.mxu0 0
  %660 = vmatpush1.bf16.msra.mxu0 0
  %661 = vmatprep.subr.bf16.mxu0 0
  %662 = vmatpush1.bf16.msra.mxu0 0
  %663 = vmatprep.subr.bf16.mxu0 0
  %664 = vmatpush1.bf16.msra.mxu0 0
  %665 = vmatprep.subr.bf16.mxu0 0
  %666 = vmatpush1.bf16.msra.mxu0 0
  %667 = vmatprep.subr.bf16.mxu0 0
  %668 = vmatpush1.bf16.msra.mxu0 0
  %669 = vmatprep.subr.bf16.mxu0 0
  %670 = vmatpush1.bf16.msra.mxu0 0
  %671 = vmatprep.subr.bf16.mxu0 0
  %672 = vmatpush1.bf16.msra.mxu0 0
  %673 = vmatprep.subr.bf16.mxu0 0
  %674 = vmatpush1.bf16.msra.mxu0 0
  %675 = vmatprep.subr.bf16.mxu0 0
  %676 = vmatpush1.bf16.msra.mxu0 0
  %677 = vmatprep.mubr.bf16.mxu0 0
  %678 = vmatmul.mubr.bf16.gmra.mrb[0].mxu0 %v640
  %v679 = vpop.f32.mrb[0].mxu0
  %v680 = vadd.f32 0.0, %v679
  %v681 = vpop.f32.mrb[0].mxu0
  %v682 = vpop.f32.mrb[0].mxu0
  %v683 = vadd.f32 0.0, %v682
  %v684 = vpop.f32.mrb[0].mxu0
  %685 = vmatprep.mubr.bf16.mxu0 0
  %686 = vmatmul.mubr.bf16.gmra.mrb[0].mxu0 %v643
  %v687 = vpop.f32.mrb[0].mxu0
  %v688 = vadd.f32 0.0, %v687
  %v689 = vpop.f32.mrb[0].mxu0
  %v690 = vpop.f32.mrb[0].mxu0
  %v691 = vpop.f32.mrb[0].mxu0
  %692 = vdwg.mxu0
  %v693 = vld [vmem:[#allocation2] sm:$0xff]
  %v694 = vld [vmem:[#allocation2 + $0x8] sm:$0xff]
  %v695 = vld [vmem:[#allocation2 + $0x10] sm:$0x3f]
  %v696 = vadd.f32 %v693, %v680
  %v697 = vadd.f32 %v694, %v683
  %v698 = vadd.f32 %v695, %v688
  %699 = vst.msk [vmem:[#allocation2] sm:$0xff] %vm58, %v696
  %700 = vst.msk [vmem:[#allocation2 + $0x8] sm:$0xff] %vm58, %v697
  %701 = vst.msk [vmem:[#allocation2 + $0x10] sm:$0x3f] %vm115, %v698
  %v702 = vld [vmem:[%s0 + $0x4] sm:$0xf]
  %v703 = vld [vmem:[%s0 + $0x8] sm:$0xf]
  %v704 = vld [vmem:[%s0 + $0xc] sm:$0x7]
  %v705 = vld [vmem:[%s1 + $0xc0] sm:$0xf]
  %v706 = vld [vmem:[%s1 + $0xc4] sm:$0xf]
  %v707 = vld [vmem:[%s1 + $0xc8] sm:$0xf]
  %v708 = vld [vmem:[%s1 + $0xcc] sm:$0xf]
  %v709 = vld [vmem:[%s1 + $0xd0] sm:$0xf]
  %v710 = vld [vmem:[%s1 + $0xd4] sm:$0xf]
  %v711 = vld [vmem:[%s1 + $0xd8] sm:$0xf]
  %v712 = vld [vmem:[%s1 + $0xdc] sm:$0xf]
  %v716 = vunpack.c.l.b16 %v702
  %v717 = vunpack.c.l.b16 %v703
  %v718 = vunpack.c.l.b16 %v704
  %v719 = vpack.c.b16 %v717, %v716
  %v720 = vpack.c.b16 %v718, %v718
  %v729 = vunpack.c.l.b16 %v705
  %v730 = vunpack.c.l.b16 %v706
  %v731 = vunpack.c.l.b16 %v707
  %v732 = vunpack.c.l.b16 %v708
  %v733 = vunpack.c.l.b16 %v709
  %v734 = vunpack.c.l.b16 %v710
  %v735 = vunpack.c.l.b16 %v711
  %v736 = vunpack.c.l.b16 %v712
  %v737 = vpack.c.b16 %v730, %v729
  %v738 = vpack.c.b16 %v732, %v731
  %v739 = vpack.c.b16 %v734, %v733
  %v740 = vpack.c.b16 %v736, %v735
  %v746 = vsel %vm58, %v719, 0
  %v749 = vsel %vm58, %v720, 0
  %751 = vmatprep.subr.bf16.mxu0 0
  %752 = vmatpush1.bf16.msra.mxu0 %v737
  %753 = vmatprep.subr.bf16.mxu0 0
  %754 = vmatpush1.bf16.msra.mxu0 %v738
  %755 = vmatprep.subr.bf16.mxu0 0
  %756 = vmatpush1.bf16.msra.mxu0 %v739
  %757 = vmatprep.subr.bf16.mxu0 0
  %758 = vmatpush1.bf16.msra.mxu0 %v740
  %759 = vmatprep.subr.bf16.mxu0 0
  %760 = vmatpush1.bf16.msra.mxu0 0
  %761 = vmatprep.subr.bf16.mxu0 0
  %762 = vmatpush1.bf16.msra.mxu0 0
  %763 = vmatprep.subr.bf16.mxu0 0
  %764 = vmatpush1.bf16.msra.mxu0 0
  %765 = vmatprep.subr.bf16.mxu0 0
  %766 = vmatpush1.bf16.msra.mxu0 0
  %767 = vmatprep.subr.bf16.mxu0 0
  %768 = vmatpush1.bf16.msra.mxu0 0
  %769 = vmatprep.subr.bf16.mxu0 0
  %770 = vmatpush1.bf16.msra.mxu0 0
  %771 = vmatprep.subr.bf16.mxu0 0
  %772 = vmatpush1.bf16.msra.mxu0 0
  %773 = vmatprep.subr.bf16.mxu0 0
  %774 = vmatpush1.bf16.msra.mxu0 0
  %775 = vmatprep.subr.bf16.mxu0 0
  %776 = vmatpush1.bf16.msra.mxu0 0
  %777 = vmatprep.subr.bf16.mxu0 0
  %778 = vmatpush1.bf16.msra.mxu0 0
  %779 = vmatprep.subr.bf16.mxu0 0
  %780 = vmatpush1.bf16.msra.mxu0 0
  %781 = vmatprep.subr.bf16.mxu0 0
  %782 = vmatpush1.bf16.msra.mxu0 0
  %783 = vmatprep.mubr.bf16.mxu0 0
  %784 = vmatmul.mubr.bf16.gmra.mrb[0].mxu0 %v746
  %v785 = vpop.f32.mrb[0].mxu0
  %v786 = vadd.f32 0.0, %v785
  %v787 = vpop.f32.mrb[0].mxu0
  %v788 = vpop.f32.mrb[0].mxu0
  %v789 = vadd.f32 0.0, %v788
  %v790 = vpop.f32.mrb[0].mxu0
  %791 = vmatprep.mubr.bf16.mxu0 0
  %792 = vmatmul.mubr.bf16.gmra.mrb[0].mxu0 %v749
  %v793 = vpop.f32.mrb[0].mxu0
  %v794 = vadd.f32 0.0, %v793
  %v795 = vpop.f32.mrb[0].mxu0
  %v796 = vpop.f32.mrb[0].mxu0
  %v797 = vpop.f32.mrb[0].mxu0
  %798 = vdwg.mxu0
  %v799 = vld [vmem:[#allocation2] sm:$0xff]
  %v800 = vld [vmem:[#allocation2 + $0x8] sm:$0xff]
  %v801 = vld [vmem:[#allocation2 + $0x10] sm:$0x3f]
  %v802 = vadd.f32 %v799, %v786
  %v803 = vadd.f32 %v800, %v789
  %v804 = vadd.f32 %v801, %v794
  %805 = vst.msk [vmem:[#allocation2] sm:$0xff] %vm58, %v802
  %806 = vst.msk [vmem:[#allocation2 + $0x8] sm:$0xff] %vm58, %v803
  %807 = vst.msk [vmem:[#allocation2 + $0x10] sm:$0x3f] %vm115, %v804
  %v808 = vld [vmem:[%s0 + $0x4] sm:$0xf]
  %v809 = vld [vmem:[%s0 + $0x8] sm:$0xf]
  %v810 = vld [vmem:[%s0 + $0xc] sm:$0xf]
  %v811 = vld [vmem:[%s1 + $0xe0] sm:$0xf]
  %v812 = vld [vmem:[%s1 + $0xe4] sm:$0xf]
  %v813 = vld [vmem:[%s1 + $0xe8] sm:$0xf]
  %v814 = vld [vmem:[%s1 + $0xec] sm:$0xf]
  %v815 = vld [vmem:[%s1 + $0xf0] sm:$0xf]
  %v816 = vld [vmem:[%s1 + $0xf4] sm:$0xf]
  %v817 = vld [vmem:[%s1 + $0xf8] sm:$0xf]
  %v818 = vld [vmem:[%s1 + $0xfc] sm:$0xf]
  %v822 = vunpack.c.l.b16 %v808
  %v823 = vunpack.c.l.b16 %v809
  %v824 = vunpack.c.l.b16 %v810
  %v825 = vpack.c.b16 %v823, %v822
  %v826 = vpack.c.b16 %v824, %v824
  %v828 = vshrl.u32 %v825, 16
  %v830 = vshll.u32 %v825, 16
  %v832 = vrot.slane %v830, 1
  %v833 = vor.u32 %v828, %v832
  %v835 = vshll.u32 %v826, 16
  %v837 = vrot.slane %v835, 1
  %v838 = vsel %vm136, %v833, %v837
  %v839 = vshrl.u32 %v826, 16
  %v841 = vor.u32 %v839, %v837
  %v850 = vunpack.c.l.b16 %v811
  %v851 = vunpack.c.l.b16 %v812
  %v852 = vunpack.c.l.b16 %v813
  %v853 = vunpack.c.l.b16 %v814
  %v854 = vunpack.c.l.b16 %v815
  %v855 = vunpack.c.l.b16 %v816
  %v856 = vunpack.c.l.b16 %v817
  %v857 = vunpack.c.l.b16 %v818
  %v858 = vpack.c.b16 %v851, %v850
  %v859 = vpack.c.b16 %v853, %v852
  %v860 = vpack.c.b16 %v855, %v854
  %v861 = vpack.c.b16 %v857, %v856
  %v867 = vsel %vm58, %v838, 0
  %v870 = vsel %vm58, %v841, 0
  %872 = vmatprep.subr.bf16.mxu0 0
  %873 = vmatpush1.bf16.msra.mxu0 %v858
  %874 = vmatprep.subr.bf16.mxu0 0
  %875 = vmatpush1.bf16.msra.mxu0 %v859
  %876 = vmatprep.subr.bf16.mxu0 0
  %877 = vmatpush1.bf16.msra.mxu0 %v860
  %878 = vmatprep.subr.bf16.mxu0 0
  %879 = vmatpush1.bf16.msra.mxu0 %v861
  %880 = vmatprep.subr.bf16.mxu0 0
  %881 = vmatpush1.bf16.msra.mxu0 0
  %882 = vmatprep.subr.bf16.mxu0 0
  %883 = vmatpush1.bf16.msra.mxu0 0
  %884 = vmatprep.subr.bf16.mxu0 0
  %885 = vmatpush1.bf16.msra.mxu0 0
  %886 = vmatprep.subr.bf16.mxu0 0
  %887 = vmatpush1.bf16.msra.mxu0 0
  %888 = vmatprep.subr.bf16.mxu0 0
  %889 = vmatpush1.bf16.msra.mxu0 0
  %890 = vmatprep.subr.bf16.mxu0 0
  %891 = vmatpush1.bf16.msra.mxu0 0
  %892 = vmatprep.subr.bf16.mxu0 0
  %893 = vmatpush1.bf16.msra.mxu0 0
  %894 = vmatprep.subr.bf16.mxu0 0
  %895 = vmatpush1.bf16.msra.mxu0 0
  %896 = vmatprep.subr.bf16.mxu0 0
  %897 = vmatpush1.bf16.msra.mxu0 0
  %898 = vmatprep.subr.bf16.mxu0 0
  %899 = vmatpush1.bf16.msra.mxu0 0
  %900 = vmatprep.subr.bf16.mxu0 0
  %901 = vmatpush1.bf16.msra.mxu0 0
  %902 = vmatprep.subr.bf16.mxu0 0
  %903 = vmatpush1.bf16.msra.mxu0 0
  %904 = vmatprep.mubr.bf16.mxu0 0
  %905 = vmatmul.mubr.bf16.gmra.mrb[0].mxu0 %v867
  %v906 = vpop.f32.mrb[0].mxu0
  %v907 = vadd.f32 0.0, %v906
  %v908 = vpop.f32.mrb[0].mxu0
  %v909 = vpop.f32.mrb[0].mxu0
  %v910 = vadd.f32 0.0, %v909
  %v911 = vpop.f32.mrb[0].mxu0
  %912 = vmatprep.mubr.bf16.mxu0 0
  %913 = vmatmul.mubr.bf16.gmra.mrb[0].mxu0 %v870
  %v914 = vpop.f32.mrb[0].mxu0
  %v915 = vadd.f32 0.0, %v914
  %v916 = vpop.f32.mrb[0].mxu0
  %v917 = vpop.f32.mrb[0].mxu0
  %v918 = vpop.f32.mrb[0].mxu0
  %919 = vdwg.mxu0
  %v920 = vld [vmem:[#allocation2] sm:$0xff]
  %v921 = vld [vmem:[#allocation2 + $0x8] sm:$0xff]
  %v922 = vld [vmem:[#allocation2 + $0x10] sm:$0x3f]
  %v923 = vadd.f32 %v920, %v907
  %v924 = vadd.f32 %v921, %v910
  %v925 = vadd.f32 %v922, %v915
  %926 = vst.msk [vmem:[#allocation2] sm:$0xff] %vm58, %v923
  %927 = vst.msk [vmem:[#allocation2 + $0x8] sm:$0xff] %vm58, %v924
  %928 = vst.msk [vmem:[#allocation2 + $0x10] sm:$0x3f] %vm115, %v925
  %v929 = vld [vmem:[%s0 + $0x4] sm:$0xe]
  %v930 = vld [vmem:[%s0 + $0x8] sm:$0xf]
  %v931 = vld [vmem:[%s0 + $0xc] sm:$0xf]
  %v932 = vld [vmem:[%s1 + $0x100] sm:$0xf]
  %v933 = vld [vmem:[%s1 + $0x104] sm:$0xf]
  %v934 = vld [vmem:[%s1 + $0x108] sm:$0xf]
  %v935 = vld [vmem:[%s1 + $0x10c] sm:$0xf]
  %v936 = vld [vmem:[%s1 + $0x110] sm:$0xf]
  %v937 = vld [vmem:[%s1 + $0x114] sm:$0xf]
  %v938 = vld [vmem:[%s1 + $0x118] sm:$0xf]
  %v939 = vld [vmem:[%s1 + $0x11c] sm:$0xf]
  %v943 = vunpack.c.l.b16 %v929
  %v944 = vunpack.c.l.b16 %v930
  %v945 = vunpack.c.l.b16 %v931
  %v946 = vpack.c.b16 %v944, %v943
  %v947 = vpack.c.b16 %v945, %v945
  %v948 = vrot.slane %v946, 1
  %v949 = vrot.slane %v947, 1
  %v950 = vsel %vm258, %v948, %v949
  %v959 = vunpack.c.l.b16 %v932
  %v960 = vunpack.c.l.b16 %v933
  %v961 = vunpack.c.l.b16 %v934
  %v962 = vunpack.c.l.b16 %v935
  %v963 = vunpack.c.l.b16 %v936
  %v964 = vunpack.c.l.b16 %v937
  %v965 = vunpack.c.l.b16 %v938
  %v966 = vunpack.c.l.b16 %v939
  %v967 = vpack.c.b16 %v960, %v959
  %v968 = vpack.c.b16 %v962, %v961
  %v969 = vpack.c.b16 %v964, %v963
  %v970 = vpack.c.b16 %v966, %v965
  %v976 = vsel %vm58, %v950, 0
  %v979 = vsel %vm58, %v949, 0
  %981 = vmatprep.subr.bf16.mxu0 0
  %982 = vmatpush1.bf16.msra.mxu0 %v967
  %983 = vmatprep.subr.bf16.mxu0 0
  %984 = vmatpush1.bf16.msra.mxu0 %v968
  %985 = vmatprep.subr.bf16.mxu0 0
  %986 = vmatpush1.bf16.msra.mxu0 %v969
  %987 = vmatprep.subr.bf16.mxu0 0
  %988 = vmatpush1.bf16.msra.mxu0 %v970
  %989 = vmatprep.subr.bf16.mxu0 0
  %990 = vmatpush1.bf16.msra.mxu0 0
  %991 = vmatprep.subr.bf16.mxu0 0
  %992 = vmatpush1.bf16.msra.mxu0 0
  %993 = vmatprep.subr.bf16.mxu0 0
  %994 = vmatpush1.bf16.msra.mxu0 0
  %995 = vmatprep.subr.bf16.mxu0 0
  %996 = vmatpush1.bf16.msra.mxu0 0
  %997 = vmatprep.subr.bf16.mxu0 0
  %998 = vmatpush1.bf16.msra.mxu0 0
  %999 = vmatprep.subr.bf16.mxu0 0
  %1000 = vmatpush1.bf16.msra.mxu0 0
  %1001 = vmatprep.subr.bf16.mxu0 0
  %1002 = vmatpush1.bf16.msra.mxu0 0
  %1003 = vmatprep.subr.bf16.mxu0 0
  %1004 = vmatpush1.bf16.msra.mxu0 0
  %1005 = vmatprep.subr.bf16.mxu0 0
  %1006 = vmatpush1.bf16.msra.mxu0 0
  %1007 = vmatprep.subr.bf16.mxu0 0
  %1008 = vmatpush1.bf16.msra.mxu0 0
  %1009 = vmatprep.subr.bf16.mxu0 0
  %1010 = vmatpush1.bf16.msra.mxu0 0
  %1011 = vmatprep.subr.bf16.mxu0 0
  %1012 = vmatpush1.bf16.msra.mxu0 0
  %1013 = vmatprep.mubr.bf16.mxu0 0
  %1014 = vmatmul.mubr.bf16.gmra.mrb[0].mxu0 %v976
  %v1015 = vpop.f32.mrb[0].mxu0
  %v1016 = vadd.f32 0.0, %v1015
  %v1017 = vpop.f32.mrb[0].mxu0
  %v1018 = vpop.f32.mrb[0].mxu0
  %v1019 = vadd.f32 0.0, %v1018
  %v1020 = vpop.f32.mrb[0].mxu0
  %1021 = vmatprep.mubr.bf16.mxu0 0
  %1022 = vmatmul.mubr.bf16.gmra.mrb[0].mxu0 %v979
  %v1023 = vpop.f32.mrb[0].mxu0
  %v1024 = vadd.f32 0.0, %v1023
  %v1025 = vpop.f32.mrb[0].mxu0
  %v1026 = vpop.f32.mrb[0].mxu0
  %v1027 = vpop.f32.mrb[0].mxu0
  %1028 = vdwg.mxu0
  %v1029 = vld [vmem:[#allocation2] sm:$0xff]
  %v1030 = vld [vmem:[#allocation2 + $0x8] sm:$0xff]
  %v1031 = vld [vmem:[#allocation2 + $0x10] sm:$0x3f]
  %v1032 = vadd.f32 %v1029, %v1016
  %v1033 = vadd.f32 %v1030, %v1019
  %v1034 = vadd.f32 %v1031, %v1024
  %1035 = vst.msk [vmem:[#allocation2] sm:$0xff] %vm58, %v1032
  %1036 = vst.msk [vmem:[#allocation2 + $0x8] sm:$0xff] %vm58, %v1033
  %1037 = vst.msk [vmem:[#allocation2 + $0x10] sm:$0x3f] %vm115, %v1034
  %v1038 = vld [vmem:[%s2] sm:$0x1]
  %v1039 = vld [vmem:[#allocation2] sm:$0x3]
  %v1041 = vlaneseq
  %v1042 = vshrl.u32 %v1041, 7
  %v1043 = vsub.s32 0, %v1042
  %v1044 = vrot.slane %v1038, %v1043
  %v1046 = vadd.f32 %v1039, %v1044
  %v1047 = vmax.f32 %v1046, 0.0
  %v1048 = vpack.c.bf16 %v1047, %v1047
  %vm1049 = vcmask 516096
  %1050 = vst.msk [vmem:[%s3] sm:$0x1] %vm1049, %v1048
  %v1051 = vld [vmem:[#allocation2 + $0x4] sm:$0x3]
  %v1052 = vadd.f32 %v1051, %v1044
  %v1053 = vmax.f32 %v1052, 0.0
  %v1054 = vpack.c.bf16 %v1053, %v1053
  %s1055 = scalar_lea.vmem %s3, 1
  %1056 = vst.msk [vmem:[%s1055] sm:$0x1] %vm1049, %v1054
  %v1057 = vld [vmem:[#allocation2 + $0x10] sm:$0x3]
  %v1058 = vadd.f32 %v1057, %v1044
  %v1059 = vmax.f32 %v1058, 0.0
  %v1060 = vpack.c.bf16 %v1059, %v1059
  %s1061 = scalar_lea.vmem %s3, 2
  %1062 = vst.msk [vmem:[%s1061] sm:$0x1] %vm1049, %v1060
  %v1063 = vld [vmem:[#allocation2 + $0x14] sm:$0x3]
  %v1064 = vadd.f32 %v1063, %v1044
  %v1065 = vmax.f32 %v1064, 0.0
  %v1066 = vpack.c.bf16 %v1065, %v1065
  %s1067 = scalar_lea.vmem %s3, 3
  %1068 = vst.msk [vmem:[%s1067] sm:$0x1] %vm1049, %v1066
  // Predicated region
  $region14: #{cat_q_conv_net_forward.6} parent=0 // pred_check
    _
  $region15: #{cat_q_conv_net_forward.6} parent=0 // pred_check_branch
    %1070 = sbr.rel (0) target = $region17
  $region16: #{cat_q_conv_net_forward.6} parent=0 // pred_region
    _
  $region17: #{cat_q_conv_net_forward.6} parent=0 // pred_fallthru
    _
  // Predicated region
  $region18: #{cat_q_conv_net_forward.6} parent=0 // pred_check
    _
  $region19: #{cat_q_conv_net_forward.6} parent=0 // pred_check_branch
    %1072 = sbr.rel (0) target = $region21
  $region20: #{cat_q_conv_net_forward.6} parent=0 // pred_region
    _
  $region21: #{cat_q_conv_net_forward.6} parent=0 // pred_fallthru
    _

// kernel: cat_q_conv_net_forward.7
$region0: #{cat_q_conv_net_forward.7}
  #allocation0 [shape = 'u32[]', space=smem, size = 0x4, offset = 0x4, fixed_abs, tag = 'smem constant byte address 0x4 - core index']
  #allocation1 [shape = 'u32[144,128]{1,0:T(1,128)}', space=vmem, size = 0x12000, scoped, tag = 'internal scratch']
  %s0 = inlined_call_operand.vmem [shape: bf16[2,256], index: 0, kind: input, shape index: {}]
  %s1 = inlined_call_operand.vmem [shape: bf16[256,64], index: 1, kind: input, shape index: {}]
  %s2 = inlined_call_operand.vmem [shape: f32[1,64], index: 2, kind: input, shape index: {}]
  %s3 = inlined_call_operand.vmem [shape: bf16[64,128], index: 3, kind: input, shape index: {}]
  %s4 = inlined_call_operand.vmem [shape: f32[1,128], index: 4, kind: input, shape index: {}]
  %s5 = inlined_call_operand.hbm [shape: f32[2,128], index: 5, kind: output, shape index: {}]
  %s6 = sld [smem:[#allocation0]]
  $region30: #{cat_q_conv_net_forward.7} parent=0
    _
  %s8 = ssub.s32 1, %s6
  %s9 = scalar_select 0, %s8, %s6
  $region1: #{cat_q_conv_net_forward.7} parent=0
    #allocation2 [shape = 'u8[1024]{0}', space=vmem, size = 0x400, scoped, tag = 'output window, operand 0, single buffered']
    #allocation3 [shape = 's32[1]{0}', space=sflag, size = 0x4, scoped, tag = 'scoped memory for cat_q_conv_net_forward.7']
    %10 = vsyncpa [#allocation3], 0
    // Predicated region
    $region2: #{cat_q_conv_net_forward.7} parent=1 // pred_check
      _
    $region3: #{cat_q_conv_net_forward.7} parent=1 // pred_check_branch
      %12 = sbr.rel (0) target = $region5
    $region4: #{cat_q_conv_net_forward.7} parent=1 // pred_region
      _
    $region5: #{cat_q_conv_net_forward.7} parent=1 // pred_fallthru
      _
    // Predicated region
    $region6: #{cat_q_conv_net_forward.7} parent=1 // pred_check
      _
    $region7: #{cat_q_conv_net_forward.7} parent=1 // pred_check_branch
      %14 = sbr.rel (0) target = $region9
    $region8: #{cat_q_conv_net_forward.7} parent=1 // pred_region
      _
    $region9: #{cat_q_conv_net_forward.7} parent=1 // pred_fallthru
      _
    // Predicated region
    $region10: #{cat_q_conv_net_forward.7} parent=1 // pred_check
      _
    $region11: #{cat_q_conv_net_forward.7} parent=1 // pred_check_branch
      %16 = sbr.rel (0) target = $region13
    $region12: #{cat_q_conv_net_forward.7} parent=1 // pred_region
      _
    $region13: #{cat_q_conv_net_forward.7} parent=1 // pred_fallthru
      _
    // Predicated region
    $region14: #{cat_q_conv_net_forward.7} parent=1 // pred_check
      _
    $region15: #{cat_q_conv_net_forward.7} parent=1 // pred_check_branch
      %18 = sbr.rel (0) target = $region17
    $region16: #{cat_q_conv_net_forward.7} parent=1 // pred_region
      _
    $region17: #{cat_q_conv_net_forward.7} parent=1 // pred_fallthru
      _
    // Predicated region
    $region18: #{cat_q_conv_net_forward.7} parent=1 // pred_check
      _
    $region19: #{cat_q_conv_net_forward.7} parent=1 // pred_check_branch
      %20 = sbr.rel (0) target = $region21
    $region20: #{cat_q_conv_net_forward.7} parent=1 // pred_region
      _
    $region21: #{cat_q_conv_net_forward.7} parent=1 // pred_fallthru
      _
    %v22 = vld [vmem:[%s0] sm:$0x3]
    %v23 = vld [vmem:[%s1] sm:$0xf]
    %v24 = vld [vmem:[%s1 + $0x4] sm:$0xf]
    %v25 = vld [vmem:[%s1 + $0x8] sm:$0xf]
    %v26 = vld [vmem:[%s1 + $0xc] sm:$0xf]
    %v27 = vld [vmem:[%s1 + $0x10] sm:$0xf]
    %v28 = vld [vmem:[%s1 + $0x14] sm:$0xf]
    %v29 = vld [vmem:[%s1 + $0x18] sm:$0xf]
    %v30 = vld [vmem:[%s1 + $0x1c] sm:$0xf]
    %v31 = vld [vmem:[%s1 + $0x20] sm:$0xf]
    %v32 = vld [vmem:[%s1 + $0x24] sm:$0xf]
    %v33 = vld [vmem:[%s1 + $0x28] sm:$0xf]
    %v34 = vld [vmem:[%s1 + $0x2c] sm:$0xf]
    %v35 = vld [vmem:[%s1 + $0x30] sm:$0xf]
    %v36 = vld [vmem:[%s1 + $0x34] sm:$0xf]
    %v37 = vld [vmem:[%s1 + $0x38] sm:$0xf]
    %v38 = vld [vmem:[%s1 + $0x3c] sm:$0xf]
    %v39 = vld [vmem:[%s1 + $0x40] sm:$0xf]
    %v40 = vld [vmem:[%s1 + $0x44] sm:$0xf]
    %v41 = vld [vmem:[%s1 + $0x48] sm:$0xf]
    %v42 = vld [vmem:[%s1 + $0x4c] sm:$0xf]
    %v43 = vld [vmem:[%s1 + $0x50] sm:$0xf]
    %v44 = vld [vmem:[%s1 + $0x54] sm:$0xf]
    %v45 = vld [vmem:[%s1 + $0x58] sm:$0xf]
    %v46 = vld [vmem:[%s1 + $0x5c] sm:$0xf]
    %v47 = vld [vmem:[%s1 + $0x60] sm:$0xf]
    %v48 = vld [vmem:[%s1 + $0x64] sm:$0xf]
    %v49 = vld [vmem:[%s1 + $0x68] sm:$0xf]
    %v50 = vld [vmem:[%s1 + $0x6c] sm:$0xf]
    %v51 = vld [vmem:[%s1 + $0x70] sm:$0xf]
    %v52 = vld [vmem:[%s1 + $0x74] sm:$0xf]
    %v53 = vld [vmem:[%s1 + $0x78] sm:$0xf]
    %v54 = vld [vmem:[%s1 + $0x7c] sm:$0xf]
    %v55 = vld [vmem:[%s2] sm:$0x1]
    %v57 = vlaneseq
    %v58 = vshrl.u32 %v57, 7
    %v59 = vsub.s32 0, %v58
    %v60 = vrot.slane %v55, %v59
    %v64 = vunpack.c.l.s4 1966171168
    %v65 = vunpack.c.0.s8 %v64
    %v66 = vlaneseq
    %v67 = vshrl.u32 %v66, 7
    %v68 = vsub.s32 %v65, %v67
    %v69 = vrot.slane %v22, %v68
    %v70 = vcombine.high %v69, %v69
    %v72 = vunpack.c.l.s4 1966171168
    %v73 = vunpack.c.0.s8 %v72
    %v74 = vlaneseq
    %v75 = vshrl.u32 %v74, 7
    %v76 = vsub.s32 %v73, %v75
    %v77 = vrot.slane %v69, %v76
    %v79 = vunpack.c.l.s4 1966171168
    %v80 = vunpack.c.0.s8 %v79
    %v81 = vlaneseq
    %v82 = vshrl.u32 %v81, 7
    %v83 = vsub.s32 %v80, %v82
    %v84 = vrot.slane %v70, %v83
    %v119 = vunpack.c.l.b16 %v23
    %v120 = vunpack.c.l.b16 %v24
    %v121 = vunpack.c.l.b16 %v25
    %v122 = vunpack.c.l.b16 %v26
    %v123 = vunpack.c.l.b16 %v27
    %v124 = vunpack.c.l.b16 %v28
    %v125 = vunpack.c.l.b16 %v29
    %v126 = vunpack.c.l.b16 %v30
    %v127 = vunpack.c.l.b16 %v31
    %v128 = vunpack.c.l.b16 %v32
    %v129 = vunpack.c.l.b16 %v33
    %v130 = vunpack.c.l.b16 %v34
    %v131 = vunpack.c.l.b16 %v35
    %v132 = vunpack.c.l.b16 %v36
    %v133 = vunpack.c.l.b16 %v37
    %v134 = vunpack.c.l.b16 %v38
    %v135 = vunpack.c.l.b16 %v39
    %v136 = vunpack.c.l.b16 %v40
    %v137 = vunpack.c.l.b16 %v41
    %v138 = vunpack.c.l.b16 %v42
    %v139 = vunpack.c.l.b16 %v43
    %v140 = vunpack.c.l.b16 %v44
    %v141 = vunpack.c.l.b16 %v45
    %v142 = vunpack.c.l.b16 %v46
    %v143 = vunpack.c.l.b16 %v47
    %v144 = vunpack.c.l.b16 %v48
    %v145 = vunpack.c.l.b16 %v49
    %v146 = vunpack.c.l.b16 %v50
    %v147 = vunpack.c.l.b16 %v51
    %v148 = vunpack.c.l.b16 %v52
    %v149 = vunpack.c.l.b16 %v53
    %v150 = vunpack.c.l.b16 %v54
    %v151 = vpack.c.b16 %v120, %v119
    %v152 = vpack.c.b16 %v122, %v121
    %v153 = vpack.c.b16 %v124, %v123
    %v154 = vpack.c.b16 %v126, %v125
    %v155 = vpack.c.b16 %v128, %v127
    %v156 = vpack.c.b16 %v130, %v129
    %v157 = vpack.c.b16 %v132, %v131
    %v158 = vpack.c.b16 %v134, %v133
    %v159 = vpack.c.b16 %v136, %v135
    %v160 = vpack.c.b16 %v138, %v137
    %v161 = vpack.c.b16 %v140, %v139
    %v162 = vpack.c.b16 %v142, %v141
    %v163 = vpack.c.b16 %v144, %v143
    %v164 = vpack.c.b16 %v146, %v145
    %v165 = vpack.c.b16 %v148, %v147
    %v166 = vpack.c.b16 %v150, %v149
    %183 = vmatprep.subr.bf16.mxu0 0
    %184 = vmatpush1.bf16.msra.mxu0 %v151
    %185 = vmatprep.subr.bf16.mxu0 0
    %186 = vmatpush1.bf16.msra.mxu0 %v152
    %187 = vmatprep.subr.bf16.mxu0 0
    %188 = vmatpush1.bf16.msra.mxu0 %v153
    %189 = vmatprep.subr.bf16.mxu0 0
    %190 = vmatpush1.bf16.msra.mxu0 %v154
    %191 = vmatprep.subr.bf16.mxu0 0
    %192 = vmatpush1.bf16.msra.mxu0 %v155
    %193 = vmatprep.subr.bf16.mxu0 0
    %194 = vmatpush1.bf16.msra.mxu0 %v156
    %195 = vmatprep.subr.bf16.mxu0 0
    %196 = vmatpush1.bf16.msra.mxu0 %v157
    %197 = vmatprep.subr.bf16.mxu0 0
    %198 = vmatpush1.bf16.msra.mxu0 %v158
    %199 = vmatprep.subr.bf16.mxu0 0
    %200 = vmatpush1.bf16.msra.mxu0 %v159
    %201 = vmatprep.subr.bf16.mxu0 0
    %202 = vmatpush1.bf16.msra.mxu0 %v160
    %203 = vmatprep.subr.bf16.mxu0 0
    %204 = vmatpush1.bf16.msra.mxu0 %v161
    %205 = vmatprep.subr.bf16.mxu0 0
    %206 = vmatpush1.bf16.msra.mxu0 %v162
    %207 = vmatprep.subr.bf16.mxu0 0
    %208 = vmatpush1.bf16.msra.mxu0 %v163
    %209 = vmatprep.subr.bf16.mxu0 0
    %210 = vmatpush1.bf16.msra.mxu0 %v164
    %211 = vmatprep.subr.bf16.mxu0 0
    %212 = vmatpush1.bf16.msra.mxu0 %v165
    %213 = vmatprep.subr.bf16.mxu0 0
    %214 = vmatpush1.bf16.msra.mxu0 %v166
    %215 = vmatprep.mubr.bf16.mxu0 %v84
    %216 = vmatmul.mubr.bf16.gmra.mrb[0].mxu0 %v77
    %v217 = vpop.f32.mrb[0].mxu0
    %v218 = vadd.f32 %v60, %v217
    %v219 = vpop.f32.mrb[0].mxu0
    %v220 = vpop.f32.mrb[0].mxu0
    %v221 = vpop.f32.mrb[0].mxu0
    %222 = vdwg.mxu0
    %v223 = vmax.f32 %v218, 0.0
    %v224 = vpack.c.bf16 %v223, %v223
    %v225 = vld [vmem:[%s3] sm:$0xf]
    %v226 = vld [vmem:[%s3 + $0x4] sm:$0xf]
    %v227 = vld [vmem:[%s3 + $0x8] sm:$0xf]
    %v228 = vld [vmem:[%s3 + $0xc] sm:$0xf]
    %v229 = vld [vmem:[%s3 + $0x10] sm:$0xf]
    %v230 = vld [vmem:[%s3 + $0x14] sm:$0xf]
    %v231 = vld [vmem:[%s3 + $0x18] sm:$0xf]
    %v232 = vld [vmem:[%s3 + $0x1c] sm:$0xf]
    %v233 = vld [vmem:[%s4] sm:$0x1]
    %v235 = vlaneseq
    %v236 = vshrl.u32 %v235, 7
    %v237 = vsub.s32 0, %v236
    %v238 = vrot.slane %v233, %v237
    %v248 = vunpack.c.l.b16 %v225
    %v249 = vunpack.c.l.b16 %v226
    %v250 = vunpack.c.l.b16 %v227
    %v251 = vunpack.c.l.b16 %v228
    %v252 = vunpack.c.l.b16 %v229
    %v253 = vunpack.c.l.b16 %v230
    %v254 = vunpack.c.l.b16 %v231
    %v255 = vunpack.c.l.b16 %v232
    %v256 = vpack.c.b16 %v249, %v248
    %v257 = vpack.c.b16 %v251, %v250
    %v258 = vpack.c.b16 %v253, %v252
    %v259 = vpack.c.b16 %v255, %v254
    %vm264 = vcmask 523264
    %v266 = vsel %vm264, %v224, 0
    %268 = vmatprep.subr.bf16.mxu0 0
    %269 = vmatpush1.bf16.msra.mxu0 %v256
    %270 = vmatprep.subr.bf16.mxu0 0
    %271 = vmatpush1.bf16.msra.mxu0 %v257
    %272 = vmatprep.subr.bf16.mxu0 0
    %273 = vmatpush1.bf16.msra.mxu0 %v258
    %274 = vmatprep.subr.bf16.mxu0 0
    %275 = vmatpush1.bf16.msra.mxu0 %v259
    %276 = vmatprep.subr.bf16.mxu0 0
    %277 = vmatpush1.bf16.msra.mxu0 0
    %278 = vmatprep.subr.bf16.mxu0 0
    %279 = vmatpush1.bf16.msra.mxu0 0
    %280 = vmatprep.subr.bf16.mxu0 0
    %281 = vmatpush1.bf16.msra.mxu0 0
    %282 = vmatprep.subr.bf16.mxu0 0
    %283 = vmatpush1.bf16.msra.mxu0 0
    %284 = vmatprep.subr.bf16.mxu0 0
    %285 = vmatpush1.bf16.msra.mxu0 0
    %286 = vmatprep.subr.bf16.mxu0 0
    %287 = vmatpush1.bf16.msra.mxu0 0
    %288 = vmatprep.subr.bf16.mxu0 0
    %289 = vmatpush1.bf16.msra.mxu0 0
    %290 = vmatprep.subr.bf16.mxu0 0
    %291 = vmatpush1.bf16.msra.mxu0 0
    %292 = vmatprep.subr.bf16.mxu0 0
    %293 = vmatpush1.bf16.msra.mxu0 0
    %294 = vmatprep.subr.bf16.mxu0 0
    %295 = vmatpush1.bf16.msra.mxu0 0
    %296 = vmatprep.subr.bf16.mxu0 0
    %297 = vmatpush1.bf16.msra.mxu0 0
    %298 = vmatprep.subr.bf16.mxu0 0
    %299 = vmatpush1.bf16.msra.mxu0 0
    %300 = vmatprep.mubr.bf16.mxu0 0
    %301 = vmatmul.mubr.bf16.gmra.mrb[0].mxu0 %v266
    %v302 = vpop.f32.mrb[0].mxu0
    %v303 = vadd.f32 %v238, %v302
    %v304 = vpop.f32.mrb[0].mxu0
    %v305 = vpop.f32.mrb[0].mxu0
    %v306 = vpop.f32.mrb[0].mxu0
    %307 = vdwg.mxu0
    %308 = vst [vmem:[#allocation2] sm:$0x3] %v303
    // Predicated region
    $region22: #{cat_q_conv_net_forward.7} parent=1 // pred_check
      _
    $region23: #{cat_q_conv_net_forward.7} parent=1 // pred_check_branch
      %310 = sbr.rel (0) target = $region25
    $region24: #{cat_q_conv_net_forward.7} parent=1 // pred_region
      %s312 = ssub.s32 32, 32
      %313 = vsyncadd [#allocation3], %s312
      %s315 = sshll.u32 [#allocation2], 4
      %s316 = int_to_ptr.vmem [resolvable:$true] %s315
      %318 = dma.vmem_to_hbm [thread:$0]  %s316, 32, %s5, [#allocation3]
    $region25: #{cat_q_conv_net_forward.7} parent=1 // pred_fallthru
      _
    // Predicated region
    $region26: #{cat_q_conv_net_forward.7} parent=1 // pred_check
      _
    $region27: #{cat_q_conv_net_forward.7} parent=1 // pred_check_branch
      %320 = sbr.rel (0) target = $region29
    $region28: #{cat_q_conv_net_forward.7} parent=1 // pred_region
      %321 = dma.done [#allocation3], 32
    $region29: #{cat_q_conv_net_forward.7} parent=1 // pred_fallthru
      _
    %322 = vsyncpa [#allocation3], 1

</llo_original>
